<compile_context>
chip_gen: v7x
topology: tpu7x:2x2x1
jax: 0.10.0
libtpu: 0.0.40
codegen_flags: <defaults>
</compile_context>

<pallas_src>
import math
from functools import partial

import jax
import jax.numpy as jnp
from jax.experimental import pallas as pl
from jax.experimental.pallas import tpu as pltpu


# ----------------------------- helpers --------------------------------------

def _layernorm_f32(x, g, b, eps=1e-12):
    # Normalization statistics kept in f32 (bf16 stats would lose precision /
    # underflow the 1e-12 eps).
    mu = jnp.mean(x, axis=-1, keepdims=True)
    var = jnp.mean((x - mu) ** 2, axis=-1, keepdims=True)
    return (x - mu) * jax.lax.rsqrt(var + eps) * g + b


def _vmem_limit_bytes():
    # Advisory scoped-VMEM limit: ~3/4 of physical VMEM (128 MiB v5e/v6e -> 96
    # MiB, 64 MiB v7x -> 48 MiB).  Info query only — a failure here cannot
    # change kernel semantics, just the limit hint.
    cap = None
    try:
        info = pltpu.get_tpu_info()
        for name in ("vmem_capacity_bytes", "vmem_bytes", "vmem_size_bytes"):
            cap = getattr(info, name, None)
            if cap:
                break
    except Exception:
        cap = None
    if not cap:
        cap = 64 * 1024 * 1024
    return int(min(cap * 3 // 4, 100 * 1024 * 1024))


# ----------------------------- Pallas kernel --------------------------------

def encoder_layer_kernel(
    x_ref, bias_ref,
    wqkv_ref, bqkv_ref, wo_ref, bo_ref,
    ln1g_ref, ln1b_ref,
    w1_ref, b1_ref, w2_ref, b2_ref,
    ln2g_ref, ln2b_ref,
    o_ref,
    k_scr, v_scr, ctx_scr,
    *, num_heads, f_tile,
):
    S = x_ref.shape[1]
    D = x_ref.shape[2]
    tq = o_ref.shape[1]
    F = w1_ref.shape[1]
    H = num_heads
    dh = D // H
    scale = 1.0 / math.sqrt(dh)
    bf16 = jnp.bfloat16
    f32 = jnp.float32

    qi = pl.program_id(1)

    # --- K/V projection: computed once per batch element (qi == 0) into a
    # persistent VMEM scratch and reused by all remaining query tiles.
    @pl.when(qi == 0)
    def _():
        x_ctx_bf = x_ref[0]                                        # (S, D) bf16
        kv = jnp.dot(x_ctx_bf, wqkv_ref[:, D:],
                     preferred_element_type=f32) + bqkv_ref[:, D:]  # (S, 2D) f32
        k_scr[...] = kv[:, :D].astype(bf16)
        v_scr[...] = kv[:, D:].astype(bf16)

    # --- This grid step's query tile.
    q_start = pl.multiple_of(qi * tq, tq)
    x_q = x_ref[0, pl.ds(q_start, tq), :]                          # (tq, D) bf16
    x_q_f32 = x_q.astype(f32)                                      # residual
    bias = bias_ref[0]                                             # (1, S) f32 additive mask

    q = jnp.dot(x_q, wqkv_ref[:, :D], preferred_element_type=f32) + bqkv_ref[:, :D]
    q_bf = (q * scale).astype(bf16)                                # scale hoisted out of loop

    # --- Multi-head attention.  Per-head context vectors are staged into a
    # (tq, D) bf16 scratch at static lane offsets; the output projection is a
    # single (tq,D)@(D,D) matmul after the loop (no per-head small-K matmuls,
    # no concat, no f32 accumulation adds on the VPU).
    # TODO(synk): for dh < 128 (e.g. BERT-base dh=64) batch the per-head
    # QK^T / PV matmuls over a leading head axis to keep the 256-wide MXU on
    # v6e/v7x fully fed.
    # TODO(synk): for S >= 1024 convert to an online-softmax (flash) loop over
    # KV tiles instead of holding full (S, D) K/V and (tq, S) scores.
    for h in range(H):
        sl = slice(h * dh, (h + 1) * dh)
        s = jnp.einsum("qd,kd->qk", q_bf[:, sl], k_scr[:, sl],
                       preferred_element_type=f32)                 # (tq, S) f32
        s = s + bias                                               # implicit (1,S)->(tq,S)
        m = jnp.max(s, axis=-1, keepdims=True)
        p = jnp.exp(s - m)
        p = p * pl.reciprocal(jnp.sum(p, axis=-1, keepdims=True), approx=True)
        ctx = jnp.dot(p.astype(bf16), v_scr[:, sl],
                      preferred_element_type=f32)                  # (tq, dh) f32
        ctx_scr[:, sl] = ctx.astype(bf16)

    attn = jnp.dot(ctx_scr[...], wo_ref[...], preferred_element_type=f32) + bo_ref[...]
    h1 = _layernorm_f32(x_q_f32 + attn, ln1g_ref[...], ln1b_ref[...])
    h1_bf = h1.astype(bf16)

    # --- Feed-forward, chunked over F so the (tq, F) intermediate stays
    # bounded at large F; bf16 matmuls with f32 accumulation.
    ff = jnp.zeros((tq, D), f32)
    for f0 in range(0, F, f_tile):
        fs = slice(f0, f0 + f_tile)
        hh = jnp.dot(h1_bf, w1_ref[:, fs], preferred_element_type=f32) + b1_ref[:, fs]
        # TODO(synk): BERT checkpoints use exact erf GELU; the tanh
        # approximation keeps the EUP path (tiny numeric drift).
        hh = jax.nn.gelu(hh, approximate=True)
        ff = ff + jnp.dot(hh.astype(bf16), w2_ref[fs, :], preferred_element_type=f32)
    ff = ff + b2_ref[...]

    out = _layernorm_f32(h1 + ff, ln2g_ref[...], ln2b_ref[...])
    o_ref[0] = out.astype(o_ref.dtype)


# ------------------------------- wrapper -------------------------------------

def encoder_layer(x, attn_bias, params, *, num_heads, q_tile=256,
                  vmem_limit_bytes=None):
    """x: (B, S, D) f32, attn_bias: (B, 1, S) f32 additive mask -> (B, S, D) f32."""
    B, S, D = x.shape
    F = params["w1"].shape[-1]
    assert D % num_heads == 0
    tq = q_tile if (q_tile <= S and S % q_tile == 0) else S
    n_q = S // tq

    # F-chunk size for the FFN intermediate (must divide F).
    f_tile = F
    for cand in (2048, 1536, 1024, 768, 512):
        if cand <= F and F % cand == 0:
            f_tile = cand
            break

    bf16 = jnp.bfloat16
    f32 = jnp.float32

    # bf16 MXU inputs (activations + weights); biases / LN params stay f32.
    x_bf = x.astype(bf16)
    wqkv = params["wqkv"].astype(bf16)
    wo = params["wo"].astype(bf16)
    w1 = params["w1"].astype(bf16)
    w2 = params["w2"].astype(bf16)

    # Grid-invariant weights/biases: whole-array, single-buffered VMEM residents
    # (copied to VMEM once, never double-buffered by the pipeline).
    wspec = pl.BlockSpec(memory_space=pltpu.MemorySpace.VMEM)

    in_specs = [
        pl.BlockSpec((1, S, D), lambda b, qi: (b, 0, 0)),   # x: full context per batch element
        pl.BlockSpec((1, 1, S), lambda b, qi: (b, 0, 0)),   # additive attention-mask bias
        wspec, wspec,          # wqkv, bqkv (fused [Q|K|V])
        wspec, wspec,          # wo, bo
        wspec, wspec,          # ln1 gamma / beta
        wspec, wspec,          # w1, b1
        wspec, wspec,          # w2, b2
        wspec, wspec,          # ln2 gamma / beta
    ]

    if vmem_limit_bytes is None:
        vmem_limit_bytes = _vmem_limit_bytes()

    kernel = partial(encoder_layer_kernel, num_heads=num_heads, f_tile=f_tile)
    return pl.pallas_call(
        kernel,
        out_shape=jax.ShapeDtypeStruct((B, S, D), f32),
        grid=(B, n_q),
        in_specs=in_specs,
        out_specs=pl.BlockSpec((1, tq, D), lambda b, qi: (b, qi, 0)),
        scratch_shapes=[
            pltpu.VMEM((S, D), bf16),    # K cache (persistent across the qi axis)
            pltpu.VMEM((S, D), bf16),    # V cache
            pltpu.VMEM((tq, D), bf16),   # per-head context staging for the fused Wo matmul
        ],
        compiler_params=pltpu.CompilerParams(
            # qi must be sequential ("arbitrary") so the K/V scratch written at
            # qi == 0 is reused by later query tiles; B stays "parallel" so
            # v7x's two TensorCores each take batch elements.
            dimension_semantics=("parallel", "arbitrary"),
            vmem_limit_bytes=vmem_limit_bytes,
        ),
    )(
        x_bf, attn_bias.astype(f32),
        wqkv, params["bqkv"], wo, params["bo"],
        params["ln1_g"], params["ln1_b"],
        w1, params["b1"], w2, params["b2"],
        params["ln2_g"], params["ln2_b"],
    )


def base_model_forward(inputs, params, *, num_heads, q_tile=256):
    """Equivalent of BaseModel.forward(inputs) == self.model(**inputs).

    inputs: {"input_ids": (B, S) int32, "attention_mask": (B, S) int/float}
    Returns last_hidden_state (B, S, D) f32.
    """
    ids = inputs["input_ids"]
    mask = inputs["attention_mask"].astype(jnp.float32)
    B, S = ids.shape

    # Embedding gather + embedding LayerNorm (glue; gather is not a Pallas hot path).
    emb = params["tok_emb"][ids] + params["pos_emb"][:S][None, :, :]
    emb = _layernorm_f32(emb, params["emb_ln_g"][0], params["emb_ln_b"][0])

    # Additive attention-mask bias, (B, 1, S), kept in f32.
    attn_bias = ((1.0 - mask) * -1e9)[:, None, :]

    return encoder_layer(emb.astype(jnp.float32), attn_bias, params,
                         num_heads=num_heads, q_tile=q_tile)


# ------------------------- pure-JAX f32 reference ----------------------------

def reference_forward(inputs, params, *, num_heads):
    ids = inputs["input_ids"]
    mask = inputs["attention_mask"].astype(jnp.float32)
    B, S = ids.shape
    x = params["tok_emb"][ids] + params["pos_emb"][:S][None, :, :]
    x = _layernorm_f32(x, params["emb_ln_g"][0], params["emb_ln_b"][0])
    bias = ((1.0 - mask) * -1e9)[:, None, None, :]              # (B,1,1,S)
    D = x.shape[-1]
    H = num_heads
    dh = D // H

    qkv = x @ params["wqkv"] + params["bqkv"]
    q, k, v = qkv[..., :D], qkv[..., D:2 * D], qkv[..., 2 * D:]

    def heads(t):
        return t.reshape(B, S, H, dh).transpose(0, 2, 1, 3)     # (B,H,S,dh)

    s = jnp.einsum("bhqd,bhkd->bhqk", heads(q), heads(k)) / math.sqrt(dh) + bias
    p = jax.nn.softmax(s, axis=-1)
    ctx = jnp.einsum("bhqk,bhkd->bhqd", p, heads(v))
    ctx = ctx.transpose(0, 2, 1, 3).reshape(B, S, D)
    attn = ctx @ params["wo"] + params["bo"]
    h1 = _layernorm_f32(x + attn, params["ln1_g"], params["ln1_b"])
    ff = jax.nn.gelu(h1 @ params["w1"] + params["b1"], approximate=True)
    ff = ff @ params["w2"] + params["b2"]
    return _layernorm_f32(h1 + ff, params["ln2_g"], params["ln2_b"])


# ------------------------------ param init -----------------------------------

def init_params(key, *, vocab, max_pos, D, F):
    ks = jax.random.split(key, 8)
    s = 0.02
    return {
        "tok_emb": jax.random.normal(ks[0], (vocab, D), jnp.float32) * s,
        "pos_emb": jax.random.normal(ks[1], (max_pos, D), jnp.float32) * s,
        "emb_ln_g": jnp.ones((1, D), jnp.float32),
        "emb_ln_b": jnp.zeros((1, D), jnp.float32),
        "wqkv": jax.random.normal(ks[2], (D, 3 * D), jnp.float32) * s,   # [Q|K|V] fused
        "bqkv": jnp.zeros((1, 3 * D), jnp.float32),
        "wo": jax.random.normal(ks[3], (D, D), jnp.float32) * s,
        "bo": jnp.zeros((1, D), jnp.float32),
        "ln1_g": jnp.ones((1, D), jnp.float32),
        "ln1_b": jnp.zeros((1, D), jnp.float32),
        "w1": jax.random.normal(ks[4], (D, F), jnp.float32) * s,
        "b1": jnp.zeros((1, F), jnp.float32),
        "w2": jax.random.normal(ks[5], (F, D), jnp.float32) * s,
        "b2": jnp.zeros((1, D), jnp.float32),
        "ln2_g": jnp.ones((1, D), jnp.float32),
        "ln2_b": jnp.zeros((1, D), jnp.float32),
    }


# --------------------------------- main ---------------------------------------

if __name__ == "__main__":
    # Hardware-tile-aligned small config: D, F multiples of 128, dh = 128,
    # S multiple of 128.  q_tile=128 -> n_q=2 so the KV-reuse ("arbitrary" qi
    # axis) path is exercised.
    B, S, D, H, F, VOCAB = 2, 256, 256, 2, 512, 64

    key = jax.random.PRNGKey(0)
    k_ids, k_params = jax.random.split(key)

    input_ids = jax.random.randint(k_ids, (B, S), 0, VOCAB, dtype=jnp.int32)
    attention_mask = jnp.ones((B, S), jnp.int32).at[1, S - 16:].set(0)  # pad tail of row 1
    inputs = {"input_ids": input_ids, "attention_mask": attention_mask}

    params = init_params(k_params, vocab=VOCAB, max_pos=512, D=D, F=F)

    out = base_model_forward(inputs, params, num_heads=H, q_tile=128)
    out = jax.block_until_ready(out)

    assert out.shape == (B, S, D) and out.dtype == jnp.float32
    assert bool(jnp.all(jnp.isfinite(out)))

    # Validate the bf16-MXU / approx-reciprocal kernel against an f32 reference.
    ref = jax.block_until_ready(reference_forward(inputs, params, num_heads=H))
    max_err = float(jnp.max(jnp.abs(out - ref)))
    assert max_err < 0.15, f"kernel deviates from f32 reference: max abs err {max_err}"

    print("KERNEL_OK")
</pallas_src>

<mosaic_0001>
module attributes {stable_mosaic.version = 11 : i64} {
  func.func @encoder_layer_kernel(%arg0: i32, %arg1: i32, %arg2: memref<1x256x256xbf16, #tpu.memory_space<vmem>>, %arg3: memref<1x1x256xf32, #tpu.memory_space<vmem>>, %arg4: memref<256x768xbf16, #tpu.memory_space<vmem>>, %arg5: memref<1x768xf32, #tpu.memory_space<vmem>>, %arg6: memref<256x256xbf16, #tpu.memory_space<vmem>>, %arg7: memref<1x256xf32, #tpu.memory_space<vmem>>, %arg8: memref<1x256xf32, #tpu.memory_space<vmem>>, %arg9: memref<1x256xf32, #tpu.memory_space<vmem>>, %arg10: memref<256x512xbf16, #tpu.memory_space<vmem>>, %arg11: memref<1x512xf32, #tpu.memory_space<vmem>>, %arg12: memref<512x256xbf16, #tpu.memory_space<vmem>>, %arg13: memref<1x256xf32, #tpu.memory_space<vmem>>, %arg14: memref<1x256xf32, #tpu.memory_space<vmem>>, %arg15: memref<1x256xf32, #tpu.memory_space<vmem>>, %arg16: memref<1x128x256xf32, #tpu.memory_space<vmem>>, %arg17: memref<256x256xbf16, #tpu.memory_space<vmem>>, %arg18: memref<256x256xbf16, #tpu.memory_space<vmem>>, %arg19: memref<128x256xbf16, #tpu.memory_space<vmem>>) attributes {dimension_semantics = [#tpu.dimension_semantics<parallel>, #tpu.dimension_semantics<arbitrary>], iteration_bounds = array<i64: 2, 2>, scalar_prefetch = 0 : i64, scratch_operands = 3 : i64, tpu.core_type = #tpu.core_type<tc>, window_params = [{transform_indices = @transform_0, window_bounds = array<i64: 1, 256, 256>}, {transform_indices = @transform_1, window_bounds = array<i64: 1, 1, 256>}, {pipeline_mode = #tpu.pipeline_mode<synchronous>, transform_indices = @transform_2, window_bounds = array<i64: 256, 768>}, {pipeline_mode = #tpu.pipeline_mode<synchronous>, transform_indices = @transform_3, window_bounds = array<i64: 1, 768>}, {pipeline_mode = #tpu.pipeline_mode<synchronous>, transform_indices = @transform_4, window_bounds = array<i64: 256, 256>}, {pipeline_mode = #tpu.pipeline_mode<synchronous>, transform_indices = @transform_5, window_bounds = array<i64: 1, 256>}, {pipeline_mode = #tpu.pipeline_mode<synchronous>, transform_indices = @transform_6, window_bounds = array<i64: 1, 256>}, {pipeline_mode = #tpu.pipeline_mode<synchronous>, transform_indices = @transform_7, window_bounds = array<i64: 1, 256>}, {pipeline_mode = #tpu.pipeline_mode<synchronous>, transform_indices = @transform_8, window_bounds = array<i64: 256, 512>}, {pipeline_mode = #tpu.pipeline_mode<synchronous>, transform_indices = @transform_9, window_bounds = array<i64: 1, 512>}, {pipeline_mode = #tpu.pipeline_mode<synchronous>, transform_indices = @transform_10, window_bounds = array<i64: 512, 256>}, {pipeline_mode = #tpu.pipeline_mode<synchronous>, transform_indices = @transform_11, window_bounds = array<i64: 1, 256>}, {pipeline_mode = #tpu.pipeline_mode<synchronous>, transform_indices = @transform_12, window_bounds = array<i64: 1, 256>}, {pipeline_mode = #tpu.pipeline_mode<synchronous>, transform_indices = @transform_13, window_bounds = array<i64: 1, 256>}, {transform_indices = @transform_14, window_bounds = array<i64: 1, 128, 256>}]} {
    %c0_i32 = arith.constant 0 : i32
    %0 = arith.cmpi eq, %arg1, %c0_i32 : i32
    %1 = arith.extui %0 : i1 to i32
    %c0_i32_0 = arith.constant 0 : i32
    %2 = arith.cmpi ne, %1, %c0_i32_0 : i32
    scf.if %2 {
      %c0_72 = arith.constant 0 : index
      %c0_73 = arith.constant 0 : index
      %c0_74 = arith.constant 0 : index
      %145 = vector.load %arg2[%c0_72, %c0_73, %c0_74] : memref<1x256x256xbf16, #tpu.memory_space<vmem>>, vector<1x256x256xbf16>
      %146 = vector.shape_cast %145 : vector<1x256x256xbf16> to vector<256x256xbf16>
      %c0_75 = arith.constant 0 : index
      %c256 = arith.constant 256 : index
      %147 = vector.load %arg4[%c0_75, %c256] : memref<256x768xbf16, #tpu.memory_space<vmem>>, vector<256x512xbf16>
      %cst_76 = arith.constant dense<0.000000e+00> : vector<256x512xf32>
      %148 = tpu.matmul %146, %147, %cst_76 {dimension_numbers = #tpu.dot_dimension_numbers<[1], [0], [0], [1], [0, 0, 1, 1], [], []>} : vector<256x256xbf16>, vector<256x512xbf16>, vector<256x512xf32> -> vector<256x512xf32>
      %c0_77 = arith.constant 0 : index
      %c256_78 = arith.constant 256 : index
      %149 = vector.load %arg5[%c0_77, %c256_78] : memref<1x768xf32, #tpu.memory_space<vmem>>, vector<1x512xf32>
      %150 = vector.broadcast %149 : vector<1x512xf32> to vector<256x512xf32>
      %151 = arith.addf %148, %150 : vector<256x512xf32>
      %152 = vector.extract_strided_slice %151 {offsets = [0, 0], sizes = [256, 256], strides = [1, 1]} : vector<256x512xf32> to vector<256x256xf32>
      %153 = arith.truncf %152 : vector<256x256xf32> to vector<256x256xbf16>
      %c0_79 = arith.constant 0 : index
      %c0_80 = arith.constant 0 : index
      %154 = vector.load %arg17[%c0_79, %c0_80] : memref<256x256xbf16, #tpu.memory_space<vmem>>, vector<256x256xbf16>
      tpu.vector_store %arg17[%c0_79, %c0_80], %153 {strides = array<i32>} : memref<256x256xbf16, #tpu.memory_space<vmem>>, vector<256x256xbf16>,
      %155 = vector.extract_strided_slice %151 {offsets = [0, 256], sizes = [256, 256], strides = [1, 1]} : vector<256x512xf32> to vector<256x256xf32>
      %156 = arith.truncf %155 : vector<256x256xf32> to vector<256x256xbf16>
      %c0_81 = arith.constant 0 : index
      %c0_82 = arith.constant 0 : index
      %157 = vector.load %arg18[%c0_81, %c0_82] : memref<256x256xbf16, #tpu.memory_space<vmem>>, vector<256x256xbf16>
      tpu.vector_store %arg18[%c0_81, %c0_82], %156 {strides = array<i32>} : memref<256x256xbf16, #tpu.memory_space<vmem>>, vector<256x256xbf16>,
    } else {
    }
    %c128_i32 = arith.constant 128 : i32
    %3 = arith.muli %arg1, %c128_i32 : i32
    %4 = tpu.assume_multiple %3, 128 : i32
    %c0 = arith.constant 0 : index
    %5 = arith.index_cast %4 : i32 to index
    %c0_1 = arith.constant 0 : index
    %6 = vector.load %arg2[%c0, %5, %c0_1] : memref<1x256x256xbf16, #tpu.memory_space<vmem>>, vector<1x128x256xbf16>
    %7 = vector.shape_cast %6 : vector<1x128x256xbf16> to vector<128x256xbf16>
    %8 = arith.extf %7 : vector<128x256xbf16> to vector<128x256xf32>
    %c0_2 = arith.constant 0 : index
    %c0_3 = arith.constant 0 : index
    %c0_4 = arith.constant 0 : index
    %9 = vector.load %arg3[%c0_2, %c0_3, %c0_4] : memref<1x1x256xf32, #tpu.memory_space<vmem>>, vector<1x1x256xf32>
    %10 = vector.shape_cast %9 : vector<1x1x256xf32> to vector<1x256xf32>
    %c0_5 = arith.constant 0 : index
    %c0_6 = arith.constant 0 : index
    %11 = vector.load %arg4[%c0_5, %c0_6] : memref<256x768xbf16, #tpu.memory_space<vmem>>, vector<256x256xbf16>
    %cst = arith.constant dense<0.000000e+00> : vector<128x256xf32>
    %12 = tpu.matmul %7, %11, %cst {dimension_numbers = #tpu.dot_dimension_numbers<[1], [0], [0], [1], [0, 0, 1, 1], [], []>} : vector<128x256xbf16>, vector<256x256xbf16>, vector<128x256xf32> -> vector<128x256xf32>
    %c0_7 = arith.constant 0 : index
    %c0_8 = arith.constant 0 : index
    %13 = vector.load %arg5[%c0_7, %c0_8] : memref<1x768xf32, #tpu.memory_space<vmem>>, vector<1x256xf32>
    %14 = vector.broadcast %13 : vector<1x256xf32> to vector<128x256xf32>
    %15 = arith.addf %12, %14 : vector<128x256xf32>
    %cst_9 = arith.constant 0.0883883461 : f32
    %16 = vector.broadcast %cst_9 : f32 to vector<128x256xf32>
    %17 = arith.mulf %15, %16 : vector<128x256xf32>
    %18 = arith.truncf %17 : vector<128x256xf32> to vector<128x256xbf16>
    %19 = vector.extract_strided_slice %18 {offsets = [0, 0], sizes = [128, 128], strides = [1, 1]} : vector<128x256xbf16> to vector<128x128xbf16>
    %c0_10 = arith.constant 0 : index
    %c0_11 = arith.constant 0 : index
    %20 = vector.load %arg17[%c0_10, %c0_11] : memref<256x256xbf16, #tpu.memory_space<vmem>>, vector<256x128xbf16>
    "tpu.trace_start"() <{level = 10 : i32, message = "qd,kd->qk"}> : () -> ()
    %cst_12 = arith.constant dense<0.000000e+00> : vector<128x256xf32>
    %21 = tpu.matmul %19, %20, %cst_12 {dimension_numbers = #tpu.dot_dimension_numbers<[1], [1], [0], [0], [0, 0, 1, 0], [], []>} : vector<128x128xbf16>, vector<256x128xbf16>, vector<128x256xf32> -> vector<128x256xf32>
    "tpu.trace_stop"() : () -> ()
    %22 = vector.broadcast %10 : vector<1x256xf32> to vector<128x256xf32>
    %23 = arith.addf %21, %22 : vector<128x256xf32>
    %cst_13 = arith.constant dense<0xFF800000> : vector<128xf32>
    %24 = vector.multi_reduction <maximumf>, %23, %cst_13 [1] : vector<128x256xf32> to vector<128xf32>
    %25 = vector.shape_cast %24 : vector<128xf32> to vector<128x1xf32>
    %26 = vector.broadcast %25 : vector<128x1xf32> to vector<128x256xf32>
    %27 = arith.subf %23, %26 : vector<128x256xf32>
    %28 = math.exp %27 : vector<128x256xf32>
    %cst_14 = arith.constant dense<0.000000e+00> : vector<128xf32>
    %29 = vector.multi_reduction <add>, %28, %cst_14 [1] : vector<128x256xf32> to vector<128xf32>
    %30 = vector.shape_cast %29 : vector<128xf32> to vector<128x1xf32>
    %31 = tpu.reciprocal %30 {approx = true} : vector<128x1xf32> -> vector<128x1xf32>
    %32 = vector.broadcast %31 : vector<128x1xf32> to vector<128x256xf32>
    %33 = arith.mulf %28, %32 : vector<128x256xf32>
    %34 = arith.truncf %33 : vector<128x256xf32> to vector<128x256xbf16>
    %c0_15 = arith.constant 0 : index
    %c0_16 = arith.constant 0 : index
    %35 = vector.load %arg18[%c0_15, %c0_16] : memref<256x256xbf16, #tpu.memory_space<vmem>>, vector<256x128xbf16>
    %cst_17 = arith.constant dense<0.000000e+00> : vector<128x128xf32>
    %36 = tpu.matmul %34, %35, %cst_17 {dimension_numbers = #tpu.dot_dimension_numbers<[1], [0], [0], [1], [0, 0, 1, 1], [], []>} : vector<128x256xbf16>, vector<256x128xbf16>, vector<128x128xf32> -> vector<128x128xf32>
    %37 = arith.truncf %36 : vector<128x128xf32> to vector<128x128xbf16>
    %c0_18 = arith.constant 0 : index
    %c0_19 = arith.constant 0 : index
    %38 = vector.load %arg19[%c0_18, %c0_19] : memref<128x256xbf16, #tpu.memory_space<vmem>>, vector<128x128xbf16>
    tpu.vector_store %arg19[%c0_18, %c0_19], %37 {strides = array<i32>} : memref<128x256xbf16, #tpu.memory_space<vmem>>, vector<128x128xbf16>,
    %39 = vector.extract_strided_slice %18 {offsets = [0, 128], sizes = [128, 128], strides = [1, 1]} : vector<128x256xbf16> to vector<128x128xbf16>
    %c0_20 = arith.constant 0 : index
    %c128 = arith.constant 128 : index
    %40 = vector.load %arg17[%c0_20, %c128] : memref<256x256xbf16, #tpu.memory_space<vmem>>, vector<256x128xbf16>
    "tpu.trace_start"() <{level = 10 : i32, message = "qd,kd->qk"}> : () -> ()
    %cst_21 = arith.constant dense<0.000000e+00> : vector<128x256xf32>
    %41 = tpu.matmul %39, %40, %cst_21 {dimension_numbers = #tpu.dot_dimension_numbers<[1], [1], [0], [0], [0, 0, 1, 0], [], []>} : vector<128x128xbf16>, vector<256x128xbf16>, vector<128x256xf32> -> vector<128x256xf32>
    "tpu.trace_stop"() : () -> ()
    %42 = vector.broadcast %10 : vector<1x256xf32> to vector<128x256xf32>
    %43 = arith.addf %41, %42 : vector<128x256xf32>
    %cst_22 = arith.constant dense<0xFF800000> : vector<128xf32>
    %44 = vector.multi_reduction <maximumf>, %43, %cst_22 [1] : vector<128x256xf32> to vector<128xf32>
    %45 = vector.shape_cast %44 : vector<128xf32> to vector<128x1xf32>
    %46 = vector.broadcast %45 : vector<128x1xf32> to vector<128x256xf32>
    %47 = arith.subf %43, %46 : vector<128x256xf32>
    %48 = math.exp %47 : vector<128x256xf32>
    %cst_23 = arith.constant dense<0.000000e+00> : vector<128xf32>
    %49 = vector.multi_reduction <add>, %48, %cst_23 [1] : vector<128x256xf32> to vector<128xf32>
    %50 = vector.shape_cast %49 : vector<128xf32> to vector<128x1xf32>
    %51 = tpu.reciprocal %50 {approx = true} : vector<128x1xf32> -> vector<128x1xf32>
    %52 = vector.broadcast %51 : vector<128x1xf32> to vector<128x256xf32>
    %53 = arith.mulf %48, %52 : vector<128x256xf32>
    %54 = arith.truncf %53 : vector<128x256xf32> to vector<128x256xbf16>
    %c0_24 = arith.constant 0 : index
    %c128_25 = arith.constant 128 : index
    %55 = vector.load %arg18[%c0_24, %c128_25] : memref<256x256xbf16, #tpu.memory_space<vmem>>, vector<256x128xbf16>
    %cst_26 = arith.constant dense<0.000000e+00> : vector<128x128xf32>
    %56 = tpu.matmul %54, %55, %cst_26 {dimension_numbers = #tpu.dot_dimension_numbers<[1], [0], [0], [1], [0, 0, 1, 1], [], []>} : vector<128x256xbf16>, vector<256x128xbf16>, vector<128x128xf32> -> vector<128x128xf32>
    %57 = arith.truncf %56 : vector<128x128xf32> to vector<128x128xbf16>
    %c0_27 = arith.constant 0 : index
    %c128_28 = arith.constant 128 : index
    %58 = vector.load %arg19[%c0_27, %c128_28] : memref<128x256xbf16, #tpu.memory_space<vmem>>, vector<128x128xbf16>
    tpu.vector_store %arg19[%c0_27, %c128_28], %57 {strides = array<i32>} : memref<128x256xbf16, #tpu.memory_space<vmem>>, vector<128x128xbf16>,
    %c0_29 = arith.constant 0 : index
    %c0_30 = arith.constant 0 : index
    %59 = vector.load %arg19[%c0_29, %c0_30] : memref<128x256xbf16, #tpu.memory_space<vmem>>, vector<128x256xbf16>
    %c0_31 = arith.constant 0 : index
    %c0_32 = arith.constant 0 : index
    %60 = vector.load %arg6[%c0_31, %c0_32] : memref<256x256xbf16, #tpu.memory_space<vmem>>, vector<256x256xbf16>
    %cst_33 = arith.constant dense<0.000000e+00> : vector<128x256xf32>
    %61 = tpu.matmul %59, %60, %cst_33 {dimension_numbers = #tpu.dot_dimension_numbers<[1], [0], [0], [1], [0, 0, 1, 1], [], []>} : vector<128x256xbf16>, vector<256x256xbf16>, vector<128x256xf32> -> vector<128x256xf32>
    %c0_34 = arith.constant 0 : index
    %c0_35 = arith.constant 0 : index
    %62 = vector.load %arg7[%c0_34, %c0_35] : memref<1x256xf32, #tpu.memory_space<vmem>>, vector<1x256xf32>
    %63 = vector.broadcast %62 : vector<1x256xf32> to vector<128x256xf32>
    %64 = arith.addf %61, %63 : vector<128x256xf32>
    %65 = arith.addf %8, %64 : vector<128x256xf32>
    %c0_36 = arith.constant 0 : index
    %c0_37 = arith.constant 0 : index
    %66 = vector.load %arg8[%c0_36, %c0_37] : memref<1x256xf32, #tpu.memory_space<vmem>>, vector<1x256xf32>
    %c0_38 = arith.constant 0 : index
    %c0_39 = arith.constant 0 : index
    %67 = vector.load %arg9[%c0_38, %c0_39] : memref<1x256xf32, #tpu.memory_space<vmem>>, vector<1x256xf32>
    %cst_40 = arith.constant dense<0.000000e+00> : vector<128xf32>
    %68 = vector.multi_reduction <add>, %65, %cst_40 [1] : vector<128x256xf32> to vector<128xf32>
    %69 = vector.shape_cast %68 : vector<128xf32> to vector<128x1xf32>
    %cst_41 = arith.constant 2.560000e+02 : f32
    %70 = vector.broadcast %cst_41 : f32 to vector<128x1xf32>
    %71 = arith.divf %69, %70 : vector<128x1xf32>
    %72 = vector.broadcast %71 : vector<128x1xf32> to vector<128x256xf32>
    %73 = arith.subf %65, %72 : vector<128x256xf32>
    %74 = arith.mulf %73, %73 : vector<128x256xf32>
    %cst_42 = arith.constant dense<0.000000e+00> : vector<128xf32>
    %75 = vector.multi_reduction <add>, %74, %cst_42 [1] : vector<128x256xf32> to vector<128xf32>
    %76 = vector.shape_cast %75 : vector<128xf32> to vector<128x1xf32>
    %cst_43 = arith.constant 2.560000e+02 : f32
    %77 = vector.broadcast %cst_43 : f32 to vector<128x1xf32>
    %78 = arith.divf %76, %77 : vector<128x1xf32>
    %79 = vector.broadcast %71 : vector<128x1xf32> to vector<128x256xf32>
    %80 = arith.subf %65, %79 : vector<128x256xf32>
    %cst_44 = arith.constant 9.99999996E-13 : f32
    %81 = vector.broadcast %cst_44 : f32 to vector<128x1xf32>
    %82 = arith.addf %78, %81 : vector<128x1xf32>
    %83 = math.rsqrt %82 : vector<128x1xf32>
    %84 = vector.broadcast %83 : vector<128x1xf32> to vector<128x256xf32>
    %85 = arith.mulf %80, %84 : vector<128x256xf32>
    %86 = vector.broadcast %66 : vector<1x256xf32> to vector<128x256xf32>
    %87 = arith.mulf %85, %86 : vector<128x256xf32>
    %88 = vector.broadcast %67 : vector<1x256xf32> to vector<128x256xf32>
    %89 = arith.addf %87, %88 : vector<128x256xf32>
    %90 = arith.truncf %89 : vector<128x256xf32> to vector<128x256xbf16>
    %cst_45 = arith.constant 0.000000e+00 : f32
    %91 = vector.broadcast %cst_45 : f32 to vector<128x256xf32>
    %c0_46 = arith.constant 0 : index
    %c0_47 = arith.constant 0 : index
    %92 = vector.load %arg10[%c0_46, %c0_47] : memref<256x512xbf16, #tpu.memory_space<vmem>>, vector<256x512xbf16>
    %cst_48 = arith.constant dense<0.000000e+00> : vector<128x512xf32>
    %93 = tpu.matmul %90, %92, %cst_48 {dimension_numbers = #tpu.dot_dimension_numbers<[1], [0], [0], [1], [0, 0, 1, 1], [], []>} : vector<128x256xbf16>, vector<256x512xbf16>, vector<128x512xf32> -> vector<128x512xf32>
    %c0_49 = arith.constant 0 : index
    %c0_50 = arith.constant 0 : index
    %94 = vector.load %arg11[%c0_49, %c0_50] : memref<1x512xf32, #tpu.memory_space<vmem>>, vector<1x512xf32>
    %95 = vector.broadcast %94 : vector<1x512xf32> to vector<128x512xf32>
    %96 = arith.addf %93, %95 : vector<128x512xf32>
    %97 = arith.mulf %96, %96 : vector<128x512xf32>
    %98 = arith.mulf %96, %97 : vector<128x512xf32>
    %cst_51 = arith.constant 4.471500e-02 : f32
    %99 = vector.broadcast %cst_51 : f32 to vector<128x512xf32>
    %100 = arith.mulf %99, %98 : vector<128x512xf32>
    %101 = arith.addf %96, %100 : vector<128x512xf32>
    %cst_52 = arith.constant 0.797884583 : f32
    %102 = vector.broadcast %cst_52 : f32 to vector<128x512xf32>
    %103 = arith.mulf %102, %101 : vector<128x512xf32>
    %104 = math.tanh %103 : vector<128x512xf32>
    %cst_53 = arith.constant 1.000000e+00 : f32
    %105 = vector.broadcast %cst_53 : f32 to vector<128x512xf32>
    %106 = arith.addf %105, %104 : vector<128x512xf32>
    %cst_54 = arith.constant 5.000000e-01 : f32
    %107 = vector.broadcast %cst_54 : f32 to vector<128x512xf32>
    %108 = arith.mulf %107, %106 : vector<128x512xf32>
    %109 = arith.mulf %96, %108 : vector<128x512xf32>
    %110 = arith.truncf %109 : vector<128x512xf32> to vector<128x512xbf16>
    %c0_55 = arith.constant 0 : index
    %c0_56 = arith.constant 0 : index
    %111 = vector.load %arg12[%c0_55, %c0_56] : memref<512x256xbf16, #tpu.memory_space<vmem>>, vector<512x256xbf16>
    %cst_57 = arith.constant dense<0.000000e+00> : vector<128x256xf32>
    %112 = tpu.matmul %110, %111, %cst_57 {dimension_numbers = #tpu.dot_dimension_numbers<[1], [0], [0], [1], [0, 0, 1, 1], [], []>} : vector<128x512xbf16>, vector<512x256xbf16>, vector<128x256xf32> -> vector<128x256xf32>
    %113 = arith.addf %91, %112 : vector<128x256xf32>
    %c0_58 = arith.constant 0 : index
    %c0_59 = arith.constant 0 : index
    %114 = vector.load %arg13[%c0_58, %c0_59] : memref<1x256xf32, #tpu.memory_space<vmem>>, vector<1x256xf32>
    %115 = vector.broadcast %114 : vector<1x256xf32> to vector<128x256xf32>
    %116 = arith.addf %113, %115 : vector<128x256xf32>
    %117 = arith.addf %89, %116 : vector<128x256xf32>
    %c0_60 = arith.constant 0 : index
    %c0_61 = arith.constant 0 : index
    %118 = vector.load %arg14[%c0_60, %c0_61] : memref<1x256xf32, #tpu.memory_space<vmem>>, vector<1x256xf32>
    %c0_62 = arith.constant 0 : index
    %c0_63 = arith.constant 0 : index
    %119 = vector.load %arg15[%c0_62, %c0_63] : memref<1x256xf32, #tpu.memory_space<vmem>>, vector<1x256xf32>
    %cst_64 = arith.constant dense<0.000000e+00> : vector<128xf32>
    %120 = vector.multi_reduction <add>, %117, %cst_64 [1] : vector<128x256xf32> to vector<128xf32>
    %121 = vector.shape_cast %120 : vector<128xf32> to vector<128x1xf32>
    %cst_65 = arith.constant 2.560000e+02 : f32
    %122 = vector.broadcast %cst_65 : f32 to vector<128x1xf32>
    %123 = arith.divf %121, %122 : vector<128x1xf32>
    %124 = vector.broadcast %123 : vector<128x1xf32> to vector<128x256xf32>
    %125 = arith.subf %117, %124 : vector<128x256xf32>
    %126 = arith.mulf %125, %125 : vector<128x256xf32>
    %cst_66 = arith.constant dense<0.000000e+00> : vector<128xf32>
    %127 = vector.multi_reduction <add>, %126, %cst_66 [1] : vector<128x256xf32> to vector<128xf32>
    %128 = vector.shape_cast %127 : vector<128xf32> to vector<128x1xf32>
    %cst_67 = arith.constant 2.560000e+02 : f32
    %129 = vector.broadcast %cst_67 : f32 to vector<128x1xf32>
    %130 = arith.divf %128, %129 : vector<128x1xf32>
    %131 = vector.broadcast %123 : vector<128x1xf32> to vector<128x256xf32>
    %132 = arith.subf %117, %131 : vector<128x256xf32>
    %cst_68 = arith.constant 9.99999996E-13 : f32
    %133 = vector.broadcast %cst_68 : f32 to vector<128x1xf32>
    %134 = arith.addf %130, %133 : vector<128x1xf32>
    %135 = math.rsqrt %134 : vector<128x1xf32>
    %136 = vector.broadcast %135 : vector<128x1xf32> to vector<128x256xf32>
    %137 = arith.mulf %132, %136 : vector<128x256xf32>
    %138 = vector.broadcast %118 : vector<1x256xf32> to vector<128x256xf32>
    %139 = arith.mulf %137, %138 : vector<128x256xf32>
    %140 = vector.broadcast %119 : vector<1x256xf32> to vector<128x256xf32>
    %141 = arith.addf %139, %140 : vector<128x256xf32>
    %c0_69 = arith.constant 0 : index
    %c0_70 = arith.constant 0 : index
    %c0_71 = arith.constant 0 : index
    %142 = vector.load %arg16[%c0_69, %c0_70, %c0_71] : memref<1x128x256xf32, #tpu.memory_space<vmem>>, vector<1x128x256xf32>
    %143 = vector.shape_cast %142 : vector<1x128x256xf32> to vector<128x256xf32>
    %144 = vector.shape_cast %141 : vector<128x256xf32> to vector<1x128x256xf32>
    tpu.vector_store %arg16[%c0_69, %c0_70, %c0_71], %144 {strides = array<i32>} : memref<1x128x256xf32, #tpu.memory_space<vmem>>, vector<1x128x256xf32>,
    return
  }
  func.func @transform_0(%arg0: i32, %arg1: i32) -> (i32, i32, i32) {
    %c0_i32 = arith.constant 0 : i32
    %c0_i32_0 = arith.constant 0 : i32
    %c0_i32_1 = arith.constant 0 : i32
    return %arg0, %c0_i32, %c0_i32_0 : i32, i32, i32
  }
  func.func @transform_1(%arg0: i32, %arg1: i32) -> (i32, i32, i32) {
    %c0_i32 = arith.constant 0 : i32
    %c0_i32_0 = arith.constant 0 : i32
    %c0_i32_1 = arith.constant 0 : i32
    return %arg0, %c0_i32, %c0_i32_0 : i32, i32, i32
  }
  func.func @transform_2(%arg0: i32, %arg1: i32) -> (i32, i32) {
    %c0_i32 = arith.constant 0 : i32
    %c0_i32_0 = arith.constant 0 : i32
    %c0_i32_1 = arith.constant 0 : i32
    return %c0_i32, %c0_i32_0 : i32, i32
  }
  func.func @transform_3(%arg0: i32, %arg1: i32) -> (i32, i32) {
    %c0_i32 = arith.constant 0 : i32
    %c0_i32_0 = arith.constant 0 : i32
    %c0_i32_1 = arith.constant 0 : i32
    return %c0_i32, %c0_i32_0 : i32, i32
  }
  func.func @transform_4(%arg0: i32, %arg1: i32) -> (i32, i32) {
    %c0_i32 = arith.constant 0 : i32
    %c0_i32_0 = arith.constant 0 : i32
    %c0_i32_1 = arith.constant 0 : i32
    return %c0_i32, %c0_i32_0 : i32, i32
  }
  func.func @transform_5(%arg0: i32, %arg1: i32) -> (i32, i32) {
    %c0_i32 = arith.constant 0 : i32
    %c0_i32_0 = arith.constant 0 : i32
    %c0_i32_1 = arith.constant 0 : i32
    return %c0_i32, %c0_i32_0 : i32, i32
  }
  func.func @transform_6(%arg0: i32, %arg1: i32) -> (i32, i32) {
    %c0_i32 = arith.constant 0 : i32
    %c0_i32_0 = arith.constant 0 : i32
    %c0_i32_1 = arith.constant 0 : i32
    return %c0_i32, %c0_i32_0 : i32, i32
  }
  func.func @transform_7(%arg0: i32, %arg1: i32) -> (i32, i32) {
    %c0_i32 = arith.constant 0 : i32
    %c0_i32_0 = arith.constant 0 : i32
    %c0_i32_1 = arith.constant 0 : i32
    return %c0_i32, %c0_i32_0 : i32, i32
  }
  func.func @transform_8(%arg0: i32, %arg1: i32) -> (i32, i32) {
    %c0_i32 = arith.constant 0 : i32
    %c0_i32_0 = arith.constant 0 : i32
    %c0_i32_1 = arith.constant 0 : i32
    return %c0_i32, %c0_i32_0 : i32, i32
  }
  func.func @transform_9(%arg0: i32, %arg1: i32) -> (i32, i32) {
    %c0_i32 = arith.constant 0 : i32
    %c0_i32_0 = arith.constant 0 : i32
    %c0_i32_1 = arith.constant 0 : i32
    return %c0_i32, %c0_i32_0 : i32, i32
  }
  func.func @transform_10(%arg0: i32, %arg1: i32) -> (i32, i32) {
    %c0_i32 = arith.constant 0 : i32
    %c0_i32_0 = arith.constant 0 : i32
    %c0_i32_1 = arith.constant 0 : i32
    return %c0_i32, %c0_i32_0 : i32, i32
  }
  func.func @transform_11(%arg0: i32, %arg1: i32) -> (i32, i32) {
    %c0_i32 = arith.constant 0 : i32
    %c0_i32_0 = arith.constant 0 : i32
    %c0_i32_1 = arith.constant 0 : i32
    return %c0_i32, %c0_i32_0 : i32, i32
  }
  func.func @transform_12(%arg0: i32, %arg1: i32) -> (i32, i32) {
    %c0_i32 = arith.constant 0 : i32
    %c0_i32_0 = arith.constant 0 : i32
    %c0_i32_1 = arith.constant 0 : i32
    return %c0_i32, %c0_i32_0 : i32, i32
  }
  func.func @transform_13(%arg0: i32, %arg1: i32) -> (i32, i32) {
    %c0_i32 = arith.constant 0 : i32
    %c0_i32_0 = arith.constant 0 : i32
    %c0_i32_1 = arith.constant 0 : i32
    return %c0_i32, %c0_i32_0 : i32, i32
  }
  func.func @transform_14(%arg0: i32, %arg1: i32) -> (i32, i32, i32) {
    %c0_i32 = arith.constant 0 : i32
    %c0_i32_0 = arith.constant 0 : i32
    return %arg0, %arg1, %c0_i32 : i32, i32, i32
  }
}

</mosaic_0001>

<llo_original>
// kernel: tpu_custom_call.1
$region0: #{tpu_custom_call.1}
  #allocation0 [shape = 'u32[]', space=smem, size = 0x4, offset = 0x4, fixed_abs, tag = 'smem constant byte address 0x4 - core index']
  #allocation1 [shape = 'u32[144,128]{1,0:T(1,128)}', space=vmem, size = 0x12000, scoped, tag = 'internal scratch']
  #allocation2 [shape = 'bf16[256,256]{1,0:T(16,128)(2,1)}', space=vmem, size = 0x20000, scoped, tag = 'scratch operand']
  #allocation3 [shape = 'bf16[256,256]{1,0:T(16,128)(2,1)}', space=vmem, size = 0x20000, scoped, tag = 'scratch operand']
  #allocation4 [shape = 'bf16[128,256]{1,0:T(16,128)(2,1)}', space=vmem, size = 0x10000, scoped, tag = 'scratch operand']
  %s0 = inlined_call_operand.hbm [shape: bf16[2,256,256], index: 0, kind: input, shape index: {}]
  %s1 = inlined_call_operand.hbm [shape: f32[2,1,256], index: 1, kind: input, shape index: {}]
  %s2 = inlined_call_operand.hbm [shape: bf16[256,768], index: 2, kind: input, shape index: {}]
  %s3 = inlined_call_operand.vmem [shape: f32[1,768], index: 3, kind: input, shape index: {}]
  %s4 = inlined_call_operand.hbm [shape: bf16[256,256], index: 4, kind: input, shape index: {}]
  %s5 = inlined_call_operand.vmem [shape: f32[1,256], index: 5, kind: input, shape index: {}]
  %s6 = inlined_call_operand.vmem [shape: f32[1,256], index: 6, kind: input, shape index: {}]
  %s7 = inlined_call_operand.vmem [shape: f32[1,256], index: 7, kind: input, shape index: {}]
  %s8 = inlined_call_operand.hbm [shape: bf16[256,512], index: 8, kind: input, shape index: {}]
  %s9 = inlined_call_operand.vmem [shape: f32[1,512], index: 9, kind: input, shape index: {}]
  %s10 = inlined_call_operand.hbm [shape: bf16[512,256], index: 10, kind: input, shape index: {}]
  %s11 = inlined_call_operand.vmem [shape: f32[1,256], index: 11, kind: input, shape index: {}]
  %s12 = inlined_call_operand.vmem [shape: f32[1,256], index: 12, kind: input, shape index: {}]
  %s13 = inlined_call_operand.vmem [shape: f32[1,256], index: 13, kind: input, shape index: {}]
  %s14 = inlined_call_operand.hbm [shape: f32[2,256,256], index: 14, kind: output, shape index: {}]
  %s15 = sld [smem:[#allocation0]]
  $region117: #{tpu_custom_call.1} parent=0
    _
  %s17 = ssub.s32 1, %s15
  %s18 = scalar_select 0, %s17, %s15
  $region1: #{tpu_custom_call.1} parent=0
    #allocation5 [shape = 'u8[262144]{0}', space=vmem, size = 0x40000, scoped, tag = 'input window, operand 0']
    #allocation6 [shape = 's32[2]{0}', space=sflag, size = 0x8, scoped, tag = 'scoped memory for tpu_custom_call.1']
    #allocation7 [shape = 's32[2]{0}', space=sflag, size = 0x8, scoped, tag = 'scoped memory for tpu_custom_call.1']
    #allocation8 [shape = 'u8[2048]{0}', space=vmem, size = 0x800, scoped, tag = 'input window, operand 1']
    #allocation9 [shape = 's32[2]{0}', space=sflag, size = 0x8, scoped, tag = 'scoped memory for tpu_custom_call.1']
    #allocation10 [shape = 'u8[393216]{0}', space=vmem, size = 0x60000, scoped, tag = 'input window, operand 2, single buffered']
    #allocation11 [shape = 'u8[131072]{0}', space=vmem, size = 0x20000, scoped, tag = 'input window, operand 4, single buffered']
    #allocation12 [shape = 's32[1]{0}', space=sflag, size = 0x4, scoped, tag = 'scoped memory for tpu_custom_call.1']
    #allocation13 [shape = 'u8[262144]{0}', space=vmem, size = 0x40000, scoped, tag = 'input window, operand 8, single buffered']
    #allocation14 [shape = 'u8[262144]{0}', space=vmem, size = 0x40000, scoped, tag = 'input window, operand 10, single buffered']
    #allocation15 [shape = 's32[1]{0}', space=sflag, size = 0x4, scoped, tag = 'scoped memory for tpu_custom_call.1']
    #allocation16 [shape = 'u8[262144]{0}', space=vmem, size = 0x40000, scoped, tag = 'output window, operand 0']
    %19 = vsyncpa [#allocation6], 0
    %s20 = scalar_lea.sflag [#allocation6], 1
    %21 = vsyncpa %s20, 0
    %22 = vsyncpa [#allocation9], 0
    %s23 = scalar_lea.sflag [#allocation9], 1
    %24 = vsyncpa %s23, 0
    %25 = vsyncpa [#allocation12], 0
    %26 = vsyncpa [#allocation15], 0
    %27 = vsyncpa [#allocation7], 0
    %s28 = scalar_lea.sflag [#allocation7], 1
    %29 = vsyncpa %s28, 0
    loop: start=0, step=1, limit=6
    $region2: #{tpu_custom_call.1} parent=1 // loop_pre_header
      _
    $region3: #{tpu_custom_call.1} parent=1 // loop_header
      %s31 = sphi 0, %s35
      %p32 = scmp.ge.s32.totalorder %s31, 6
      %s38 = sphi 0, %s50
      %s39 = sphi 0, %s46
      %s40 = sphi 0, %s38
      %s41 = sphi 0, %s39
      %s42 = sphi 0, %s40
      %s43 = sphi 0, %s41
      %s53 = sphi 0, %s55
      %s56 = sphi 0, %s53
      %s57 = sphi 0, %s56
      %s73 = sphi 0, %s57
      %s79 = sphi 0, %s81
      %s82 = sphi 0, %s79
      %s83 = sphi 0, %s82
      %s99 = sphi 0, %s83
      %s103 = sphi 0, %s103
      %s105 = sphi 0, %s103
      %s106 = sphi 0, %s105
      %s120 = sphi 0, %s106
      %s124 = sphi 0, %s124
      %s126 = sphi 0, %s124
      %s127 = sphi 0, %s126
      %s141 = sphi 0, %s127
      %s145 = sphi 0, %s145
      %s147 = sphi 0, %s145
      %s148 = sphi 0, %s147
      %s162 = sphi 0, %s148
      %s166 = sphi 0, %s166
      %s168 = sphi 0, %s166
      %s169 = sphi 0, %s168
      %s183 = sphi 0, %s169
      %s187 = sphi 0, %s187
      %s189 = sphi 0, %s187
      %s190 = sphi 0, %s189
      %s204 = sphi 0, %s190
      %s208 = sphi 0, %s208
      %s210 = sphi 0, %s208
      %s211 = sphi 0, %s210
      %s225 = sphi 0, %s211
      %s229 = sphi 0, %s229
      %s231 = sphi 0, %s229
      %s232 = sphi 0, %s231
      %s246 = sphi 0, %s232
      %s250 = sphi 0, %s250
      %s252 = sphi 0, %s250
      %s253 = sphi 0, %s252
      %s267 = sphi 0, %s253
      %s271 = sphi 0, %s271
      %s273 = sphi 0, %s271
      %s274 = sphi 0, %s273
      %s288 = sphi 0, %s274
      %s292 = sphi 0, %s292
      %s294 = sphi 0, %s292
      %s295 = sphi 0, %s294
      %s309 = sphi 0, %s295
      %s313 = sphi 0, %s313
      %s315 = sphi 0, %s313
      %s316 = sphi 0, %s315
      %s330 = sphi 0, %s316
      %s334 = sphi 0, %s334
      %s336 = sphi 0, %s334
      %s337 = sphi 0, %s336
      %s351 = sphi 0, %s337
      %s359 = sphi 0, %s361
      %s362 = sphi 0, %s359
      %s363 = sphi 0, %s362
      %s379 = sphi 0, %s363
    $region4: #{tpu_custom_call.1} parent=1 // loop_header_branch
      %34 = sbr.rel (%p32) target = $region8
    $region5: #{tpu_custom_call.1} parent=1 // loop_body
      %s36 = ssub.s32 %s31, 1
      %s37 = ssub.s32 %s31, 2
      %s44 = sadd.s32 1, %s39
      %p45 = scmp.ge.s32.totalorder %s44, 2
      %s46 = scalar_select %p45, 0, %s44
      %s47 = sadd.s32 1, %s38
      %s48 = scalar_select %p45, %s47, %s38
      %p49 = scmp.ge.s32.totalorder %s48, 2
      %s50 = scalar_select %p49, 0, %s48
      %s51 = ssub.s32 %s38, %s50
      %p52 = scmp.eq.s32.totalorder %s51, 0
      %s54 = sadd.s32 %s53, 1
      %s55 = scalar_select %p52, %s53, %s54
      %p58 = pneg %p52
      %p59 = scmp.eq.s32.totalorder %s31, 3
      %p60 = por %p58, %p59
      %p61 = scmp.ne.s32.totalorder %s53, %s56
      %p62 = scmp.eq.s32.totalorder %s31, 0
      %p63 = por %p61, %p62
      %p64 = scmp.ne.s32.totalorder %s53, %s56
      %p65 = scmp.eq.s32.totalorder %s36, 3
      %p66 = por %p64, %p65
      %p67 = scmp.ne.s32.totalorder %s56, %s57
      %p68 = scmp.eq.s32.totalorder %s36, 0
      %p69 = por %p67, %p68
      %p70 = scmp.ne.s32.totalorder %s56, %s57
      %p71 = scmp.eq.s32.totalorder %s37, 3
      %p72 = por %p70, %p71
      %p74 = scmp.ne.s32.totalorder %s57, %s73
      %p75 = scmp.eq.s32.totalorder %s37, 0
      %p76 = por %p74, %p75
      %s77 = ssub.s32 %s38, %s50
      %p78 = scmp.eq.s32.totalorder %s77, 0
      %s80 = sadd.s32 %s79, 1
      %s81 = scalar_select %p78, %s79, %s80
      %p84 = pneg %p78
      %p85 = scmp.eq.s32.totalorder %s31, 3
      %p86 = por %p84, %p85
      %p87 = scmp.ne.s32.totalorder %s79, %s82
      %p88 = scmp.eq.s32.totalorder %s31, 0
      %p89 = por %p87, %p88
      %p90 = scmp.ne.s32.totalorder %s79, %s82
      %p91 = scmp.eq.s32.totalorder %s36, 3
      %p92 = por %p90, %p91
      %p93 = scmp.ne.s32.totalorder %s82, %s83
      %p94 = scmp.eq.s32.totalorder %s36, 0
      %p95 = por %p93, %p94
      %p96 = scmp.ne.s32.totalorder %s82, %s83
      %p97 = scmp.eq.s32.totalorder %s37, 3
      %p98 = por %p96, %p97
      %p100 = scmp.ne.s32.totalorder %s83, %s99
      %p101 = scmp.eq.s32.totalorder %s37, 0
      %p102 = por %p100, %p101
      %s104 = sadd.s32 %s103, 1
      %p107 = scmp.eq.s32.totalorder %s31, 3
      %p108 = scmp.ne.s32.totalorder %s103, %s105
      %p109 = scmp.eq.s32.totalorder %s31, 0
      %p110 = por %p108, %p109
      %p111 = scmp.ne.s32.totalorder %s103, %s105
      %p112 = scmp.eq.s32.totalorder %s36, 3
      %p113 = por %p111, %p112
      %p114 = scmp.ne.s32.totalorder %s105, %s106
      %p115 = scmp.eq.s32.totalorder %s36, 0
      %p116 = por %p114, %p115
      %p117 = scmp.ne.s32.totalorder %s105, %s106
      %p118 = scmp.eq.s32.totalorder %s37, 3
      %p119 = por %p117, %p118
      %p121 = scmp.ne.s32.totalorder %s106, %s120
      %p122 = scmp.eq.s32.totalorder %s37, 0
      %p123 = por %p121, %p122
      %s125 = sadd.s32 %s124, 1
      %p128 = scmp.eq.s32.totalorder %s31, 3
      %p129 = scmp.ne.s32.totalorder %s124, %s126
      %p130 = scmp.eq.s32.totalorder %s31, 0
      %p131 = por %p129, %p130
      %p132 = scmp.ne.s32.totalorder %s124, %s126
      %p133 = scmp.eq.s32.totalorder %s36, 3
      %p134 = por %p132, %p133
      %p135 = scmp.ne.s32.totalorder %s126, %s127
      %p136 = scmp.eq.s32.totalorder %s36, 0
      %p137 = por %p135, %p136
      %p138 = scmp.ne.s32.totalorder %s126, %s127
      %p139 = scmp.eq.s32.totalorder %s37, 3
      %p140 = por %p138, %p139
      %p142 = scmp.ne.s32.totalorder %s127, %s141
      %p143 = scmp.eq.s32.totalorder %s37, 0
      %p144 = por %p142, %p143
      %s146 = sadd.s32 %s145, 1
      %p149 = scmp.eq.s32.totalorder %s31, 3
      %p150 = scmp.ne.s32.totalorder %s145, %s147
      %p151 = scmp.eq.s32.totalorder %s31, 0
      %p152 = por %p150, %p151
      %p153 = scmp.ne.s32.totalorder %s145, %s147
      %p154 = scmp.eq.s32.totalorder %s36, 3
      %p155 = por %p153, %p154
      %p156 = scmp.ne.s32.totalorder %s147, %s148
      %p157 = scmp.eq.s32.totalorder %s36, 0
      %p158 = por %p156, %p157
      %p159 = scmp.ne.s32.totalorder %s147, %s148
      %p160 = scmp.eq.s32.totalorder %s37, 3
      %p161 = por %p159, %p160
      %p163 = scmp.ne.s32.totalorder %s148, %s162
      %p164 = scmp.eq.s32.totalorder %s37, 0
      %p165 = por %p163, %p164
      %s167 = sadd.s32 %s166, 1
      %p170 = scmp.eq.s32.totalorder %s31, 3
      %p171 = scmp.ne.s32.totalorder %s166, %s168
      %p172 = scmp.eq.s32.totalorder %s31, 0
      %p173 = por %p171, %p172
      %p174 = scmp.ne.s32.totalorder %s166, %s168
      %p175 = scmp.eq.s32.totalorder %s36, 3
      %p176 = por %p174, %p175
      %p177 = scmp.ne.s32.totalorder %s168, %s169
      %p178 = scmp.eq.s32.totalorder %s36, 0
      %p179 = por %p177, %p178
      %p180 = scmp.ne.s32.totalorder %s168, %s169
      %p181 = scmp.eq.s32.totalorder %s37, 3
      %p182 = por %p180, %p181
      %p184 = scmp.ne.s32.totalorder %s169, %s183
      %p185 = scmp.eq.s32.totalorder %s37, 0
      %p186 = por %p184, %p185
      %s188 = sadd.s32 %s187, 1
      %p191 = scmp.eq.s32.totalorder %s31, 3
      %p192 = scmp.ne.s32.totalorder %s187, %s189
      %p193 = scmp.eq.s32.totalorder %s31, 0
      %p194 = por %p192, %p193
      %p195 = scmp.ne.s32.totalorder %s187, %s189
      %p196 = scmp.eq.s32.totalorder %s36, 3
      %p197 = por %p195, %p196
      %p198 = scmp.ne.s32.totalorder %s189, %s190
      %p199 = scmp.eq.s32.totalorder %s36, 0
      %p200 = por %p198, %p199
      %p201 = scmp.ne.s32.totalorder %s189, %s190
      %p202 = scmp.eq.s32.totalorder %s37, 3
      %p203 = por %p201, %p202
      %p205 = scmp.ne.s32.totalorder %s190, %s204
      %p206 = scmp.eq.s32.totalorder %s37, 0
      %p207 = por %p205, %p206
      %s209 = sadd.s32 %s208, 1
      %p212 = scmp.eq.s32.totalorder %s31, 3
      %p213 = scmp.ne.s32.totalorder %s208, %s210
      %p214 = scmp.eq.s32.totalorder %s31, 0
      %p215 = por %p213, %p214
      %p216 = scmp.ne.s32.totalorder %s208, %s210
      %p217 = scmp.eq.s32.totalorder %s36, 3
      %p218 = por %p216, %p217
      %p219 = scmp.ne.s32.totalorder %s210, %s211
      %p220 = scmp.eq.s32.totalorder %s36, 0
      %p221 = por %p219, %p220
      %p222 = scmp.ne.s32.totalorder %s210, %s211
      %p223 = scmp.eq.s32.totalorder %s37, 3
      %p224 = por %p222, %p223
      %p226 = scmp.ne.s32.totalorder %s211, %s225
      %p227 = scmp.eq.s32.totalorder %s37, 0
      %p228 = por %p226, %p227
      %s230 = sadd.s32 %s229, 1
      %p233 = scmp.eq.s32.totalorder %s31, 3
      %p234 = scmp.ne.s32.totalorder %s229, %s231
      %p235 = scmp.eq.s32.totalorder %s31, 0
      %p236 = por %p234, %p235
      %p237 = scmp.ne.s32.totalorder %s229, %s231
      %p238 = scmp.eq.s32.totalorder %s36, 3
      %p239 = por %p237, %p238
      %p240 = scmp.ne.s32.totalorder %s231, %s232
      %p241 = scmp.eq.s32.totalorder %s36, 0
      %p242 = por %p240, %p241
      %p243 = scmp.ne.s32.totalorder %s231, %s232
      %p244 = scmp.eq.s32.totalorder %s37, 3
      %p245 = por %p243, %p244
      %p247 = scmp.ne.s32.totalorder %s232, %s246
      %p248 = scmp.eq.s32.totalorder %s37, 0
      %p249 = por %p247, %p248
      %s251 = sadd.s32 %s250, 1
      %p254 = scmp.eq.s32.totalorder %s31, 3
      %p255 = scmp.ne.s32.totalorder %s250, %s252
      %p256 = scmp.eq.s32.totalorder %s31, 0
      %p257 = por %p255, %p256
      %p258 = scmp.ne.s32.totalorder %s250, %s252
      %p259 = scmp.eq.s32.totalorder %s36, 3
      %p260 = por %p258, %p259
      %p261 = scmp.ne.s32.totalorder %s252, %s253
      %p262 = scmp.eq.s32.totalorder %s36, 0
      %p263 = por %p261, %p262
      %p264 = scmp.ne.s32.totalorder %s252, %s253
      %p265 = scmp.eq.s32.totalorder %s37, 3
      %p266 = por %p264, %p265
      %p268 = scmp.ne.s32.totalorder %s253, %s267
      %p269 = scmp.eq.s32.totalorder %s37, 0
      %p270 = por %p268, %p269
      %s272 = sadd.s32 %s271, 1
      %p275 = scmp.eq.s32.totalorder %s31, 3
      %p276 = scmp.ne.s32.totalorder %s271, %s273
      %p277 = scmp.eq.s32.totalorder %s31, 0
      %p278 = por %p276, %p277
      %p279 = scmp.ne.s32.totalorder %s271, %s273
      %p280 = scmp.eq.s32.totalorder %s36, 3
      %p281 = por %p279, %p280
      %p282 = scmp.ne.s32.totalorder %s273, %s274
      %p283 = scmp.eq.s32.totalorder %s36, 0
      %p284 = por %p282, %p283
      %p285 = scmp.ne.s32.totalorder %s273, %s274
      %p286 = scmp.eq.s32.totalorder %s37, 3
      %p287 = por %p285, %p286
      %p289 = scmp.ne.s32.totalorder %s274, %s288
      %p290 = scmp.eq.s32.totalorder %s37, 0
      %p291 = por %p289, %p290
      %s293 = sadd.s32 %s292, 1
      %p296 = scmp.eq.s32.totalorder %s31, 3
      %p297 = scmp.ne.s32.totalorder %s292, %s294
      %p298 = scmp.eq.s32.totalorder %s31, 0
      %p299 = por %p297, %p298
      %p300 = scmp.ne.s32.totalorder %s292, %s294
      %p301 = scmp.eq.s32.totalorder %s36, 3
      %p302 = por %p300, %p301
      %p303 = scmp.ne.s32.totalorder %s294, %s295
      %p304 = scmp.eq.s32.totalorder %s36, 0
      %p305 = por %p303, %p304
      %p306 = scmp.ne.s32.totalorder %s294, %s295
      %p307 = scmp.eq.s32.totalorder %s37, 3
      %p308 = por %p306, %p307
      %p310 = scmp.ne.s32.totalorder %s295, %s309
      %p311 = scmp.eq.s32.totalorder %s37, 0
      %p312 = por %p310, %p311
      %s314 = sadd.s32 %s313, 1
      %p317 = scmp.eq.s32.totalorder %s31, 3
      %p318 = scmp.ne.s32.totalorder %s313, %s315
      %p319 = scmp.eq.s32.totalorder %s31, 0
      %p320 = por %p318, %p319
      %p321 = scmp.ne.s32.totalorder %s313, %s315
      %p322 = scmp.eq.s32.totalorder %s36, 3
      %p323 = por %p321, %p322
      %p324 = scmp.ne.s32.totalorder %s315, %s316
      %p325 = scmp.eq.s32.totalorder %s36, 0
      %p326 = por %p324, %p325
      %p327 = scmp.ne.s32.totalorder %s315, %s316
      %p328 = scmp.eq.s32.totalorder %s37, 3
      %p329 = por %p327, %p328
      %p331 = scmp.ne.s32.totalorder %s316, %s330
      %p332 = scmp.eq.s32.totalorder %s37, 0
      %p333 = por %p331, %p332
      %s335 = sadd.s32 %s334, 1
      %p338 = scmp.eq.s32.totalorder %s31, 3
      %p339 = scmp.ne.s32.totalorder %s334, %s336
      %p340 = scmp.eq.s32.totalorder %s31, 0
      %p341 = por %p339, %p340
      %p342 = scmp.ne.s32.totalorder %s334, %s336
      %p343 = scmp.eq.s32.totalorder %s36, 3
      %p344 = por %p342, %p343
      %p345 = scmp.ne.s32.totalorder %s336, %s337
      %p346 = scmp.eq.s32.totalorder %s36, 0
      %p347 = por %p345, %p346
      %p348 = scmp.ne.s32.totalorder %s336, %s337
      %p349 = scmp.eq.s32.totalorder %s37, 3
      %p350 = por %p348, %p349
      %p352 = scmp.ne.s32.totalorder %s337, %s351
      %p353 = scmp.eq.s32.totalorder %s37, 0
      %p354 = por %p352, %p353
      %s355 = ssub.s32 %s38, %s50
      %s356 = ssub.s32 %s39, %s46
      %s357 = sor.u32 %s355, %s356
      %p358 = scmp.eq.s32.totalorder %s357, 0
      %s360 = sadd.s32 %s359, 1
      %s361 = scalar_select %p358, %s359, %s360
      %p364 = pneg %p358
      %p365 = scmp.eq.s32.totalorder %s31, 3
      %p366 = por %p364, %p365
      %p367 = scmp.ne.s32.totalorder %s359, %s362
      %p368 = scmp.eq.s32.totalorder %s31, 0
      %p369 = por %p367, %p368
      %p370 = scmp.ne.s32.totalorder %s359, %s362
      %p371 = scmp.eq.s32.totalorder %s36, 3
      %p372 = por %p370, %p371
      %p373 = scmp.ne.s32.totalorder %s362, %s363
      %p374 = scmp.eq.s32.totalorder %s36, 0
      %p375 = por %p373, %p374
      %p376 = scmp.ne.s32.totalorder %s362, %s363
      %p377 = scmp.eq.s32.totalorder %s37, 3
      %p378 = por %p376, %p377
      %p380 = scmp.ne.s32.totalorder %s363, %s379
      %p381 = scmp.eq.s32.totalorder %s37, 0
      %p382 = por %p380, %p381
      %p383 = scmp.le.s32.totalorder 1, %s31
      %p384 = scmp.lt.s32.totalorder %s31, 5
      %p385 = pnand %p383, %p384
      %p386 = pneg %p385
      // Predicated region
      $region9: #{tpu_custom_call.1} parent=5 // pred_check
        _
      $region10: #{tpu_custom_call.1} parent=5 // pred_check_branch
        %388 = sbr.rel (%p385) target = $region12
      $region11: #{tpu_custom_call.1} parent=5 // pred_region
        %s389 = ssub.s32 %s31, 1
        // Predicated region
        $region13: #{tpu_custom_call.1} parent=11 // pred_check
          %p390 = pneg %p116
        $region14: #{tpu_custom_call.1} parent=11 // pred_check_branch
          %392 = sbr.rel (%p390) target = $region16
        $region15: #{tpu_custom_call.1} parent=11 // pred_region
          %s394 = ssub.s32 12288, 12288
          %395 = vsyncadd [#allocation9], %s394
          %s396 = sshll.u32 [#allocation10], 4
          %s397 = int_to_ptr.vmem [resolvable:$true] %s396
          %402 = dma.hbm_to_vmem [thread:$0]  %s2, 12288, %s397, [#allocation9], 384, 384, 24
        $region16: #{tpu_custom_call.1} parent=11 // pred_fallthru
          _
        // Predicated region
        $region17: #{tpu_custom_call.1} parent=11 // pred_check
          %p403 = pneg %p137
        $region18: #{tpu_custom_call.1} parent=11 // pred_check_branch
          %405 = sbr.rel (%p403) target = $region20
        $region19: #{tpu_custom_call.1} parent=11 // pred_region
          _
        $region20: #{tpu_custom_call.1} parent=11 // pred_fallthru
          _
        // Predicated region
        $region21: #{tpu_custom_call.1} parent=11 // pred_check
          %p406 = pneg %p158
        $region22: #{tpu_custom_call.1} parent=11 // pred_check_branch
          %408 = sbr.rel (%p406) target = $region24
        $region23: #{tpu_custom_call.1} parent=11 // pred_region
          %s410 = ssub.s32 4096, 4096
          %411 = vsyncadd [#allocation12], %s410
          %s412 = sshll.u32 [#allocation11], 4
          %s413 = int_to_ptr.vmem [resolvable:$true] %s412
          %418 = dma.hbm_to_vmem [thread:$0]  %s4, 4096, %s413, [#allocation12], 128, 128, 8
        $region24: #{tpu_custom_call.1} parent=11 // pred_fallthru
          _
        // Predicated region
        $region25: #{tpu_custom_call.1} parent=11 // pred_check
          %p419 = pneg %p179
        $region26: #{tpu_custom_call.1} parent=11 // pred_check_branch
          %421 = sbr.rel (%p419) target = $region28
        $region27: #{tpu_custom_call.1} parent=11 // pred_region
          _
        $region28: #{tpu_custom_call.1} parent=11 // pred_fallthru
          _
        // Predicated region
        $region29: #{tpu_custom_call.1} parent=11 // pred_check
          %p422 = pneg %p200
        $region30: #{tpu_custom_call.1} parent=11 // pred_check_branch
          %424 = sbr.rel (%p422) target = $region32
        $region31: #{tpu_custom_call.1} parent=11 // pred_region
          _
        $region32: #{tpu_custom_call.1} parent=11 // pred_fallthru
          _
        // Predicated region
        $region33: #{tpu_custom_call.1} parent=11 // pred_check
          %p425 = pneg %p221
        $region34: #{tpu_custom_call.1} parent=11 // pred_check_branch
          %427 = sbr.rel (%p425) target = $region36
        $region35: #{tpu_custom_call.1} parent=11 // pred_region
          _
        $region36: #{tpu_custom_call.1} parent=11 // pred_fallthru
          _
        // Predicated region
        $region37: #{tpu_custom_call.1} parent=11 // pred_check
          %p428 = pneg %p242
        $region38: #{tpu_custom_call.1} parent=11 // pred_check_branch
          %430 = sbr.rel (%p428) target = $region40
        $region39: #{tpu_custom_call.1} parent=11 // pred_region
          %s432 = ssub.s32 8192, 8192
          %433 = vsyncadd [#allocation12], %s432
          %s434 = sshll.u32 [#allocation13], 4
          %s435 = int_to_ptr.vmem [resolvable:$true] %s434
          %440 = dma.hbm_to_vmem [thread:$0]  %s8, 8192, %s435, [#allocation12], 256, 256, 16
        $region40: #{tpu_custom_call.1} parent=11 // pred_fallthru
          _
        // Predicated region
        $region41: #{tpu_custom_call.1} parent=11 // pred_check
          %p441 = pneg %p263
        $region42: #{tpu_custom_call.1} parent=11 // pred_check_branch
          %443 = sbr.rel (%p441) target = $region44
        $region43: #{tpu_custom_call.1} parent=11 // pred_region
          _
        $region44: #{tpu_custom_call.1} parent=11 // pred_fallthru
          _
        // Predicated region
        $region45: #{tpu_custom_call.1} parent=11 // pred_check
          %p444 = pneg %p284
        $region46: #{tpu_custom_call.1} parent=11 // pred_check_branch
          %446 = sbr.rel (%p444) target = $region48
        $region47: #{tpu_custom_call.1} parent=11 // pred_region
          %s448 = ssub.s32 8192, 8192
          %449 = vsyncadd [#allocation15], %s448
          %s450 = sshll.u32 [#allocation14], 4
          %s451 = int_to_ptr.vmem [resolvable:$true] %s450
          %456 = dma.hbm_to_vmem [thread:$0]  %s10, 8192, %s451, [#allocation15], 128, 128, 8
        $region48: #{tpu_custom_call.1} parent=11 // pred_fallthru
          _
        // Predicated region
        $region49: #{tpu_custom_call.1} parent=11 // pred_check
          %p457 = pneg %p305
        $region50: #{tpu_custom_call.1} parent=11 // pred_check_branch
          %459 = sbr.rel (%p457) target = $region52
        $region51: #{tpu_custom_call.1} parent=11 // pred_region
          _
        $region52: #{tpu_custom_call.1} parent=11 // pred_fallthru
          _
        // Predicated region
        $region53: #{tpu_custom_call.1} parent=11 // pred_check
          %p460 = pneg %p326
        $region54: #{tpu_custom_call.1} parent=11 // pred_check_branch
          %462 = sbr.rel (%p460) target = $region56
        $region55: #{tpu_custom_call.1} parent=11 // pred_region
          _
        $region56: #{tpu_custom_call.1} parent=11 // pred_fallthru
          _
        // Predicated region
        $region57: #{tpu_custom_call.1} parent=11 // pred_check
          %p463 = pneg %p347
        $region58: #{tpu_custom_call.1} parent=11 // pred_check_branch
          %465 = sbr.rel (%p463) target = $region60
        $region59: #{tpu_custom_call.1} parent=11 // pred_region
          _
        $region60: #{tpu_custom_call.1} parent=11 // pred_fallthru
          _
      $region12: #{tpu_custom_call.1} parent=5 // pred_fallthru
        _
      %p466 = scmp.lt.s32.totalorder %s31, 4
      // Predicated region
      $region61: #{tpu_custom_call.1} parent=5 // pred_check
        %p467 = pneg %p466
      $region62: #{tpu_custom_call.1} parent=5 // pred_check_branch
        %469 = sbr.rel (%p467) target = $region64
      $region63: #{tpu_custom_call.1} parent=5 // pred_region
        // Predicated region
        $region65: #{tpu_custom_call.1} parent=63 // pred_check
          %p470 = pneg %p63
        $region66: #{tpu_custom_call.1} parent=63 // pred_check_branch
          %472 = sbr.rel (%p470) target = $region68
        $region67: #{tpu_custom_call.1} parent=63 // pred_region
          %s473 = sand.u32 %s53, 1
          %s474 = scalar_lea.sflag [#allocation6], %s473
          %s475 = sand.u32 %s53, 1
          %s476 = smul.addr %s475, 256
          %s477 = scalar_lea.vmem [#allocation5], %s476
          %s479 = ssub.s32 4096, 4096
          %480 = vsyncadd %s474, %s479
          %s481 = smul.addr %s38, 64
          %s482 = smul.addr %s481, 64
          %s483 = scalar_lea.hbm %s0, %s482
          %s484 = sshll.u32 %s477, 4
          %s485 = int_to_ptr.vmem [resolvable:$true] %s484
          %490 = dma.hbm_to_vmem [thread:$0]  %s483, 4096, %s485, %s474, 128, 128, 8
        $region68: #{tpu_custom_call.1} parent=63 // pred_fallthru
          _
        // Predicated region
        $region69: #{tpu_custom_call.1} parent=63 // pred_check
          %p491 = pneg %p89
        $region70: #{tpu_custom_call.1} parent=63 // pred_check_branch
          %493 = sbr.rel (%p491) target = $region72
        $region71: #{tpu_custom_call.1} parent=63 // pred_region
          %s494 = sand.u32 %s31, 1
          %s495 = scalar_lea.sflag [#allocation9], %s494
          %s496 = sand.u32 %s79, 1
          %s497 = smul.addr %s496, 2
          %s498 = scalar_lea.vmem [#allocation8], %s497
          %s500 = ssub.s32 32, 32
          %501 = vsyncadd %s495, %s500
          %s502 = smul.addr %s38, 2
          %s503 = smul.addr %s502, 16
          %s504 = scalar_lea.hbm %s1, %s503
          %s506 = sshll.u32 %s498, 4
          %s507 = int_to_ptr.vmem [resolvable:$true] %s506
          %509 = dma.hbm_to_vmem [thread:$0]  %s504, 32, %s507, %s495
        $region72: #{tpu_custom_call.1} parent=63 // pred_fallthru
          _
      $region64: #{tpu_custom_call.1} parent=5 // pred_fallthru
        _
      %p510 = scmp.le.s32.totalorder 1, %s31
      %p511 = scmp.lt.s32.totalorder %s31, 5
      %p512 = pnand %p510, %p511
      %p513 = pneg %p512
      // Predicated region
      $region73: #{tpu_custom_call.1} parent=5 // pred_check
        _
      $region74: #{tpu_custom_call.1} parent=5 // pred_check_branch
        %515 = sbr.rel (%p512) target = $region76
      $region75: #{tpu_custom_call.1} parent=5 // pred_region
        %s516 = ssub.s32 %s31, 1
        %s517 = sand.u32 %s56, 1
        %s518 = scalar_lea.sflag [#allocation6], %s517
        %s519 = sand.u32 %s56, 1
        %s520 = smul.addr %s519, 256
        %s521 = scalar_lea.vmem [#allocation5], %s520
        // Predicated region
        $region77: #{tpu_custom_call.1} parent=75 // pred_check
          %p522 = pneg %p69
        $region78: #{tpu_custom_call.1} parent=75 // pred_check_branch
          %524 = sbr.rel (%p522) target = $region80
        $region79: #{tpu_custom_call.1} parent=75 // pred_region
          %525 = dma.done %s518, 4096
        $region80: #{tpu_custom_call.1} parent=75 // pred_fallthru
          _
        %s526 = sand.u32 %s36, 1
        %s527 = scalar_lea.sflag [#allocation9], %s526
        %s528 = sand.u32 %s82, 1
        %s529 = smul.addr %s528, 2
        %s530 = scalar_lea.vmem [#allocation8], %s529
        // Predicated region
        $region81: #{tpu_custom_call.1} parent=75 // pred_check
          %p531 = pneg %p95
        $region82: #{tpu_custom_call.1} parent=75 // pred_check_branch
          %533 = sbr.rel (%p531) target = $region84
        $region83: #{tpu_custom_call.1} parent=75 // pred_region
          %534 = dma.done %s527, 32
        $region84: #{tpu_custom_call.1} parent=75 // pred_fallthru
          _
        // Predicated region
        $region85: #{tpu_custom_call.1} parent=75 // pred_check
          %p535 = pneg %p116
        $region86: #{tpu_custom_call.1} parent=75 // pred_check_branch
          %537 = sbr.rel (%p535) target = $region88
        $region87: #{tpu_custom_call.1} parent=75 // pred_region
          %538 = dma.done [#allocation9], 12288
        $region88: #{tpu_custom_call.1} parent=75 // pred_fallthru
          _
        // Predicated region
        $region89: #{tpu_custom_call.1} parent=75 // pred_check
          %p539 = pneg %p158
        $region90: #{tpu_custom_call.1} parent=75 // pred_check_branch
          %541 = sbr.rel (%p539) target = $region92
        $region91: #{tpu_custom_call.1} parent=75 // pred_region
          %542 = dma.done [#allocation12], 4096
        $region92: #{tpu_custom_call.1} parent=75 // pred_fallthru
          _
        // Predicated region
        $region93: #{tpu_custom_call.1} parent=75 // pred_check
          %p543 = pneg %p242
        $region94: #{tpu_custom_call.1} parent=75 // pred_check_branch
          %545 = sbr.rel (%p543) target = $region96
        $region95: #{tpu_custom_call.1} parent=75 // pred_region
          %546 = dma.done [#allocation12], 8192
        $region96: #{tpu_custom_call.1} parent=75 // pred_fallthru
          _
        // Predicated region
        $region97: #{tpu_custom_call.1} parent=75 // pred_check
          %p547 = pneg %p284
        $region98: #{tpu_custom_call.1} parent=75 // pred_check_branch
          %549 = sbr.rel (%p547) target = $region100
        $region99: #{tpu_custom_call.1} parent=75 // pred_region
          %550 = dma.done [#allocation15], 8192
        $region100: #{tpu_custom_call.1} parent=75 // pred_fallthru
          _
        %s551 = sand.u32 %s56, 1
        %s552 = scalar_lea.sflag [#allocation6], %s551
        %s553 = sand.u32 %s56, 1
        %s554 = smul.addr %s553, 256
        %s555 = scalar_lea.vmem [#allocation5], %s554
        %p556 = pneg %p69
        %p557 = pneg %p66
        %s558 = sand.u32 %s36, 1
        %s559 = scalar_lea.sflag [#allocation9], %s558
        %s560 = sand.u32 %s82, 1
        %s561 = smul.addr %s560, 2
        %s562 = scalar_lea.vmem [#allocation8], %s561
        %p563 = pneg %p95
        %p564 = pneg %p92
        %p565 = pneg %p116
        %p566 = pneg %p113
        %p567 = pneg %p137
        %p568 = pneg %p134
        %p569 = pneg %p158
        %p570 = pneg %p155
        %p571 = pneg %p179
        %p572 = pneg %p176
        %p573 = pneg %p200
        %p574 = pneg %p197
        %p575 = pneg %p221
        %p576 = pneg %p218
        %p577 = pneg %p242
        %p578 = pneg %p239
        %p579 = pneg %p263
        %p580 = pneg %p260
        %p581 = pneg %p284
        %p582 = pneg %p281
        %p583 = pneg %p305
        %p584 = pneg %p302
        %p585 = pneg %p326
        %p586 = pneg %p323
        %p587 = pneg %p347
        %p588 = pneg %p344
        %p589 = pneg %p375
        %p590 = pneg %p372
        %s591 = sand.u32 %s362, 1
        %s592 = scalar_lea.sflag [#allocation7], %s591
        %s593 = sand.u32 %s362, 1
        %s594 = smul.addr %s593, 256
        %s595 = scalar_lea.vmem [#allocation16], %s594
        %s596 = smul.u32 16, %s41
        %p598 = scmp.eq.s32.totalorder %s41, 0
        // Predicated region
        $region101: #{tpu_custom_call.1} parent=75 // pred_check
          %p599 = pneg %p598
        $region102: #{tpu_custom_call.1} parent=75 // pred_check_branch
          %601 = sbr.rel (%p599) target = $region104
        $region103: #{tpu_custom_call.1} parent=75 // pred_region
          %v602 = vld [vmem:[%s521] sm:$0xff]
          %v603 = vld [vmem:[%s521 + $0x8] sm:$0xff]
          %v604 = vld [vmem:[%s521 + $0x10] sm:$0xff]
          %v605 = vld [vmem:[%s521 + $0x18] sm:$0xff]
          %v606 = vld [vmem:[%s521 + $0x20] sm:$0xff]
          %v607 = vld [vmem:[%s521 + $0x28] sm:$0xff]
          %v608 = vld [vmem:[%s521 + $0x30] sm:$0xff]
          %v609 = vld [vmem:[%s521 + $0x38] sm:$0xff]
          %v610 = vld [vmem:[%s521 + $0x40] sm:$0xff]
          %v611 = vld [vmem:[%s521 + $0x48] sm:$0xff]
          %v612 = vld [vmem:[%s521 + $0x50] sm:$0xff]
          %v613 = vld [vmem:[%s521 + $0x58] sm:$0xff]
          %v614 = vld [vmem:[%s521 + $0x60] sm:$0xff]
          %v615 = vld [vmem:[%s521 + $0x68] sm:$0xff]
          %v616 = vld [vmem:[%s521 + $0x70] sm:$0xff]
          %v617 = vld [vmem:[%s521 + $0x78] sm:$0xff]
          %v618 = vld [vmem:[%s521 + $0x80] sm:$0xff]
          %v619 = vld [vmem:[%s521 + $0x88] sm:$0xff]
          %v620 = vld [vmem:[%s521 + $0x90] sm:$0xff]
          %v621 = vld [vmem:[%s521 + $0x98] sm:$0xff]
          %v622 = vld [vmem:[%s521 + $0xa0] sm:$0xff]
          %v623 = vld [vmem:[%s521 + $0xa8] sm:$0xff]
          %v624 = vld [vmem:[%s521 + $0xb0] sm:$0xff]
          %v625 = vld [vmem:[%s521 + $0xb8] sm:$0xff]
          %v626 = vld [vmem:[%s521 + $0xc0] sm:$0xff]
          %v627 = vld [vmem:[%s521 + $0xc8] sm:$0xff]
          %v628 = vld [vmem:[%s521 + $0xd0] sm:$0xff]
          %v629 = vld [vmem:[%s521 + $0xd8] sm:$0xff]
          %v630 = vld [vmem:[%s521 + $0xe0] sm:$0xff]
          %v631 = vld [vmem:[%s521 + $0xe8] sm:$0xff]
          %v632 = vld [vmem:[%s521 + $0xf0] sm:$0xff]
          %v633 = vld [vmem:[%s521 + $0xf8] sm:$0xff]
          %v634 = vld [vmem:[#allocation10 + $0x8] sm:$0xff]
          %v635 = vld [vmem:[#allocation10 + $0x10] sm:$0xff]
          %v636 = vld [vmem:[#allocation10 + $0x20] sm:$0xff]
          %v637 = vld [vmem:[#allocation10 + $0x28] sm:$0xff]
          %v638 = vld [vmem:[#allocation10 + $0x38] sm:$0xff]
          %v639 = vld [vmem:[#allocation10 + $0x40] sm:$0xff]
          %v640 = vld [vmem:[#allocation10 + $0x50] sm:$0xff]
          %v641 = vld [vmem:[#allocation10 + $0x58] sm:$0xff]
          %v642 = vld [vmem:[#allocation10 + $0x68] sm:$0xff]
          %v643 = vld [vmem:[#allocation10 + $0x70] sm:$0xff]
          %v644 = vld [vmem:[#allocation10 + $0x80] sm:$0xff]
          %v645 = vld [vmem:[#allocation10 + $0x88] sm:$0xff]
          %v646 = vld [vmem:[#allocation10 + $0x98] sm:$0xff]
          %v647 = vld [vmem:[#allocation10 + $0xa0] sm:$0xff]
          %v648 = vld [vmem:[#allocation10 + $0xb0] sm:$0xff]
          %v649 = vld [vmem:[#allocation10 + $0xb8] sm:$0xff]
          %v650 = vld [vmem:[#allocation10 + $0xc8] sm:$0xff]
          %v651 = vld [vmem:[#allocation10 + $0xd0] sm:$0xff]
          %v652 = vld [vmem:[#allocation10 + $0xe0] sm:$0xff]
          %v653 = vld [vmem:[#allocation10 + $0xe8] sm:$0xff]
          %v654 = vld [vmem:[#allocation10 + $0xf8] sm:$0xff]
          %v655 = vld [vmem:[#allocation10 + $0x100] sm:$0xff]
          %v656 = vld [vmem:[#allocation10 + $0x110] sm:$0xff]
          %v657 = vld [vmem:[#allocation10 + $0x118] sm:$0xff]
          %v658 = vld [vmem:[#allocation10 + $0x128] sm:$0xff]
          %v659 = vld [vmem:[#allocation10 + $0x130] sm:$0xff]
          %v660 = vld [vmem:[#allocation10 + $0x140] sm:$0xff]
          %v661 = vld [vmem:[#allocation10 + $0x148] sm:$0xff]
          %v662 = vld [vmem:[#allocation10 + $0x158] sm:$0xff]
          %v663 = vld [vmem:[#allocation10 + $0x160] sm:$0xff]
          %v664 = vld [vmem:[#allocation10 + $0x170] sm:$0xff]
          %v665 = vld [vmem:[#allocation10 + $0x178] sm:$0xff]
          %v666 = vld [vmem:[#allocation10 + $0x188] sm:$0xff]
          %v667 = vld [vmem:[#allocation10 + $0x190] sm:$0xff]
          %v668 = vld [vmem:[#allocation10 + $0x1a0] sm:$0xff]
          %v669 = vld [vmem:[#allocation10 + $0x1a8] sm:$0xff]
          %v670 = vld [vmem:[#allocation10 + $0x1b8] sm:$0xff]
          %v671 = vld [vmem:[#allocation10 + $0x1c0] sm:$0xff]
          %v672 = vld [vmem:[#allocation10 + $0x1d0] sm:$0xff]
          %v673 = vld [vmem:[#allocation10 + $0x1d8] sm:$0xff]
          %v674 = vld [vmem:[#allocation10 + $0x1e8] sm:$0xff]
          %v675 = vld [vmem:[#allocation10 + $0x1f0] sm:$0xff]
          %v676 = vld [vmem:[#allocation10 + $0x200] sm:$0xff]
          %v677 = vld [vmem:[#allocation10 + $0x208] sm:$0xff]
          %v678 = vld [vmem:[#allocation10 + $0x218] sm:$0xff]
          %v679 = vld [vmem:[#allocation10 + $0x220] sm:$0xff]
          %v680 = vld [vmem:[#allocation10 + $0x230] sm:$0xff]
          %v681 = vld [vmem:[#allocation10 + $0x238] sm:$0xff]
          %v682 = vld [vmem:[#allocation10 + $0x248] sm:$0xff]
          %v683 = vld [vmem:[#allocation10 + $0x250] sm:$0xff]
          %v684 = vld [vmem:[#allocation10 + $0x260] sm:$0xff]
          %v685 = vld [vmem:[#allocation10 + $0x268] sm:$0xff]
          %v686 = vld [vmem:[#allocation10 + $0x278] sm:$0xff]
          %v687 = vld [vmem:[#allocation10 + $0x280] sm:$0xff]
          %v688 = vld [vmem:[#allocation10 + $0x290] sm:$0xff]
          %v689 = vld [vmem:[#allocation10 + $0x298] sm:$0xff]
          %v690 = vld [vmem:[#allocation10 + $0x2a8] sm:$0xff]
          %v691 = vld [vmem:[#allocation10 + $0x2b0] sm:$0xff]
          %v692 = vld [vmem:[#allocation10 + $0x2c0] sm:$0xff]
          %v693 = vld [vmem:[#allocation10 + $0x2c8] sm:$0xff]
          %v694 = vld [vmem:[#allocation10 + $0x2d8] sm:$0xff]
          %v695 = vld [vmem:[#allocation10 + $0x2e0] sm:$0xff]
          %v696 = vld [vmem:[#allocation10 + $0x2f0] sm:$0xff]
          %v697 = vld [vmem:[#allocation10 + $0x2f8] sm:$0xff]
          %v698 = vld [vmem:[%s3 + $0x2] sm:$0xf]
          %v700 = vlaneseq
          %v701 = vshrl.u32 %v700, 7
          %v702 = vsub.s32 0, %v701
          %v703 = vrot.slane %v698, %v702
          %v704 = vlaneseq
          %v705 = vshrl.u32 %v704, 7
          %v706 = vsub.s32 1, %v705
          %v707 = vrot.slane %v698, %v706
          %v708 = vlaneseq
          %v709 = vshrl.u32 %v708, 7
          %v710 = vsub.s32 2, %v709
          %v711 = vrot.slane %v698, %v710
          %v712 = vlaneseq
          %v713 = vshrl.u32 %v712, 7
          %v714 = vsub.s32 3, %v713
          %v715 = vrot.slane %v698, %v714
          %v752 = vunpack.c.l.b16 %v602
          %v753 = vunpack.c.h.b16 %v602
          %v754 = vunpack.c.l.b16 %v603
          %v755 = vunpack.c.h.b16 %v603
          %v756 = vunpack.c.l.b16 %v604
          %v757 = vunpack.c.h.b16 %v604
          %v758 = vunpack.c.l.b16 %v605
          %v759 = vunpack.c.h.b16 %v605
          %v760 = vunpack.c.l.b16 %v606
          %v761 = vunpack.c.h.b16 %v606
          %v762 = vunpack.c.l.b16 %v607
          %v763 = vunpack.c.h.b16 %v607
          %v764 = vunpack.c.l.b16 %v608
          %v765 = vunpack.c.h.b16 %v608
          %v766 = vunpack.c.l.b16 %v609
          %v767 = vunpack.c.h.b16 %v609
          %v768 = vunpack.c.l.b16 %v610
          %v769 = vunpack.c.h.b16 %v610
          %v770 = vunpack.c.l.b16 %v611
          %v771 = vunpack.c.h.b16 %v611
          %v772 = vunpack.c.l.b16 %v612
          %v773 = vunpack.c.h.b16 %v612
          %v774 = vunpack.c.l.b16 %v613
          %v775 = vunpack.c.h.b16 %v613
          %v776 = vunpack.c.l.b16 %v614
          %v777 = vunpack.c.h.b16 %v614
          %v778 = vunpack.c.l.b16 %v615
          %v779 = vunpack.c.h.b16 %v615
          %v780 = vunpack.c.l.b16 %v616
          %v781 = vunpack.c.h.b16 %v616
          %v782 = vunpack.c.l.b16 %v617
          %v783 = vunpack.c.h.b16 %v617
          %v784 = vunpack.c.l.b16 %v618
          %v785 = vunpack.c.h.b16 %v618
          %v786 = vunpack.c.l.b16 %v619
          %v787 = vunpack.c.h.b16 %v619
          %v788 = vunpack.c.l.b16 %v620
          %v789 = vunpack.c.h.b16 %v620
          %v790 = vunpack.c.l.b16 %v621
          %v791 = vunpack.c.h.b16 %v621
          %v792 = vunpack.c.l.b16 %v622
          %v793 = vunpack.c.h.b16 %v622
          %v794 = vunpack.c.l.b16 %v623
          %v795 = vunpack.c.h.b16 %v623
          %v796 = vunpack.c.l.b16 %v624
          %v797 = vunpack.c.h.b16 %v624
          %v798 = vunpack.c.l.b16 %v625
          %v799 = vunpack.c.h.b16 %v625
          %v800 = vunpack.c.l.b16 %v626
          %v801 = vunpack.c.h.b16 %v626
          %v802 = vunpack.c.l.b16 %v627
          %v803 = vunpack.c.h.b16 %v627
          %v804 = vunpack.c.l.b16 %v628
          %v805 = vunpack.c.h.b16 %v628
          %v806 = vunpack.c.l.b16 %v629
          %v807 = vunpack.c.h.b16 %v629
          %v808 = vunpack.c.l.b16 %v630
          %v809 = vunpack.c.h.b16 %v630
          %v810 = vunpack.c.l.b16 %v631
          %v811 = vunpack.c.h.b16 %v631
          %v812 = vunpack.c.l.b16 %v632
          %v813 = vunpack.c.h.b16 %v632
          %v814 = vunpack.c.l.b16 %v633
          %v815 = vunpack.c.h.b16 %v633
          %v816 = vpack.c.b16 %v754, %v752
          %v817 = vpack.c.b16 %v755, %v753
          %v818 = vpack.c.b16 %v758, %v756
          %v819 = vpack.c.b16 %v759, %v757
          %v820 = vpack.c.b16 %v762, %v760
          %v821 = vpack.c.b16 %v763, %v761
          %v822 = vpack.c.b16 %v766, %v764
          %v823 = vpack.c.b16 %v767, %v765
          %v824 = vpack.c.b16 %v770, %v768
          %v825 = vpack.c.b16 %v771, %v769
          %v826 = vpack.c.b16 %v774, %v772
          %v827 = vpack.c.b16 %v775, %v773
          %v828 = vpack.c.b16 %v778, %v776
          %v829 = vpack.c.b16 %v779, %v777
          %v830 = vpack.c.b16 %v782, %v780
          %v831 = vpack.c.b16 %v783, %v781
          %v832 = vpack.c.b16 %v786, %v784
          %v833 = vpack.c.b16 %v787, %v785
          %v834 = vpack.c.b16 %v790, %v788
          %v835 = vpack.c.b16 %v791, %v789
          %v836 = vpack.c.b16 %v794, %v792
          %v837 = vpack.c.b16 %v795, %v793
          %v838 = vpack.c.b16 %v798, %v796
          %v839 = vpack.c.b16 %v799, %v797
          %v840 = vpack.c.b16 %v802, %v800
          %v841 = vpack.c.b16 %v803, %v801
          %v842 = vpack.c.b16 %v806, %v804
          %v843 = vpack.c.b16 %v807, %v805
          %v844 = vpack.c.b16 %v810, %v808
          %v845 = vpack.c.b16 %v811, %v809
          %v846 = vpack.c.b16 %v814, %v812
          %v847 = vpack.c.b16 %v815, %v813
          %v944 = vunpack.c.l.b16 %v634
          %v945 = vunpack.c.h.b16 %v634
          %v946 = vunpack.c.l.b16 %v635
          %v947 = vunpack.c.h.b16 %v635
          %v948 = vunpack.c.l.b16 %v636
          %v949 = vunpack.c.h.b16 %v636
          %v950 = vunpack.c.l.b16 %v637
          %v951 = vunpack.c.h.b16 %v637
          %v952 = vunpack.c.l.b16 %v638
          %v953 = vunpack.c.h.b16 %v638
          %v954 = vunpack.c.l.b16 %v639
          %v955 = vunpack.c.h.b16 %v639
          %v956 = vunpack.c.l.b16 %v640
          %v957 = vunpack.c.h.b16 %v640
          %v958 = vunpack.c.l.b16 %v641
          %v959 = vunpack.c.h.b16 %v641
          %v960 = vunpack.c.l.b16 %v642
          %v961 = vunpack.c.h.b16 %v642
          %v962 = vunpack.c.l.b16 %v643
          %v963 = vunpack.c.h.b16 %v643
          %v964 = vunpack.c.l.b16 %v644
          %v965 = vunpack.c.h.b16 %v644
          %v966 = vunpack.c.l.b16 %v645
          %v967 = vunpack.c.h.b16 %v645
          %v968 = vunpack.c.l.b16 %v646
          %v969 = vunpack.c.h.b16 %v646
          %v970 = vunpack.c.l.b16 %v647
          %v971 = vunpack.c.h.b16 %v647
          %v972 = vunpack.c.l.b16 %v648
          %v973 = vunpack.c.h.b16 %v648
          %v974 = vunpack.c.l.b16 %v649
          %v975 = vunpack.c.h.b16 %v649
          %v976 = vunpack.c.l.b16 %v650
          %v977 = vunpack.c.h.b16 %v650
          %v978 = vunpack.c.l.b16 %v651
          %v979 = vunpack.c.h.b16 %v651
          %v980 = vunpack.c.l.b16 %v652
          %v981 = vunpack.c.h.b16 %v652
          %v982 = vunpack.c.l.b16 %v653
          %v983 = vunpack.c.h.b16 %v653
          %v984 = vunpack.c.l.b16 %v654
          %v985 = vunpack.c.h.b16 %v654
          %v986 = vunpack.c.l.b16 %v655
          %v987 = vunpack.c.h.b16 %v655
          %v988 = vunpack.c.l.b16 %v656
          %v989 = vunpack.c.h.b16 %v656
          %v990 = vunpack.c.l.b16 %v657
          %v991 = vunpack.c.h.b16 %v657
          %v992 = vunpack.c.l.b16 %v658
          %v993 = vunpack.c.h.b16 %v658
          %v994 = vunpack.c.l.b16 %v659
          %v995 = vunpack.c.h.b16 %v659
          %v996 = vunpack.c.l.b16 %v660
          %v997 = vunpack.c.h.b16 %v660
          %v998 = vunpack.c.l.b16 %v661
          %v999 = vunpack.c.h.b16 %v661
          %v1000 = vunpack.c.l.b16 %v662
          %v1001 = vunpack.c.h.b16 %v662
          %v1002 = vunpack.c.l.b16 %v663
          %v1003 = vunpack.c.h.b16 %v663
          %v1004 = vunpack.c.l.b16 %v664
          %v1005 = vunpack.c.h.b16 %v664
          %v1006 = vunpack.c.l.b16 %v665
          %v1007 = vunpack.c.h.b16 %v665
          %v1008 = vunpack.c.l.b16 %v666
          %v1009 = vunpack.c.h.b16 %v666
          %v1010 = vunpack.c.l.b16 %v667
          %v1011 = vunpack.c.h.b16 %v667
          %v1012 = vunpack.c.l.b16 %v668
          %v1013 = vunpack.c.h.b16 %v668
          %v1014 = vunpack.c.l.b16 %v669
          %v1015 = vunpack.c.h.b16 %v669
          %v1016 = vunpack.c.l.b16 %v670
          %v1017 = vunpack.c.h.b16 %v670
          %v1018 = vunpack.c.l.b16 %v671
          %v1019 = vunpack.c.h.b16 %v671
          %v1020 = vunpack.c.l.b16 %v672
          %v1021 = vunpack.c.h.b16 %v672
          %v1022 = vunpack.c.l.b16 %v673
          %v1023 = vunpack.c.h.b16 %v673
          %v1024 = vunpack.c.l.b16 %v674
          %v1025 = vunpack.c.h.b16 %v674
          %v1026 = vunpack.c.l.b16 %v675
          %v1027 = vunpack.c.h.b16 %v675
          %v1028 = vunpack.c.l.b16 %v676
          %v1029 = vunpack.c.h.b16 %v676
          %v1030 = vunpack.c.l.b16 %v677
          %v1031 = vunpack.c.h.b16 %v677
          %v1032 = vunpack.c.l.b16 %v678
          %v1033 = vunpack.c.h.b16 %v678
          %v1034 = vunpack.c.l.b16 %v679
          %v1035 = vunpack.c.h.b16 %v679
          %v1036 = vunpack.c.l.b16 %v680
          %v1037 = vunpack.c.h.b16 %v680
          %v1038 = vunpack.c.l.b16 %v681
          %v1039 = vunpack.c.h.b16 %v681
          %v1040 = vunpack.c.l.b16 %v682
          %v1041 = vunpack.c.h.b16 %v682
          %v1042 = vunpack.c.l.b16 %v683
          %v1043 = vunpack.c.h.b16 %v683
          %v1044 = vunpack.c.l.b16 %v684
          %v1045 = vunpack.c.h.b16 %v684
          %v1046 = vunpack.c.l.b16 %v685
          %v1047 = vunpack.c.h.b16 %v685
          %v1048 = vunpack.c.l.b16 %v686
          %v1049 = vunpack.c.h.b16 %v686
          %v1050 = vunpack.c.l.b16 %v687
          %v1051 = vunpack.c.h.b16 %v687
          %v1052 = vunpack.c.l.b16 %v688
          %v1053 = vunpack.c.h.b16 %v688
          %v1054 = vunpack.c.l.b16 %v689
          %v1055 = vunpack.c.h.b16 %v689
          %v1056 = vunpack.c.l.b16 %v690
          %v1057 = vunpack.c.h.b16 %v690
          %v1058 = vunpack.c.l.b16 %v691
          %v1059 = vunpack.c.h.b16 %v691
          %v1060 = vunpack.c.l.b16 %v692
          %v1061 = vunpack.c.h.b16 %v692
          %v1062 = vunpack.c.l.b16 %v693
          %v1063 = vunpack.c.h.b16 %v693
          %v1064 = vunpack.c.l.b16 %v694
          %v1065 = vunpack.c.h.b16 %v694
          %v1066 = vunpack.c.l.b16 %v695
          %v1067 = vunpack.c.h.b16 %v695
          %v1068 = vunpack.c.l.b16 %v696
          %v1069 = vunpack.c.h.b16 %v696
          %v1070 = vunpack.c.l.b16 %v697
          %v1071 = vunpack.c.h.b16 %v697
          %v1072 = vpack.c.b16 %v948, %v944
          %v1073 = vpack.c.b16 %v949, %v945
          %v1074 = vpack.c.b16 %v950, %v946
          %v1075 = vpack.c.b16 %v951, %v947
          %v1076 = vpack.c.b16 %v956, %v952
          %v1077 = vpack.c.b16 %v957, %v953
          %v1078 = vpack.c.b16 %v958, %v954
          %v1079 = vpack.c.b16 %v959, %v955
          %v1080 = vpack.c.b16 %v964, %v960
          %v1081 = vpack.c.b16 %v965, %v961
          %v1082 = vpack.c.b16 %v966, %v962
          %v1083 = vpack.c.b16 %v967, %v963
          %v1084 = vpack.c.b16 %v972, %v968
          %v1085 = vpack.c.b16 %v973, %v969
          %v1086 = vpack.c.b16 %v974, %v970
          %v1087 = vpack.c.b16 %v975, %v971
          %v1088 = vpack.c.b16 %v980, %v976
          %v1089 = vpack.c.b16 %v981, %v977
          %v1090 = vpack.c.b16 %v982, %v978
          %v1091 = vpack.c.b16 %v983, %v979
          %v1092 = vpack.c.b16 %v988, %v984
          %v1093 = vpack.c.b16 %v989, %v985
          %v1094 = vpack.c.b16 %v990, %v986
          %v1095 = vpack.c.b16 %v991, %v987
          %v1096 = vpack.c.b16 %v996, %v992
          %v1097 = vpack.c.b16 %v997, %v993
          %v1098 = vpack.c.b16 %v998, %v994
          %v1099 = vpack.c.b16 %v999, %v995
          %v1100 = vpack.c.b16 %v1004, %v1000
          %v1101 = vpack.c.b16 %v1005, %v1001
          %v1102 = vpack.c.b16 %v1006, %v1002
          %v1103 = vpack.c.b16 %v1007, %v1003
          %v1104 = vpack.c.b16 %v1012, %v1008
          %v1105 = vpack.c.b16 %v1013, %v1009
          %v1106 = vpack.c.b16 %v1014, %v1010
          %v1107 = vpack.c.b16 %v1015, %v1011
          %v1108 = vpack.c.b16 %v1020, %v1016
          %v1109 = vpack.c.b16 %v1021, %v1017
          %v1110 = vpack.c.b16 %v1022, %v1018
          %v1111 = vpack.c.b16 %v1023, %v1019
          %v1112 = vpack.c.b16 %v1028, %v1024
          %v1113 = vpack.c.b16 %v1029, %v1025
          %v1114 = vpack.c.b16 %v1030, %v1026
          %v1115 = vpack.c.b16 %v1031, %v1027
          %v1116 = vpack.c.b16 %v1036, %v1032
          %v1117 = vpack.c.b16 %v1037, %v1033
          %v1118 = vpack.c.b16 %v1038, %v1034
          %v1119 = vpack.c.b16 %v1039, %v1035
          %v1120 = vpack.c.b16 %v1044, %v1040
          %v1121 = vpack.c.b16 %v1045, %v1041
          %v1122 = vpack.c.b16 %v1046, %v1042
          %v1123 = vpack.c.b16 %v1047, %v1043
          %v1124 = vpack.c.b16 %v1052, %v1048
          %v1125 = vpack.c.b16 %v1053, %v1049
          %v1126 = vpack.c.b16 %v1054, %v1050
          %v1127 = vpack.c.b16 %v1055, %v1051
          %v1128 = vpack.c.b16 %v1060, %v1056
          %v1129 = vpack.c.b16 %v1061, %v1057
          %v1130 = vpack.c.b16 %v1062, %v1058
          %v1131 = vpack.c.b16 %v1063, %v1059
          %v1132 = vpack.c.b16 %v1068, %v1064
          %v1133 = vpack.c.b16 %v1069, %v1065
          %v1134 = vpack.c.b16 %v1070, %v1066
          %v1135 = vpack.c.b16 %v1071, %v1067
          %1200 = vmatprep.subr.bf16.mxu0 %v1073
          %1201 = vmatpush1.bf16.msra.mxu0 %v1072
          %1202 = vmatprep.subr.bf16.mxu0 %v1077
          %1203 = vmatpush1.bf16.msra.mxu0 %v1076
          %1204 = vmatprep.subr.bf16.mxu0 %v1081
          %1205 = vmatpush1.bf16.msra.mxu0 %v1080
          %1206 = vmatprep.subr.bf16.mxu0 %v1085
          %1207 = vmatpush1.bf16.msra.mxu0 %v1084
          %1208 = vmatprep.subr.bf16.mxu0 %v1089
          %1209 = vmatpush1.bf16.msra.mxu0 %v1088
          %1210 = vmatprep.subr.bf16.mxu0 %v1093
          %1211 = vmatpush1.bf16.msra.mxu0 %v1092
          %1212 = vmatprep.subr.bf16.mxu0 %v1097
          %1213 = vmatpush1.bf16.msra.mxu0 %v1096
          %1214 = vmatprep.subr.bf16.mxu0 %v1101
          %1215 = vmatpush1.bf16.msra.mxu0 %v1100
          %1216 = vmatprep.subr.bf16.mxu0 %v1105
          %1217 = vmatpush1.bf16.msra.mxu0 %v1104
          %1218 = vmatprep.subr.bf16.mxu0 %v1109
          %1219 = vmatpush1.bf16.msra.mxu0 %v1108
          %1220 = vmatprep.subr.bf16.mxu0 %v1113
          %1221 = vmatpush1.bf16.msra.mxu0 %v1112
          %1222 = vmatprep.subr.bf16.mxu0 %v1117
          %1223 = vmatpush1.bf16.msra.mxu0 %v1116
          %1224 = vmatprep.subr.bf16.mxu0 %v1121
          %1225 = vmatpush1.bf16.msra.mxu0 %v1120
          %1226 = vmatprep.subr.bf16.mxu0 %v1125
          %1227 = vmatpush1.bf16.msra.mxu0 %v1124
          %1228 = vmatprep.subr.bf16.mxu0 %v1129
          %1229 = vmatpush1.bf16.msra.mxu0 %v1128
          %1230 = vmatprep.subr.bf16.mxu0 %v1133
          %1231 = vmatpush1.bf16.msra.mxu0 %v1132
          %1232 = vmatprep.mubr.bf16.mxu0 %v817
          %1233 = vmatmul.mubr.bf16.gmra.mrb[0].mxu0 %v816
          %v1234 = vpop.f32.mrb[0].mxu0
          %v1235 = vadd.f32 %v703, %v1234
          %v1236 = vpop.f32.mrb[0].mxu0
          %v1237 = vadd.f32 %v707, %v1236
          %v1238 = vpop.f32.mrb[0].mxu0
          %v1239 = vadd.f32 %v703, %v1238
          %v1240 = vpop.f32.mrb[0].mxu0
          %v1241 = vadd.f32 %v707, %v1240
          %1242 = vmatprep.mubr.bf16.mxu0 %v819
          %1243 = vmatmul.mubr.bf16.gmra.mrb[0].mxu0 %v818
          %v1244 = vpop.f32.mrb[0].mxu0
          %v1245 = vadd.f32 %v703, %v1244
          %v1246 = vpop.f32.mrb[0].mxu0
          %v1247 = vadd.f32 %v707, %v1246
          %v1248 = vpop.f32.mrb[0].mxu0
          %v1249 = vadd.f32 %v703, %v1248
          %v1250 = vpop.f32.mrb[0].mxu0
          %v1251 = vadd.f32 %v707, %v1250
          %1252 = vmatprep.mubr.bf16.mxu0 %v821
          %1253 = vmatmul.mubr.bf16.gmra.mrb[0].mxu0 %v820
          %v1254 = vpop.f32.mrb[0].mxu0
          %v1255 = vadd.f32 %v703, %v1254
          %v1256 = vpop.f32.mrb[0].mxu0
          %v1257 = vadd.f32 %v707, %v1256
          %v1258 = vpop.f32.mrb[0].mxu0
          %v1259 = vadd.f32 %v703, %v1258
          %v1260 = vpop.f32.mrb[0].mxu0
          %v1261 = vadd.f32 %v707, %v1260
          %1262 = vmatprep.mubr.bf16.mxu0 %v823
          %1263 = vmatmul.mubr.bf16.gmra.mrb[0].mxu0 %v822
          %v1264 = vpop.f32.mrb[0].mxu0
          %v1265 = vadd.f32 %v703, %v1264
          %v1266 = vpop.f32.mrb[0].mxu0
          %v1267 = vadd.f32 %v707, %v1266
          %v1268 = vpop.f32.mrb[0].mxu0
          %v1269 = vadd.f32 %v703, %v1268
          %v1270 = vpop.f32.mrb[0].mxu0
          %v1271 = vadd.f32 %v707, %v1270
          %1272 = vmatprep.mubr.bf16.mxu0 %v825
          %1273 = vmatmul.mubr.bf16.gmra.mrb[0].mxu0 %v824
          %v1274 = vpop.f32.mrb[0].mxu0
          %v1275 = vadd.f32 %v703, %v1274
          %v1276 = vpop.f32.mrb[0].mxu0
          %v1277 = vadd.f32 %v707, %v1276
          %v1278 = vpop.f32.mrb[0].mxu0
          %v1279 = vadd.f32 %v703, %v1278
          %v1280 = vpop.f32.mrb[0].mxu0
          %v1281 = vadd.f32 %v707, %v1280
          %1282 = vmatprep.mubr.bf16.mxu0 %v827
          %1283 = vmatmul.mubr.bf16.gmra.mrb[0].mxu0 %v826
          %v1284 = vpop.f32.mrb[0].mxu0
          %v1285 = vadd.f32 %v703, %v1284
          %v1286 = vpop.f32.mrb[0].mxu0
          %v1287 = vadd.f32 %v707, %v1286
          %v1288 = vpop.f32.mrb[0].mxu0
          %v1289 = vadd.f32 %v703, %v1288
          %v1290 = vpop.f32.mrb[0].mxu0
          %v1291 = vadd.f32 %v707, %v1290
          %1292 = vmatprep.mubr.bf16.mxu0 %v829
          %1293 = vmatmul.mubr.bf16.gmra.mrb[0].mxu0 %v828
          %v1294 = vpop.f32.mrb[0].mxu0
          %v1295 = vadd.f32 %v703, %v1294
          %v1296 = vpop.f32.mrb[0].mxu0
          %v1297 = vadd.f32 %v707, %v1296
          %v1298 = vpop.f32.mrb[0].mxu0
          %v1299 = vadd.f32 %v703, %v1298
          %v1300 = vpop.f32.mrb[0].mxu0
          %v1301 = vadd.f32 %v707, %v1300
          %1302 = vmatprep.mubr.bf16.mxu0 %v831
          %1303 = vmatmul.mubr.bf16.gmra.mrb[0].mxu0 %v830
          %v1304 = vpop.f32.mrb[0].mxu0
          %v1305 = vadd.f32 %v703, %v1304
          %v1306 = vpop.f32.mrb[0].mxu0
          %v1307 = vadd.f32 %v707, %v1306
          %v1308 = vpop.f32.mrb[0].mxu0
          %v1309 = vadd.f32 %v703, %v1308
          %v1310 = vpop.f32.mrb[0].mxu0
          %v1311 = vadd.f32 %v707, %v1310
          %1312 = vmatprep.mubr.bf16.mxu0 %v833
          %1313 = vmatmul.mubr.bf16.gmra.mrb[0].mxu0 %v832
          %v1314 = vpop.f32.mrb[0].mxu0
          %v1315 = vadd.f32 %v703, %v1314
          %v1316 = vpop.f32.mrb[0].mxu0
          %v1317 = vadd.f32 %v707, %v1316
          %v1318 = vpop.f32.mrb[0].mxu0
          %v1319 = vadd.f32 %v703, %v1318
          %v1320 = vpop.f32.mrb[0].mxu0
          %v1321 = vadd.f32 %v707, %v1320
          %1322 = vmatprep.mubr.bf16.mxu0 %v835
          %1323 = vmatmul.mubr.bf16.gmra.mrb[0].mxu0 %v834
          %v1324 = vpop.f32.mrb[0].mxu0
          %v1325 = vadd.f32 %v703, %v1324
          %v1326 = vpop.f32.mrb[0].mxu0
          %v1327 = vadd.f32 %v707, %v1326
          %v1328 = vpop.f32.mrb[0].mxu0
          %v1329 = vadd.f32 %v703, %v1328
          %v1330 = vpop.f32.mrb[0].mxu0
          %v1331 = vadd.f32 %v707, %v1330
          %1332 = vmatprep.mubr.bf16.mxu0 %v837
          %1333 = vmatmul.mubr.bf16.gmra.mrb[0].mxu0 %v836
          %v1334 = vpop.f32.mrb[0].mxu0
          %v1335 = vadd.f32 %v703, %v1334
          %v1336 = vpop.f32.mrb[0].mxu0
          %v1337 = vadd.f32 %v707, %v1336
          %v1338 = vpop.f32.mrb[0].mxu0
          %v1339 = vadd.f32 %v703, %v1338
          %v1340 = vpop.f32.mrb[0].mxu0
          %v1341 = vadd.f32 %v707, %v1340
          %1342 = vmatprep.mubr.bf16.mxu0 %v839
          %1343 = vmatmul.mubr.bf16.gmra.mrb[0].mxu0 %v838
          %v1344 = vpop.f32.mrb[0].mxu0
          %v1345 = vadd.f32 %v703, %v1344
          %v1346 = vpop.f32.mrb[0].mxu0
          %v1347 = vadd.f32 %v707, %v1346
          %v1348 = vpop.f32.mrb[0].mxu0
          %v1349 = vadd.f32 %v703, %v1348
          %v1350 = vpop.f32.mrb[0].mxu0
          %v1351 = vadd.f32 %v707, %v1350
          %1352 = vmatprep.mubr.bf16.mxu0 %v841
          %1353 = vmatmul.mubr.bf16.gmra.mrb[0].mxu0 %v840
          %v1354 = vpop.f32.mrb[0].mxu0
          %v1355 = vadd.f32 %v703, %v1354
          %v1356 = vpop.f32.mrb[0].mxu0
          %v1357 = vadd.f32 %v707, %v1356
          %v1358 = vpop.f32.mrb[0].mxu0
          %v1359 = vadd.f32 %v703, %v1358
          %v1360 = vpop.f32.mrb[0].mxu0
          %v1361 = vadd.f32 %v707, %v1360
          %1362 = vmatprep.mubr.bf16.mxu0 %v843
          %1363 = vmatmul.mubr.bf16.gmra.mrb[0].mxu0 %v842
          %v1364 = vpop.f32.mrb[0].mxu0
          %v1365 = vadd.f32 %v703, %v1364
          %v1366 = vpop.f32.mrb[0].mxu0
          %v1367 = vadd.f32 %v707, %v1366
          %v1368 = vpop.f32.mrb[0].mxu0
          %v1369 = vadd.f32 %v703, %v1368
          %v1370 = vpop.f32.mrb[0].mxu0
          %v1371 = vadd.f32 %v707, %v1370
          %1372 = vmatprep.mubr.bf16.mxu0 %v845
          %1373 = vmatmul.mubr.bf16.gmra.mrb[0].mxu0 %v844
          %v1374 = vpop.f32.mrb[0].mxu0
          %v1375 = vadd.f32 %v703, %v1374
          %v1376 = vpop.f32.mrb[0].mxu0
          %v1377 = vadd.f32 %v707, %v1376
          %v1378 = vpop.f32.mrb[0].mxu0
          %v1379 = vadd.f32 %v703, %v1378
          %v1380 = vpop.f32.mrb[0].mxu0
          %v1381 = vadd.f32 %v707, %v1380
          %1382 = vmatprep.mubr.bf16.mxu0 %v847
          %1383 = vmatmul.mubr.bf16.gmra.mrb[0].mxu0 %v846
          %v1384 = vpop.f32.mrb[0].mxu0
          %v1385 = vadd.f32 %v703, %v1384
          %v1386 = vpop.f32.mrb[0].mxu0
          %v1387 = vadd.f32 %v707, %v1386
          %v1388 = vpop.f32.mrb[0].mxu0
          %v1389 = vadd.f32 %v703, %v1388
          %v1390 = vpop.f32.mrb[0].mxu0
          %v1391 = vadd.f32 %v707, %v1390
          %1392 = vdwg.mxu0
          %1393 = vmatprep.subr.bf16.mxu0 %v1075
          %1394 = vmatpush1.bf16.msra.mxu0 %v1074
          %1395 = vmatprep.subr.bf16.mxu0 %v1079
          %1396 = vmatpush1.bf16.msra.mxu0 %v1078
          %1397 = vmatprep.subr.bf16.mxu0 %v1083
          %1398 = vmatpush1.bf16.msra.mxu0 %v1082
          %1399 = vmatprep.subr.bf16.mxu0 %v1087
          %1400 = vmatpush1.bf16.msra.mxu0 %v1086
          %1401 = vmatprep.subr.bf16.mxu0 %v1091
          %1402 = vmatpush1.bf16.msra.mxu0 %v1090
          %1403 = vmatprep.subr.bf16.mxu0 %v1095
          %1404 = vmatpush1.bf16.msra.mxu0 %v1094
          %1405 = vmatprep.subr.bf16.mxu0 %v1099
          %1406 = vmatpush1.bf16.msra.mxu0 %v1098
          %1407 = vmatprep.subr.bf16.mxu0 %v1103
          %1408 = vmatpush1.bf16.msra.mxu0 %v1102
          %1409 = vmatprep.subr.bf16.mxu0 %v1107
          %1410 = vmatpush1.bf16.msra.mxu0 %v1106
          %1411 = vmatprep.subr.bf16.mxu0 %v1111
          %1412 = vmatpush1.bf16.msra.mxu0 %v1110
          %1413 = vmatprep.subr.bf16.mxu0 %v1115
          %1414 = vmatpush1.bf16.msra.mxu0 %v1114
          %1415 = vmatprep.subr.bf16.mxu0 %v1119
          %1416 = vmatpush1.bf16.msra.mxu0 %v1118
          %1417 = vmatprep.subr.bf16.mxu0 %v1123
          %1418 = vmatpush1.bf16.msra.mxu0 %v1122
          %1419 = vmatprep.subr.bf16.mxu0 %v1127
          %1420 = vmatpush1.bf16.msra.mxu0 %v1126
          %1421 = vmatprep.subr.bf16.mxu0 %v1131
          %1422 = vmatpush1.bf16.msra.mxu0 %v1130
          %1423 = vmatprep.subr.bf16.mxu0 %v1135
          %1424 = vmatpush1.bf16.msra.mxu0 %v1134
          %1425 = vmatprep.mubr.bf16.mxu0 %v817
          %1426 = vmatmul.mubr.bf16.gmra.mrb[0].mxu0 %v816
          %v1427 = vpop.f32.mrb[0].mxu0
          %v1428 = vadd.f32 %v711, %v1427
          %v1429 = vpop.f32.mrb[0].mxu0
          %v1430 = vadd.f32 %v715, %v1429
          %v1431 = vpop.f32.mrb[0].mxu0
          %v1432 = vadd.f32 %v711, %v1431
          %v1433 = vpop.f32.mrb[0].mxu0
          %v1434 = vadd.f32 %v715, %v1433
          %1435 = vmatprep.mubr.bf16.mxu0 %v819
          %1436 = vmatmul.mubr.bf16.gmra.mrb[0].mxu0 %v818
          %v1437 = vpop.f32.mrb[0].mxu0
          %v1438 = vadd.f32 %v711, %v1437
          %v1439 = vpop.f32.mrb[0].mxu0
          %v1440 = vadd.f32 %v715, %v1439
          %v1441 = vpop.f32.mrb[0].mxu0
          %v1442 = vadd.f32 %v711, %v1441
          %v1443 = vpop.f32.mrb[0].mxu0
          %v1444 = vadd.f32 %v715, %v1443
          %1445 = vmatprep.mubr.bf16.mxu0 %v821
          %1446 = vmatmul.mubr.bf16.gmra.mrb[0].mxu0 %v820
          %v1447 = vpop.f32.mrb[0].mxu0
          %v1448 = vadd.f32 %v711, %v1447
          %v1449 = vpop.f32.mrb[0].mxu0
          %v1450 = vadd.f32 %v715, %v1449
          %v1451 = vpop.f32.mrb[0].mxu0
          %v1452 = vadd.f32 %v711, %v1451
          %v1453 = vpop.f32.mrb[0].mxu0
          %v1454 = vadd.f32 %v715, %v1453
          %1455 = vmatprep.mubr.bf16.mxu0 %v823
          %1456 = vmatmul.mubr.bf16.gmra.mrb[0].mxu0 %v822
          %v1457 = vpop.f32.mrb[0].mxu0
          %v1458 = vadd.f32 %v711, %v1457
          %v1459 = vpop.f32.mrb[0].mxu0
          %v1460 = vadd.f32 %v715, %v1459
          %v1461 = vpop.f32.mrb[0].mxu0
          %v1462 = vadd.f32 %v711, %v1461
          %v1463 = vpop.f32.mrb[0].mxu0
          %v1464 = vadd.f32 %v715, %v1463
          %1465 = vmatprep.mubr.bf16.mxu0 %v825
          %1466 = vmatmul.mubr.bf16.gmra.mrb[0].mxu0 %v824
          %v1467 = vpop.f32.mrb[0].mxu0
          %v1468 = vadd.f32 %v711, %v1467
          %v1469 = vpop.f32.mrb[0].mxu0
          %v1470 = vadd.f32 %v715, %v1469
          %v1471 = vpop.f32.mrb[0].mxu0
          %v1472 = vadd.f32 %v711, %v1471
          %v1473 = vpop.f32.mrb[0].mxu0
          %v1474 = vadd.f32 %v715, %v1473
          %1475 = vmatprep.mubr.bf16.mxu0 %v827
          %1476 = vmatmul.mubr.bf16.gmra.mrb[0].mxu0 %v826
          %v1477 = vpop.f32.mrb[0].mxu0
          %v1478 = vadd.f32 %v711, %v1477
          %v1479 = vpop.f32.mrb[0].mxu0
          %v1480 = vadd.f32 %v715, %v1479
          %v1481 = vpop.f32.mrb[0].mxu0
          %v1482 = vadd.f32 %v711, %v1481
          %v1483 = vpop.f32.mrb[0].mxu0
          %v1484 = vadd.f32 %v715, %v1483
          %1485 = vmatprep.mubr.bf16.mxu0 %v829
          %1486 = vmatmul.mubr.bf16.gmra.mrb[0].mxu0 %v828
          %v1487 = vpop.f32.mrb[0].mxu0
          %v1488 = vadd.f32 %v711, %v1487
          %v1489 = vpop.f32.mrb[0].mxu0
          %v1490 = vadd.f32 %v715, %v1489
          %v1491 = vpop.f32.mrb[0].mxu0
          %v1492 = vadd.f32 %v711, %v1491
          %v1493 = vpop.f32.mrb[0].mxu0
          %v1494 = vadd.f32 %v715, %v1493
          %1495 = vmatprep.mubr.bf16.mxu0 %v831
          %1496 = vmatmul.mubr.bf16.gmra.mrb[0].mxu0 %v830
          %v1497 = vpop.f32.mrb[0].mxu0
          %v1498 = vadd.f32 %v711, %v1497
          %v1499 = vpop.f32.mrb[0].mxu0
          %v1500 = vadd.f32 %v715, %v1499
          %v1501 = vpop.f32.mrb[0].mxu0
          %v1502 = vadd.f32 %v711, %v1501
          %v1503 = vpop.f32.mrb[0].mxu0
          %v1504 = vadd.f32 %v715, %v1503
          %1505 = vmatprep.mubr.bf16.mxu0 %v833
          %1506 = vmatmul.mubr.bf16.gmra.mrb[0].mxu0 %v832
          %v1507 = vpop.f32.mrb[0].mxu0
          %v1508 = vadd.f32 %v711, %v1507
          %v1509 = vpop.f32.mrb[0].mxu0
          %v1510 = vadd.f32 %v715, %v1509
          %v1511 = vpop.f32.mrb[0].mxu0
          %v1512 = vadd.f32 %v711, %v1511
          %v1513 = vpop.f32.mrb[0].mxu0
          %v1514 = vadd.f32 %v715, %v1513
          %1515 = vmatprep.mubr.bf16.mxu0 %v835
          %1516 = vmatmul.mubr.bf16.gmra.mrb[0].mxu0 %v834
          %v1517 = vpop.f32.mrb[0].mxu0
          %v1518 = vadd.f32 %v711, %v1517
          %v1519 = vpop.f32.mrb[0].mxu0
          %v1520 = vadd.f32 %v715, %v1519
          %v1521 = vpop.f32.mrb[0].mxu0
          %v1522 = vadd.f32 %v711, %v1521
          %v1523 = vpop.f32.mrb[0].mxu0
          %v1524 = vadd.f32 %v715, %v1523
          %1525 = vmatprep.mubr.bf16.mxu0 %v837
          %1526 = vmatmul.mubr.bf16.gmra.mrb[0].mxu0 %v836
          %v1527 = vpop.f32.mrb[0].mxu0
          %v1528 = vadd.f32 %v711, %v1527
          %v1529 = vpop.f32.mrb[0].mxu0
          %v1530 = vadd.f32 %v715, %v1529
          %v1531 = vpop.f32.mrb[0].mxu0
          %v1532 = vadd.f32 %v711, %v1531
          %v1533 = vpop.f32.mrb[0].mxu0
          %v1534 = vadd.f32 %v715, %v1533
          %1535 = vmatprep.mubr.bf16.mxu0 %v839
          %1536 = vmatmul.mubr.bf16.gmra.mrb[0].mxu0 %v838
          %v1537 = vpop.f32.mrb[0].mxu0
          %v1538 = vadd.f32 %v711, %v1537
          %v1539 = vpop.f32.mrb[0].mxu0
          %v1540 = vadd.f32 %v715, %v1539
          %v1541 = vpop.f32.mrb[0].mxu0
          %v1542 = vadd.f32 %v711, %v1541
          %v1543 = vpop.f32.mrb[0].mxu0
          %v1544 = vadd.f32 %v715, %v1543
          %1545 = vmatprep.mubr.bf16.mxu0 %v841
          %1546 = vmatmul.mubr.bf16.gmra.mrb[0].mxu0 %v840
          %v1547 = vpop.f32.mrb[0].mxu0
          %v1548 = vadd.f32 %v711, %v1547
          %v1549 = vpop.f32.mrb[0].mxu0
          %v1550 = vadd.f32 %v715, %v1549
          %v1551 = vpop.f32.mrb[0].mxu0
          %v1552 = vadd.f32 %v711, %v1551
          %v1553 = vpop.f32.mrb[0].mxu0
          %v1554 = vadd.f32 %v715, %v1553
          %1555 = vmatprep.mubr.bf16.mxu0 %v843
          %1556 = vmatmul.mubr.bf16.gmra.mrb[0].mxu0 %v842
          %v1557 = vpop.f32.mrb[0].mxu0
          %v1558 = vadd.f32 %v711, %v1557
          %v1559 = vpop.f32.mrb[0].mxu0
          %v1560 = vadd.f32 %v715, %v1559
          %v1561 = vpop.f32.mrb[0].mxu0
          %v1562 = vadd.f32 %v711, %v1561
          %v1563 = vpop.f32.mrb[0].mxu0
          %v1564 = vadd.f32 %v715, %v1563
          %1565 = vmatprep.mubr.bf16.mxu0 %v845
          %1566 = vmatmul.mubr.bf16.gmra.mrb[0].mxu0 %v844
          %v1567 = vpop.f32.mrb[0].mxu0
          %v1568 = vadd.f32 %v711, %v1567
          %v1569 = vpop.f32.mrb[0].mxu0
          %v1570 = vadd.f32 %v715, %v1569
          %v1571 = vpop.f32.mrb[0].mxu0
          %v1572 = vadd.f32 %v711, %v1571
          %v1573 = vpop.f32.mrb[0].mxu0
          %v1574 = vadd.f32 %v715, %v1573
          %1575 = vmatprep.mubr.bf16.mxu0 %v847
          %1576 = vmatmul.mubr.bf16.gmra.mrb[0].mxu0 %v846
          %v1577 = vpop.f32.mrb[0].mxu0
          %v1578 = vadd.f32 %v711, %v1577
          %v1579 = vpop.f32.mrb[0].mxu0
          %v1580 = vadd.f32 %v715, %v1579
          %v1581 = vpop.f32.mrb[0].mxu0
          %v1582 = vadd.f32 %v711, %v1581
          %v1583 = vpop.f32.mrb[0].mxu0
          %v1584 = vadd.f32 %v715, %v1583
          %1585 = vdwg.mxu0
          %v1586 = vpack.c.bf16 %v1239, %v1235
          %v1587 = vpack.c.bf16 %v1241, %v1237
          %v1588 = vpack.c.bf16 %v1249, %v1245
          %v1589 = vpack.c.bf16 %v1251, %v1247
          %v1590 = vpack.c.bf16 %v1259, %v1255
          %v1591 = vpack.c.bf16 %v1261, %v1257
          %v1592 = vpack.c.bf16 %v1269, %v1265
          %v1593 = vpack.c.bf16 %v1271, %v1267
          %v1594 = vpack.c.bf16 %v1279, %v1275
          %v1595 = vpack.c.bf16 %v1281, %v1277
          %v1596 = vpack.c.bf16 %v1289, %v1285
          %v1597 = vpack.c.bf16 %v1291, %v1287
          %v1598 = vpack.c.bf16 %v1299, %v1295
          %v1599 = vpack.c.bf16 %v1301, %v1297
          %v1600 = vpack.c.bf16 %v1309, %v1305
          %v1601 = vpack.c.bf16 %v1311, %v1307
          %v1602 = vpack.c.bf16 %v1319, %v1315
          %v1603 = vpack.c.bf16 %v1321, %v1317
          %v1604 = vpack.c.bf16 %v1329, %v1325
          %v1605 = vpack.c.bf16 %v1331, %v1327
          %v1606 = vpack.c.bf16 %v1339, %v1335
          %v1607 = vpack.c.bf16 %v1341, %v1337
          %v1608 = vpack.c.bf16 %v1349, %v1345
          %v1609 = vpack.c.bf16 %v1351, %v1347
          %v1610 = vpack.c.bf16 %v1359, %v1355
          %v1611 = vpack.c.bf16 %v1361, %v1357
          %v1612 = vpack.c.bf16 %v1369, %v1365
          %v1613 = vpack.c.bf16 %v1371, %v1367
          %v1614 = vpack.c.bf16 %v1379, %v1375
          %v1615 = vpack.c.bf16 %v1381, %v1377
          %v1616 = vpack.c.bf16 %v1389, %v1385
          %v1617 = vpack.c.bf16 %v1391, %v1387
          %1618 = vst [vmem:[#allocation2] sm:$0xff] %v1586
          %1619 = vst [vmem:[#allocation2 + $0x8] sm:$0xff] %v1587
          %1620 = vst [vmem:[#allocation2 + $0x10] sm:$0xff] %v1588
          %1621 = vst [vmem:[#allocation2 + $0x18] sm:$0xff] %v1589
          %1622 = vst [vmem:[#allocation2 + $0x20] sm:$0xff] %v1590
          %1623 = vst [vmem:[#allocation2 + $0x28] sm:$0xff] %v1591
          %1624 = vst [vmem:[#allocation2 + $0x30] sm:$0xff] %v1592
          %1625 = vst [vmem:[#allocation2 + $0x38] sm:$0xff] %v1593
          %1626 = vst [vmem:[#allocation2 + $0x40] sm:$0xff] %v1594
          %1627 = vst [vmem:[#allocation2 + $0x48] sm:$0xff] %v1595
          %1628 = vst [vmem:[#allocation2 + $0x50] sm:$0xff] %v1596
          %1629 = vst [vmem:[#allocation2 + $0x58] sm:$0xff] %v1597
          %1630 = vst [vmem:[#allocation2 + $0x60] sm:$0xff] %v1598
          %1631 = vst [vmem:[#allocation2 + $0x68] sm:$0xff] %v1599
          %1632 = vst [vmem:[#allocation2 + $0x70] sm:$0xff] %v1600
          %1633 = vst [vmem:[#allocation2 + $0x78] sm:$0xff] %v1601
          %1634 = vst [vmem:[#allocation2 + $0x80] sm:$0xff] %v1602
          %1635 = vst [vmem:[#allocation2 + $0x88] sm:$0xff] %v1603
          %1636 = vst [vmem:[#allocation2 + $0x90] sm:$0xff] %v1604
          %1637 = vst [vmem:[#allocation2 + $0x98] sm:$0xff] %v1605
          %1638 = vst [vmem:[#allocation2 + $0xa0] sm:$0xff] %v1606
          %1639 = vst [vmem:[#allocation2 + $0xa8] sm:$0xff] %v1607
          %1640 = vst [vmem:[#allocation2 + $0xb0] sm:$0xff] %v1608
          %1641 = vst [vmem:[#allocation2 + $0xb8] sm:$0xff] %v1609
          %1642 = vst [vmem:[#allocation2 + $0xc0] sm:$0xff] %v1610
          %1643 = vst [vmem:[#allocation2 + $0xc8] sm:$0xff] %v1611
          %1644 = vst [vmem:[#allocation2 + $0xd0] sm:$0xff] %v1612
          %1645 = vst [vmem:[#allocation2 + $0xd8] sm:$0xff] %v1613
          %1646 = vst [vmem:[#allocation2 + $0xe0] sm:$0xff] %v1614
          %1647 = vst [vmem:[#allocation2 + $0xe8] sm:$0xff] %v1615
          %1648 = vst [vmem:[#allocation2 + $0xf0] sm:$0xff] %v1616
          %1649 = vst [vmem:[#allocation2 + $0xf8] sm:$0xff] %v1617
          %v1650 = vpack.c.bf16 %v1432, %v1428
          %v1651 = vpack.c.bf16 %v1434, %v1430
          %v1652 = vpack.c.bf16 %v1442, %v1438
          %v1653 = vpack.c.bf16 %v1444, %v1440
          %v1654 = vpack.c.bf16 %v1452, %v1448
          %v1655 = vpack.c.bf16 %v1454, %v1450
          %v1656 = vpack.c.bf16 %v1462, %v1458
          %v1657 = vpack.c.bf16 %v1464, %v1460
          %v1658 = vpack.c.bf16 %v1472, %v1468
          %v1659 = vpack.c.bf16 %v1474, %v1470
          %v1660 = vpack.c.bf16 %v1482, %v1478
          %v1661 = vpack.c.bf16 %v1484, %v1480
          %v1662 = vpack.c.bf16 %v1492, %v1488
          %v1663 = vpack.c.bf16 %v1494, %v1490
          %v1664 = vpack.c.bf16 %v1502, %v1498
          %v1665 = vpack.c.bf16 %v1504, %v1500
          %v1666 = vpack.c.bf16 %v1512, %v1508
          %v1667 = vpack.c.bf16 %v1514, %v1510
          %v1668 = vpack.c.bf16 %v1522, %v1518
          %v1669 = vpack.c.bf16 %v1524, %v1520
          %v1670 = vpack.c.bf16 %v1532, %v1528
          %v1671 = vpack.c.bf16 %v1534, %v1530
          %v1672 = vpack.c.bf16 %v1542, %v1538
          %v1673 = vpack.c.bf16 %v1544, %v1540
          %v1674 = vpack.c.bf16 %v1552, %v1548
          %v1675 = vpack.c.bf16 %v1554, %v1550
          %v1676 = vpack.c.bf16 %v1562, %v1558
          %v1677 = vpack.c.bf16 %v1564, %v1560
          %v1678 = vpack.c.bf16 %v1572, %v1568
          %v1679 = vpack.c.bf16 %v1574, %v1570
          %v1680 = vpack.c.bf16 %v1582, %v1578
          %v1681 = vpack.c.bf16 %v1584, %v1580
          %1682 = vst [vmem:[#allocation3] sm:$0xff] %v1650
          %1683 = vst [vmem:[#allocation3 + $0x8] sm:$0xff] %v1651
          %1684 = vst [vmem:[#allocation3 + $0x10] sm:$0xff] %v1652
          %1685 = vst [vmem:[#allocation3 + $0x18] sm:$0xff] %v1653
          %1686 = vst [vmem:[#allocation3 + $0x20] sm:$0xff] %v1654
          %1687 = vst [vmem:[#allocation3 + $0x28] sm:$0xff] %v1655
          %1688 = vst [vmem:[#allocation3 + $0x30] sm:$0xff] %v1656
          %1689 = vst [vmem:[#allocation3 + $0x38] sm:$0xff] %v1657
          %1690 = vst [vmem:[#allocation3 + $0x40] sm:$0xff] %v1658
          %1691 = vst [vmem:[#allocation3 + $0x48] sm:$0xff] %v1659
          %1692 = vst [vmem:[#allocation3 + $0x50] sm:$0xff] %v1660
          %1693 = vst [vmem:[#allocation3 + $0x58] sm:$0xff] %v1661
          %1694 = vst [vmem:[#allocation3 + $0x60] sm:$0xff] %v1662
          %1695 = vst [vmem:[#allocation3 + $0x68] sm:$0xff] %v1663
          %1696 = vst [vmem:[#allocation3 + $0x70] sm:$0xff] %v1664
          %1697 = vst [vmem:[#allocation3 + $0x78] sm:$0xff] %v1665
          %1698 = vst [vmem:[#allocation3 + $0x80] sm:$0xff] %v1666
          %1699 = vst [vmem:[#allocation3 + $0x88] sm:$0xff] %v1667
          %1700 = vst [vmem:[#allocation3 + $0x90] sm:$0xff] %v1668
          %1701 = vst [vmem:[#allocation3 + $0x98] sm:$0xff] %v1669
          %1702 = vst [vmem:[#allocation3 + $0xa0] sm:$0xff] %v1670
          %1703 = vst [vmem:[#allocation3 + $0xa8] sm:$0xff] %v1671
          %1704 = vst [vmem:[#allocation3 + $0xb0] sm:$0xff] %v1672
          %1705 = vst [vmem:[#allocation3 + $0xb8] sm:$0xff] %v1673
          %1706 = vst [vmem:[#allocation3 + $0xc0] sm:$0xff] %v1674
          %1707 = vst [vmem:[#allocation3 + $0xc8] sm:$0xff] %v1675
          %1708 = vst [vmem:[#allocation3 + $0xd0] sm:$0xff] %v1676
          %1709 = vst [vmem:[#allocation3 + $0xd8] sm:$0xff] %v1677
          %1710 = vst [vmem:[#allocation3 + $0xe0] sm:$0xff] %v1678
          %1711 = vst [vmem:[#allocation3 + $0xe8] sm:$0xff] %v1679
          %1712 = vst [vmem:[#allocation3 + $0xf0] sm:$0xff] %v1680
          %1713 = vst [vmem:[#allocation3 + $0xf8] sm:$0xff] %v1681
        $region104: #{tpu_custom_call.1} parent=75 // pred_fallthru
          _
        %s1714 = smul.u32 %s41, 128
        %s1715 = sshra.s32 %s1714, 3
        %s1716 = sand.u32 %s1714, 7
        %s1717 = smul.u32 %s1715, 2
        %s1718 = smul.addr %s1717, 4
        %s1719 = scalar_lea.vmem %s521, %s1718 [#allocation5]
        %v1720 = vld [vmem:[%s1719] sm:$0xff]
        %v1721 = vld [vmem:[%s1719 + $0x8] sm:$0xff]
        %v1722 = vld [vmem:[%s1719 + $0x10] sm:$0xff]
        %v1723 = vld [vmem:[%s1719 + $0x18] sm:$0xff]
        %v1724 = vld [vmem:[%s1719 + $0x20] sm:$0xff]
        %v1725 = vld [vmem:[%s1719 + $0x28] sm:$0xff]
        %v1726 = vld [vmem:[%s1719 + $0x30] sm:$0xff]
        %v1727 = vld [vmem:[%s1719 + $0x38] sm:$0xff]
        %v1728 = vld [vmem:[%s1719 + $0x40] sm:$0xff]
        %v1729 = vld [vmem:[%s1719 + $0x48] sm:$0xff]
        %v1730 = vld [vmem:[%s1719 + $0x50] sm:$0xff]
        %v1731 = vld [vmem:[%s1719 + $0x58] sm:$0xff]
        %v1732 = vld [vmem:[%s1719 + $0x60] sm:$0xff]
        %v1733 = vld [vmem:[%s1719 + $0x68] sm:$0xff]
        %v1734 = vld [vmem:[%s1719 + $0x70] sm:$0xff]
        %v1735 = vld [vmem:[%s1719 + $0x78] sm:$0xff]
        %v1736 = vunpack.c.l.bf16 %v1720
        %v1737 = vunpack.c.h.bf16 %v1720
        %v1738 = vunpack.c.l.bf16 %v1721
        %v1739 = vunpack.c.h.bf16 %v1721
        %v1740 = vunpack.c.l.bf16 %v1722
        %v1741 = vunpack.c.h.bf16 %v1722
        %v1742 = vunpack.c.l.bf16 %v1723
        %v1743 = vunpack.c.h.bf16 %v1723
        %v1744 = vunpack.c.l.bf16 %v1724
        %v1745 = vunpack.c.h.bf16 %v1724
        %v1746 = vunpack.c.l.bf16 %v1725
        %v1747 = vunpack.c.h.bf16 %v1725
        %v1748 = vunpack.c.l.bf16 %v1726
        %v1749 = vunpack.c.h.bf16 %v1726
        %v1750 = vunpack.c.l.bf16 %v1727
        %v1751 = vunpack.c.h.bf16 %v1727
        %v1752 = vunpack.c.l.bf16 %v1728
        %v1753 = vunpack.c.h.bf16 %v1728
        %v1754 = vunpack.c.l.bf16 %v1729
        %v1755 = vunpack.c.h.bf16 %v1729
        %v1756 = vunpack.c.l.bf16 %v1730
        %v1757 = vunpack.c.h.bf16 %v1730
        %v1758 = vunpack.c.l.bf16 %v1731
        %v1759 = vunpack.c.h.bf16 %v1731
        %v1760 = vunpack.c.l.bf16 %v1732
        %v1761 = vunpack.c.h.bf16 %v1732
        %v1762 = vunpack.c.l.bf16 %v1733
        %v1763 = vunpack.c.h.bf16 %v1733
        %v1764 = vunpack.c.l.bf16 %v1734
        %v1765 = vunpack.c.h.bf16 %v1734
        %v1766 = vunpack.c.l.bf16 %v1735
        %v1767 = vunpack.c.h.bf16 %v1735
        %v1768 = vld [vmem:[%s530] sm:$0x3]
        %v1769 = vld [vmem:[#allocation10] sm:$0xff]
        %v1770 = vld [vmem:[#allocation10 + $0x18] sm:$0xff]
        %v1771 = vld [vmem:[#allocation10 + $0x30] sm:$0xff]
        %v1772 = vld [vmem:[#allocation10 + $0x48] sm:$0xff]
        %v1773 = vld [vmem:[#allocation10 + $0x60] sm:$0xff]
        %v1774 = vld [vmem:[#allocation10 + $0x78] sm:$0xff]
        %v1775 = vld [vmem:[#allocation10 + $0x90] sm:$0xff]
        %v1776 = vld [vmem:[#allocation10 + $0xa8] sm:$0xff]
        %v1777 = vld [vmem:[#allocation10 + $0xc0] sm:$0xff]
        %v1778 = vld [vmem:[#allocation10 + $0xd8] sm:$0xff]
        %v1779 = vld [vmem:[#allocation10 + $0xf0] sm:$0xff]
        %v1780 = vld [vmem:[#allocation10 + $0x108] sm:$0xff]
        %v1781 = vld [vmem:[#allocation10 + $0x120] sm:$0xff]
        %v1782 = vld [vmem:[#allocation10 + $0x138] sm:$0xff]
        %v1783 = vld [vmem:[#allocation10 + $0x150] sm:$0xff]
        %v1784 = vld [vmem:[#allocation10 + $0x168] sm:$0xff]
        %v1785 = vld [vmem:[#allocation10 + $0x180] sm:$0xff]
        %v1786 = vld [vmem:[#allocation10 + $0x198] sm:$0xff]
        %v1787 = vld [vmem:[#allocation10 + $0x1b0] sm:$0xff]
        %v1788 = vld [vmem:[#allocation10 + $0x1c8] sm:$0xff]
        %v1789 = vld [vmem:[#allocation10 + $0x1e0] sm:$0xff]
        %v1790 = vld [vmem:[#allocation10 + $0x1f8] sm:$0xff]
        %v1791 = vld [vmem:[#allocation10 + $0x210] sm:$0xff]
        %v1792 = vld [vmem:[#allocation10 + $0x228] sm:$0xff]
        %v1793 = vld [vmem:[#allocation10 + $0x240] sm:$0xff]
        %v1794 = vld [vmem:[#allocation10 + $0x258] sm:$0xff]
        %v1795 = vld [vmem:[#allocation10 + $0x270] sm:$0xff]
        %v1796 = vld [vmem:[#allocation10 + $0x288] sm:$0xff]
        %v1797 = vld [vmem:[#allocation10 + $0x2a0] sm:$0xff]
        %v1798 = vld [vmem:[#allocation10 + $0x2b8] sm:$0xff]
        %v1799 = vld [vmem:[#allocation10 + $0x2d0] sm:$0xff]
        %v1800 = vld [vmem:[#allocation10 + $0x2e8] sm:$0xff]
        %v1801 = vld [vmem:[%s3] sm:$0x3]
        %v1803 = vlaneseq
        %v1804 = vshrl.u32 %v1803, 7
        %v1805 = vsub.s32 0, %v1804
        %v1806 = vrot.slane %v1801, %v1805
        %v1807 = vlaneseq
        %v1808 = vshrl.u32 %v1807, 7
        %v1809 = vsub.s32 1, %v1808
        %v1810 = vrot.slane %v1801, %v1809
        %v1829 = vunpack.c.l.b16 %v1720
        %v1830 = vunpack.c.h.b16 %v1720
        %v1831 = vunpack.c.l.b16 %v1721
        %v1832 = vunpack.c.h.b16 %v1721
        %v1833 = vunpack.c.l.b16 %v1722
        %v1834 = vunpack.c.h.b16 %v1722
        %v1835 = vunpack.c.l.b16 %v1723
        %v1836 = vunpack.c.h.b16 %v1723
        %v1837 = vunpack.c.l.b16 %v1724
        %v1838 = vunpack.c.h.b16 %v1724
        %v1839 = vunpack.c.l.b16 %v1725
        %v1840 = vunpack.c.h.b16 %v1725
        %v1841 = vunpack.c.l.b16 %v1726
        %v1842 = vunpack.c.h.b16 %v1726
        %v1843 = vunpack.c.l.b16 %v1727
        %v1844 = vunpack.c.h.b16 %v1727
        %v1845 = vunpack.c.l.b16 %v1728
        %v1846 = vunpack.c.h.b16 %v1728
        %v1847 = vunpack.c.l.b16 %v1729
        %v1848 = vunpack.c.h.b16 %v1729
        %v1849 = vunpack.c.l.b16 %v1730
        %v1850 = vunpack.c.h.b16 %v1730
        %v1851 = vunpack.c.l.b16 %v1731
        %v1852 = vunpack.c.h.b16 %v1731
        %v1853 = vunpack.c.l.b16 %v1732
        %v1854 = vunpack.c.h.b16 %v1732
        %v1855 = vunpack.c.l.b16 %v1733
        %v1856 = vunpack.c.h.b16 %v1733
        %v1857 = vunpack.c.l.b16 %v1734
        %v1858 = vunpack.c.h.b16 %v1734
        %v1859 = vunpack.c.l.b16 %v1735
        %v1860 = vunpack.c.h.b16 %v1735
        %v1861 = vpack.c.b16 %v1831, %v1829
        %v1862 = vpack.c.b16 %v1832, %v1830
        %v1863 = vpack.c.b16 %v1835, %v1833
        %v1864 = vpack.c.b16 %v1836, %v1834
        %v1865 = vpack.c.b16 %v1839, %v1837
        %v1866 = vpack.c.b16 %v1840, %v1838
        %v1867 = vpack.c.b16 %v1843, %v1841
        %v1868 = vpack.c.b16 %v1844, %v1842
        %v1869 = vpack.c.b16 %v1847, %v1845
        %v1870 = vpack.c.b16 %v1848, %v1846
        %v1871 = vpack.c.b16 %v1851, %v1849
        %v1872 = vpack.c.b16 %v1852, %v1850
        %v1873 = vpack.c.b16 %v1855, %v1853
        %v1874 = vpack.c.b16 %v1856, %v1854
        %v1875 = vpack.c.b16 %v1859, %v1857
        %v1876 = vpack.c.b16 %v1860, %v1858
        %v1925 = vunpack.c.l.b16 %v1769
        %v1926 = vunpack.c.h.b16 %v1769
        %v1927 = vunpack.c.l.b16 %v1770
        %v1928 = vunpack.c.h.b16 %v1770
        %v1929 = vunpack.c.l.b16 %v1771
        %v1930 = vunpack.c.h.b16 %v1771
        %v1931 = vunpack.c.l.b16 %v1772
        %v1932 = vunpack.c.h.b16 %v1772
        %v1933 = vunpack.c.l.b16 %v1773
        %v1934 = vunpack.c.h.b16 %v1773
        %v1935 = vunpack.c.l.b16 %v1774
        %v1936 = vunpack.c.h.b16 %v1774
        %v1937 = vunpack.c.l.b16 %v1775
        %v1938 = vunpack.c.h.b16 %v1775
        %v1939 = vunpack.c.l.b16 %v1776
        %v1940 = vunpack.c.h.b16 %v1776
        %v1941 = vunpack.c.l.b16 %v1777
        %v1942 = vunpack.c.h.b16 %v1777
        %v1943 = vunpack.c.l.b16 %v1778
        %v1944 = vunpack.c.h.b16 %v1778
        %v1945 = vunpack.c.l.b16 %v1779
        %v1946 = vunpack.c.h.b16 %v1779
        %v1947 = vunpack.c.l.b16 %v1780
        %v1948 = vunpack.c.h.b16 %v1780
        %v1949 = vunpack.c.l.b16 %v1781
        %v1950 = vunpack.c.h.b16 %v1781
        %v1951 = vunpack.c.l.b16 %v1782
        %v1952 = vunpack.c.h.b16 %v1782
        %v1953 = vunpack.c.l.b16 %v1783
        %v1954 = vunpack.c.h.b16 %v1783
        %v1955 = vunpack.c.l.b16 %v1784
        %v1956 = vunpack.c.h.b16 %v1784
        %v1957 = vunpack.c.l.b16 %v1785
        %v1958 = vunpack.c.h.b16 %v1785
        %v1959 = vunpack.c.l.b16 %v1786
        %v1960 = vunpack.c.h.b16 %v1786
        %v1961 = vunpack.c.l.b16 %v1787
        %v1962 = vunpack.c.h.b16 %v1787
        %v1963 = vunpack.c.l.b16 %v1788
        %v1964 = vunpack.c.h.b16 %v1788
        %v1965 = vunpack.c.l.b16 %v1789
        %v1966 = vunpack.c.h.b16 %v1789
        %v1967 = vunpack.c.l.b16 %v1790
        %v1968 = vunpack.c.h.b16 %v1790
        %v1969 = vunpack.c.l.b16 %v1791
        %v1970 = vunpack.c.h.b16 %v1791
        %v1971 = vunpack.c.l.b16 %v1792
        %v1972 = vunpack.c.h.b16 %v1792
        %v1973 = vunpack.c.l.b16 %v1793
        %v1974 = vunpack.c.h.b16 %v1793
        %v1975 = vunpack.c.l.b16 %v1794
        %v1976 = vunpack.c.h.b16 %v1794
        %v1977 = vunpack.c.l.b16 %v1795
        %v1978 = vunpack.c.h.b16 %v1795
        %v1979 = vunpack.c.l.b16 %v1796
        %v1980 = vunpack.c.h.b16 %v1796
        %v1981 = vunpack.c.l.b16 %v1797
        %v1982 = vunpack.c.h.b16 %v1797
        %v1983 = vunpack.c.l.b16 %v1798
        %v1984 = vunpack.c.h.b16 %v1798
        %v1985 = vunpack.c.l.b16 %v1799
        %v1986 = vunpack.c.h.b16 %v1799
        %v1987 = vunpack.c.l.b16 %v1800
        %v1988 = vunpack.c.h.b16 %v1800
        %v1989 = vpack.c.b16 %v1927, %v1925
        %v1990 = vpack.c.b16 %v1928, %v1926
        %v1991 = vpack.c.b16 %v1931, %v1929
        %v1992 = vpack.c.b16 %v1932, %v1930
        %v1993 = vpack.c.b16 %v1935, %v1933
        %v1994 = vpack.c.b16 %v1936, %v1934
        %v1995 = vpack.c.b16 %v1939, %v1937
        %v1996 = vpack.c.b16 %v1940, %v1938
        %v1997 = vpack.c.b16 %v1943, %v1941
        %v1998 = vpack.c.b16 %v1944, %v1942
        %v1999 = vpack.c.b16 %v1947, %v1945
        %v2000 = vpack.c.b16 %v1948, %v1946
        %v2001 = vpack.c.b16 %v1951, %v1949
        %v2002 = vpack.c.b16 %v1952, %v1950
        %v2003 = vpack.c.b16 %v1955, %v1953
        %v2004 = vpack.c.b16 %v1956, %v1954
        %v2005 = vpack.c.b16 %v1959, %v1957
        %v2006 = vpack.c.b16 %v1960, %v1958
        %v2007 = vpack.c.b16 %v1963, %v1961
        %v2008 = vpack.c.b16 %v1964, %v1962
        %v2009 = vpack.c.b16 %v1967, %v1965
        %v2010 = vpack.c.b16 %v1968, %v1966
        %v2011 = vpack.c.b16 %v1971, %v1969
        %v2012 = vpack.c.b16 %v1972, %v1970
        %v2013 = vpack.c.b16 %v1975, %v1973
        %v2014 = vpack.c.b16 %v1976, %v1974
        %v2015 = vpack.c.b16 %v1979, %v1977
        %v2016 = vpack.c.b16 %v1980, %v1978
        %v2017 = vpack.c.b16 %v1983, %v1981
        %v2018 = vpack.c.b16 %v1984, %v1982
        %v2019 = vpack.c.b16 %v1987, %v1985
        %v2020 = vpack.c.b16 %v1988, %v1986
        %2053 = vmatprep.subr.bf16.mxu0 %v1990
        %2054 = vmatpush1.bf16.msra.mxu0 %v1989
        %2055 = vmatprep.subr.bf16.mxu0 %v1992
        %2056 = vmatpush1.bf16.msra.mxu0 %v1991
        %2057 = vmatprep.subr.bf16.mxu0 %v1994
        %2058 = vmatpush1.bf16.msra.mxu0 %v1993
        %2059 = vmatprep.subr.bf16.mxu0 %v1996
        %2060 = vmatpush1.bf16.msra.mxu0 %v1995
        %2061 = vmatprep.subr.bf16.mxu0 %v1998
        %2062 = vmatpush1.bf16.msra.mxu0 %v1997
        %2063 = vmatprep.subr.bf16.mxu0 %v2000
        %2064 = vmatpush1.bf16.msra.mxu0 %v1999
        %2065 = vmatprep.subr.bf16.mxu0 %v2002
        %2066 = vmatpush1.bf16.msra.mxu0 %v2001
        %2067 = vmatprep.subr.bf16.mxu0 %v2004
        %2068 = vmatpush1.bf16.msra.mxu0 %v2003
        %2069 = vmatprep.subr.bf16.mxu0 %v2006
        %2070 = vmatpush1.bf16.msra.mxu0 %v2005
        %2071 = vmatprep.subr.bf16.mxu0 %v2008
        %2072 = vmatpush1.bf16.msra.mxu0 %v2007
        %2073 = vmatprep.subr.bf16.mxu0 %v2010
        %2074 = vmatpush1.bf16.msra.mxu0 %v2009
        %2075 = vmatprep.subr.bf16.mxu0 %v2012
        %2076 = vmatpush1.bf16.msra.mxu0 %v2011
        %2077 = vmatprep.subr.bf16.mxu0 %v2014
        %2078 = vmatpush1.bf16.msra.mxu0 %v2013
        %2079 = vmatprep.subr.bf16.mxu0 %v2016
        %2080 = vmatpush1.bf16.msra.mxu0 %v2015
        %2081 = vmatprep.subr.bf16.mxu0 %v2018
        %2082 = vmatpush1.bf16.msra.mxu0 %v2017
        %2083 = vmatprep.subr.bf16.mxu0 %v2020
        %2084 = vmatpush1.bf16.msra.mxu0 %v2019
        %2085 = vmatprep.mubr.bf16.mxu0 %v1862
        %2086 = vmatmul.mubr.bf16.gmra.mrb[0].mxu0 %v1861
        %v2087 = vpop.f32.mrb[0].mxu0
        %v2088 = vadd.f32 %v1806, %v2087
        %v2089 = vpop.f32.mrb[0].mxu0
        %v2090 = vadd.f32 %v1810, %v2089
        %v2091 = vpop.f32.mrb[0].mxu0
        %v2092 = vadd.f32 %v1806, %v2091
        %v2093 = vpop.f32.mrb[0].mxu0
        %v2094 = vadd.f32 %v1810, %v2093
        %2095 = vmatprep.mubr.bf16.mxu0 %v1864
        %2096 = vmatmul.mubr.bf16.gmra.mrb[0].mxu0 %v1863
        %v2097 = vpop.f32.mrb[0].mxu0
        %v2098 = vadd.f32 %v1806, %v2097
        %v2099 = vpop.f32.mrb[0].mxu0
        %v2100 = vadd.f32 %v1810, %v2099
        %v2101 = vpop.f32.mrb[0].mxu0
        %v2102 = vadd.f32 %v1806, %v2101
        %v2103 = vpop.f32.mrb[0].mxu0
        %v2104 = vadd.f32 %v1810, %v2103
        %2105 = vmatprep.mubr.bf16.mxu0 %v1866
        %2106 = vmatmul.mubr.bf16.gmra.mrb[0].mxu0 %v1865
        %v2107 = vpop.f32.mrb[0].mxu0
        %v2108 = vadd.f32 %v1806, %v2107
        %v2109 = vpop.f32.mrb[0].mxu0
        %v2110 = vadd.f32 %v1810, %v2109
        %v2111 = vpop.f32.mrb[0].mxu0
        %v2112 = vadd.f32 %v1806, %v2111
        %v2113 = vpop.f32.mrb[0].mxu0
        %v2114 = vadd.f32 %v1810, %v2113
        %2115 = vmatprep.mubr.bf16.mxu0 %v1868
        %2116 = vmatmul.mubr.bf16.gmra.mrb[0].mxu0 %v1867
        %v2117 = vpop.f32.mrb[0].mxu0
        %v2118 = vadd.f32 %v1806, %v2117
        %v2119 = vpop.f32.mrb[0].mxu0
        %v2120 = vadd.f32 %v1810, %v2119
        %v2121 = vpop.f32.mrb[0].mxu0
        %v2122 = vadd.f32 %v1806, %v2121
        %v2123 = vpop.f32.mrb[0].mxu0
        %v2124 = vadd.f32 %v1810, %v2123
        %2125 = vmatprep.mubr.bf16.mxu0 %v1870
        %2126 = vmatmul.mubr.bf16.gmra.mrb[0].mxu0 %v1869
        %v2127 = vpop.f32.mrb[0].mxu0
        %v2128 = vadd.f32 %v1806, %v2127
        %v2129 = vpop.f32.mrb[0].mxu0
        %v2130 = vadd.f32 %v1810, %v2129
        %v2131 = vpop.f32.mrb[0].mxu0
        %v2132 = vadd.f32 %v1806, %v2131
        %v2133 = vpop.f32.mrb[0].mxu0
        %v2134 = vadd.f32 %v1810, %v2133
        %2135 = vmatprep.mubr.bf16.mxu0 %v1872
        %2136 = vmatmul.mubr.bf16.gmra.mrb[0].mxu0 %v1871
        %v2137 = vpop.f32.mrb[0].mxu0
        %v2138 = vadd.f32 %v1806, %v2137
        %v2139 = vpop.f32.mrb[0].mxu0
        %v2140 = vadd.f32 %v1810, %v2139
        %v2141 = vpop.f32.mrb[0].mxu0
        %v2142 = vadd.f32 %v1806, %v2141
        %v2143 = vpop.f32.mrb[0].mxu0
        %v2144 = vadd.f32 %v1810, %v2143
        %2145 = vmatprep.mubr.bf16.mxu0 %v1874
        %2146 = vmatmul.mubr.bf16.gmra.mrb[0].mxu0 %v1873
        %v2147 = vpop.f32.mrb[0].mxu0
        %v2148 = vadd.f32 %v1806, %v2147
        %v2149 = vpop.f32.mrb[0].mxu0
        %v2150 = vadd.f32 %v1810, %v2149
        %v2151 = vpop.f32.mrb[0].mxu0
        %v2152 = vadd.f32 %v1806, %v2151
        %v2153 = vpop.f32.mrb[0].mxu0
        %v2154 = vadd.f32 %v1810, %v2153
        %2155 = vmatprep.mubr.bf16.mxu0 %v1876
        %2156 = vmatmul.mubr.bf16.gmra.mrb[0].mxu0 %v1875
        %v2157 = vpop.f32.mrb[0].mxu0
        %v2158 = vadd.f32 %v1806, %v2157
        %v2159 = vpop.f32.mrb[0].mxu0
        %v2160 = vadd.f32 %v1810, %v2159
        %v2161 = vpop.f32.mrb[0].mxu0
        %v2162 = vadd.f32 %v1806, %v2161
        %v2163 = vpop.f32.mrb[0].mxu0
        %v2164 = vadd.f32 %v1810, %v2163
        %2165 = vdwg.mxu0
        %v2166 = vmul.f32 %v2088, 0.088388346
        %v2167 = vmul.f32 %v2090, 0.088388346
        %v2168 = vmul.f32 %v2092, 0.088388346
        %v2169 = vmul.f32 %v2094, 0.088388346
        %v2170 = vmul.f32 %v2098, 0.088388346
        %v2171 = vmul.f32 %v2100, 0.088388346
        %v2172 = vmul.f32 %v2102, 0.088388346
        %v2173 = vmul.f32 %v2104, 0.088388346
        %v2174 = vmul.f32 %v2108, 0.088388346
        %v2175 = vmul.f32 %v2110, 0.088388346
        %v2176 = vmul.f32 %v2112, 0.088388346
        %v2177 = vmul.f32 %v2114, 0.088388346
        %v2178 = vmul.f32 %v2118, 0.088388346
        %v2179 = vmul.f32 %v2120, 0.088388346
        %v2180 = vmul.f32 %v2122, 0.088388346
        %v2181 = vmul.f32 %v2124, 0.088388346
        %v2182 = vmul.f32 %v2128, 0.088388346
        %v2183 = vmul.f32 %v2130, 0.088388346
        %v2184 = vmul.f32 %v2132, 0.088388346
        %v2185 = vmul.f32 %v2134, 0.088388346
        %v2186 = vmul.f32 %v2138, 0.088388346
        %v2187 = vmul.f32 %v2140, 0.088388346
        %v2188 = vmul.f32 %v2142, 0.088388346
        %v2189 = vmul.f32 %v2144, 0.088388346
        %v2190 = vmul.f32 %v2148, 0.088388346
        %v2191 = vmul.f32 %v2150, 0.088388346
        %v2192 = vmul.f32 %v2152, 0.088388346
        %v2193 = vmul.f32 %v2154, 0.088388346
        %v2194 = vmul.f32 %v2158, 0.088388346
        %v2195 = vmul.f32 %v2160, 0.088388346
        %v2196 = vmul.f32 %v2162, 0.088388346
        %v2197 = vmul.f32 %v2164, 0.088388346
        %v2198 = vpack.c.bf16 %v2168, %v2166
        %v2199 = vpack.c.bf16 %v2169, %v2167
        %v2200 = vpack.c.bf16 %v2172, %v2170
        %v2201 = vpack.c.bf16 %v2173, %v2171
        %v2202 = vpack.c.bf16 %v2176, %v2174
        %v2203 = vpack.c.bf16 %v2177, %v2175
        %v2204 = vpack.c.bf16 %v2180, %v2178
        %v2205 = vpack.c.bf16 %v2181, %v2179
        %v2206 = vpack.c.bf16 %v2184, %v2182
        %v2207 = vpack.c.bf16 %v2185, %v2183
        %v2208 = vpack.c.bf16 %v2188, %v2186
        %v2209 = vpack.c.bf16 %v2189, %v2187
        %v2210 = vpack.c.bf16 %v2192, %v2190
        %v2211 = vpack.c.bf16 %v2193, %v2191
        %v2212 = vpack.c.bf16 %v2196, %v2194
        %v2213 = vpack.c.bf16 %v2197, %v2195
        %v2214 = vld [vmem:[#allocation2] sm:$0xff]
        %v2215 = vld [vmem:[#allocation2 + $0x10] sm:$0xff]
        %v2216 = vld [vmem:[#allocation2 + $0x20] sm:$0xff]
        %v2217 = vld [vmem:[#allocation2 + $0x30] sm:$0xff]
        %v2218 = vld [vmem:[#allocation2 + $0x40] sm:$0xff]
        %v2219 = vld [vmem:[#allocation2 + $0x50] sm:$0xff]
        %v2220 = vld [vmem:[#allocation2 + $0x60] sm:$0xff]
        %v2221 = vld [vmem:[#allocation2 + $0x70] sm:$0xff]
        %v2222 = vld [vmem:[#allocation2 + $0x80] sm:$0xff]
        %v2223 = vld [vmem:[#allocation2 + $0x90] sm:$0xff]
        %v2224 = vld [vmem:[#allocation2 + $0xa0] sm:$0xff]
        %v2225 = vld [vmem:[#allocation2 + $0xb0] sm:$0xff]
        %v2226 = vld [vmem:[#allocation2 + $0xc0] sm:$0xff]
        %v2227 = vld [vmem:[#allocation2 + $0xd0] sm:$0xff]
        %v2228 = vld [vmem:[#allocation2 + $0xe0] sm:$0xff]
        %v2229 = vld [vmem:[#allocation2 + $0xf0] sm:$0xff]
        %v2231 = vlaneseq
        %v2232 = vshrl.u32 %v2231, 7
        %v2233 = vsub.s32 0, %v2232
        %v2234 = vrot.slane %v1768, %v2233
        %v2235 = vlaneseq
        %v2236 = vshrl.u32 %v2235, 7
        %v2237 = vsub.s32 1, %v2236
        %v2238 = vrot.slane %v1768, %v2237
        %2241 = vmatprep.subr.bf16.mxu0 0
        %2242 = vmatpush1.bf16.xpose.msra.mxu0 %v2214
        %2243 = vmatprep.subr.bf16.mxu0 0
        %2244 = vmatpush1.bf16.xpose.msra.mxu0 %v2215
        %2245 = vmatprep.subr.bf16.mxu0 0
        %2246 = vmatpush1.bf16.xpose.msra.mxu0 %v2216
        %2247 = vmatprep.subr.bf16.mxu0 0
        %2248 = vmatpush1.bf16.xpose.msra.mxu0 %v2217
        %2249 = vmatprep.subr.bf16.mxu0 0
        %2250 = vmatpush1.bf16.xpose.msra.mxu0 %v2218
        %2251 = vmatprep.subr.bf16.mxu0 0
        %2252 = vmatpush1.bf16.xpose.msra.mxu0 %v2219
        %2253 = vmatprep.subr.bf16.mxu0 0
        %2254 = vmatpush1.bf16.xpose.msra.mxu0 %v2220
        %2255 = vmatprep.subr.bf16.mxu0 0
        %2256 = vmatpush1.bf16.xpose.msra.mxu0 %v2221
        %2257 = vmatprep.subr.bf16.mxu0 0
        %2258 = vmatpush1.bf16.xpose.msra.mxu0 %v2222
        %2259 = vmatprep.subr.bf16.mxu0 0
        %2260 = vmatpush1.bf16.xpose.msra.mxu0 %v2223
        %2261 = vmatprep.subr.bf16.mxu0 0
        %2262 = vmatpush1.bf16.xpose.msra.mxu0 %v2224
        %2263 = vmatprep.subr.bf16.mxu0 0
        %2264 = vmatpush1.bf16.xpose.msra.mxu0 %v2225
        %2265 = vmatprep.subr.bf16.mxu0 0
        %2266 = vmatpush1.bf16.xpose.msra.mxu0 %v2226
        %2267 = vmatprep.subr.bf16.mxu0 0
        %2268 = vmatpush1.bf16.xpose.msra.mxu0 %v2227
        %2269 = vmatprep.subr.bf16.mxu0 0
        %2270 = vmatpush1.bf16.xpose.msra.mxu0 %v2228
        %2271 = vmatprep.subr.bf16.mxu0 0
        %2272 = vmatpush1.bf16.xpose.msra.mxu0 %v2229
        %2273 = vmatprep.mubr.bf16.mxu0 0
        %2274 = vmatmul.mubr.bf16.gmra.mrb[0].mxu0 %v2198
        %v2275 = vpop.f32.mrb[0].mxu0
        %v2276 = vadd.f32 %v2234, %v2275
        %v2277 = vpop.f32.mrb[0].mxu0
        %v2278 = vadd.f32 %v2238, %v2277
        %v2279 = vpop.f32.mrb[0].mxu0
        %v2280 = vadd.f32 %v2234, %v2279
        %v2281 = vpop.f32.mrb[0].mxu0
        %v2282 = vadd.f32 %v2238, %v2281
        %2283 = vmatprep.mubr.bf16.mxu0 0
        %2284 = vmatmul.mubr.bf16.gmra.mrb[0].mxu0 %v2200
        %v2285 = vpop.f32.mrb[0].mxu0
        %v2286 = vadd.f32 %v2234, %v2285
        %v2287 = vpop.f32.mrb[0].mxu0
        %v2288 = vadd.f32 %v2238, %v2287
        %v2289 = vpop.f32.mrb[0].mxu0
        %v2290 = vadd.f32 %v2234, %v2289
        %v2291 = vpop.f32.mrb[0].mxu0
        %v2292 = vadd.f32 %v2238, %v2291
        %2293 = vmatprep.mubr.bf16.mxu0 0
        %2294 = vmatmul.mubr.bf16.gmra.mrb[0].mxu0 %v2202
        %v2295 = vpop.f32.mrb[0].mxu0
        %v2296 = vadd.f32 %v2234, %v2295
        %v2297 = vpop.f32.mrb[0].mxu0
        %v2298 = vadd.f32 %v2238, %v2297
        %v2299 = vpop.f32.mrb[0].mxu0
        %v2300 = vadd.f32 %v2234, %v2299
        %v2301 = vpop.f32.mrb[0].mxu0
        %v2302 = vadd.f32 %v2238, %v2301
        %2303 = vmatprep.mubr.bf16.mxu0 0
        %2304 = vmatmul.mubr.bf16.gmra.mrb[0].mxu0 %v2204
        %v2305 = vpop.f32.mrb[0].mxu0
        %v2306 = vadd.f32 %v2234, %v2305
        %v2307 = vpop.f32.mrb[0].mxu0
        %v2308 = vadd.f32 %v2238, %v2307
        %v2309 = vpop.f32.mrb[0].mxu0
        %v2310 = vadd.f32 %v2234, %v2309
        %v2311 = vpop.f32.mrb[0].mxu0
        %v2312 = vadd.f32 %v2238, %v2311
        %2313 = vmatprep.mubr.bf16.mxu0 0
        %2314 = vmatmul.mubr.bf16.gmra.mrb[0].mxu0 %v2206
        %v2315 = vpop.f32.mrb[0].mxu0
        %v2316 = vadd.f32 %v2234, %v2315
        %v2317 = vpop.f32.mrb[0].mxu0
        %v2318 = vadd.f32 %v2238, %v2317
        %v2319 = vpop.f32.mrb[0].mxu0
        %v2320 = vadd.f32 %v2234, %v2319
        %v2321 = vpop.f32.mrb[0].mxu0
        %v2322 = vadd.f32 %v2238, %v2321
        %2323 = vmatprep.mubr.bf16.mxu0 0
        %2324 = vmatmul.mubr.bf16.gmra.mrb[0].mxu0 %v2208
        %v2325 = vpop.f32.mrb[0].mxu0
        %v2326 = vadd.f32 %v2234, %v2325
        %v2327 = vpop.f32.mrb[0].mxu0
        %v2328 = vadd.f32 %v2238, %v2327
        %v2329 = vpop.f32.mrb[0].mxu0
        %v2330 = vadd.f32 %v2234, %v2329
        %v2331 = vpop.f32.mrb[0].mxu0
        %v2332 = vadd.f32 %v2238, %v2331
        %2333 = vmatprep.mubr.bf16.mxu0 0
        %2334 = vmatmul.mubr.bf16.gmra.mrb[0].mxu0 %v2210
        %v2335 = vpop.f32.mrb[0].mxu0
        %v2336 = vadd.f32 %v2234, %v2335
        %v2337 = vpop.f32.mrb[0].mxu0
        %v2338 = vadd.f32 %v2238, %v2337
        %v2339 = vpop.f32.mrb[0].mxu0
        %v2340 = vadd.f32 %v2234, %v2339
        %v2341 = vpop.f32.mrb[0].mxu0
        %v2342 = vadd.f32 %v2238, %v2341
        %2343 = vmatprep.mubr.bf16.mxu0 0
        %2344 = vmatmul.mubr.bf16.gmra.mrb[0].mxu0 %v2212
        %v2345 = vpop.f32.mrb[0].mxu0
        %v2346 = vadd.f32 %v2234, %v2345
        %v2347 = vpop.f32.mrb[0].mxu0
        %v2348 = vadd.f32 %v2238, %v2347
        %v2349 = vpop.f32.mrb[0].mxu0
        %v2350 = vadd.f32 %v2234, %v2349
        %v2351 = vpop.f32.mrb[0].mxu0
        %v2352 = vadd.f32 %v2238, %v2351
        %2353 = vdwg.mxu0
        %v2354 = vmax.f32 %v2276, %v2278
        %2355 = vmax.xlane.f32.xlu0 %v2354
        %v2356 = vpop.xlane.xlu0 %2355
        %v2357 = vmax.f32 %v2280, %v2282
        %2358 = vmax.xlane.f32.xlu0 %v2357
        %v2359 = vpop.xlane.xlu0 %2358
        %v2360 = vmax.f32 %v2286, %v2288
        %2361 = vmax.xlane.f32.xlu0 %v2360
        %v2362 = vpop.xlane.xlu0 %2361
        %v2363 = vmax.f32 %v2290, %v2292
        %2364 = vmax.xlane.f32.xlu0 %v2363
        %v2365 = vpop.xlane.xlu0 %2364
        %v2366 = vmax.f32 %v2296, %v2298
        %2367 = vmax.xlane.f32.xlu0 %v2366
        %v2368 = vpop.xlane.xlu0 %2367
        %v2369 = vmax.f32 %v2300, %v2302
        %2370 = vmax.xlane.f32.xlu0 %v2369
        %v2371 = vpop.xlane.xlu0 %2370
        %v2372 = vmax.f32 %v2306, %v2308
        %2373 = vmax.xlane.f32.xlu0 %v2372
        %v2374 = vpop.xlane.xlu0 %2373
        %v2375 = vmax.f32 %v2310, %v2312
        %2376 = vmax.xlane.f32.xlu0 %v2375
        %v2377 = vpop.xlane.xlu0 %2376
        %v2378 = vmax.f32 %v2316, %v2318
        %2379 = vmax.xlane.f32.xlu0 %v2378
        %v2380 = vpop.xlane.xlu0 %2379
        %v2381 = vmax.f32 %v2320, %v2322
        %2382 = vmax.xlane.f32.xlu0 %v2381
        %v2383 = vpop.xlane.xlu0 %2382
        %v2384 = vmax.f32 %v2326, %v2328
        %2385 = vmax.xlane.f32.xlu0 %v2384
        %v2386 = vpop.xlane.xlu0 %2385
        %v2387 = vmax.f32 %v2330, %v2332
        %2388 = vmax.xlane.f32.xlu0 %v2387
        %v2389 = vpop.xlane.xlu0 %2388
        %v2390 = vmax.f32 %v2336, %v2338
        %2391 = vmax.xlane.f32.xlu0 %v2390
        %v2392 = vpop.xlane.xlu0 %2391
        %v2393 = vmax.f32 %v2340, %v2342
        %2394 = vmax.xlane.f32.xlu0 %v2393
        %v2395 = vpop.xlane.xlu0 %2394
        %v2396 = vmax.f32 %v2346, %v2348
        %2397 = vmax.xlane.f32.xlu0 %v2396
        %v2398 = vpop.xlane.xlu0 %2397
        %v2399 = vmax.f32 %v2350, %v2352
        %2400 = vmax.xlane.f32.xlu0 %v2399
        %v2401 = vpop.xlane.xlu0 %2400
        %v2402 = vsub.f32 %v2276, %v2356
        %v2403 = vsub.f32 %v2278, %v2356
        %v2404 = vsub.f32 %v2280, %v2359
        %v2405 = vsub.f32 %v2282, %v2359
        %v2406 = vsub.f32 %v2286, %v2362
        %v2407 = vsub.f32 %v2288, %v2362
        %v2408 = vsub.f32 %v2290, %v2365
        %v2409 = vsub.f32 %v2292, %v2365
        %v2410 = vsub.f32 %v2296, %v2368
        %v2411 = vsub.f32 %v2298, %v2368
        %v2412 = vsub.f32 %v2300, %v2371
        %v2413 = vsub.f32 %v2302, %v2371
        %v2414 = vsub.f32 %v2306, %v2374
        %v2415 = vsub.f32 %v2308, %v2374
        %v2416 = vsub.f32 %v2310, %v2377
        %v2417 = vsub.f32 %v2312, %v2377
        %v2418 = vsub.f32 %v2316, %v2380
        %v2419 = vsub.f32 %v2318, %v2380
        %v2420 = vsub.f32 %v2320, %v2383
        %v2421 = vsub.f32 %v2322, %v2383
        %v2422 = vsub.f32 %v2326, %v2386
        %v2423 = vsub.f32 %v2328, %v2386
        %v2424 = vsub.f32 %v2330, %v2389
        %v2425 = vsub.f32 %v2332, %v2389
        %v2426 = vsub.f32 %v2336, %v2392
        %v2427 = vsub.f32 %v2338, %v2392
        %v2428 = vsub.f32 %v2340, %v2395
        %v2429 = vsub.f32 %v2342, %v2395
        %v2430 = vsub.f32 %v2346, %v2398
        %v2431 = vsub.f32 %v2348, %v2398
        %v2432 = vsub.f32 %v2350, %v2401
        %v2433 = vsub.f32 %v2352, %v2401
        %v2434 = vmul.f32 %v2402, 1.442695
        %v2435 = vpow.pop %v2434
        %v2436 = vmul.f32 %v2403, 1.442695
        %v2437 = vpow.pop %v2436
        %v2438 = vmul.f32 %v2404, 1.442695
        %v2439 = vpow.pop %v2438
        %v2440 = vmul.f32 %v2405, 1.442695
        %v2441 = vpow.pop %v2440
        %v2442 = vmul.f32 %v2406, 1.442695
        %v2443 = vpow.pop %v2442
        %v2444 = vmul.f32 %v2407, 1.442695
        %v2445 = vpow.pop %v2444
        %v2446 = vmul.f32 %v2408, 1.442695
        %v2447 = vpow.pop %v2446
        %v2448 = vmul.f32 %v2409, 1.442695
        %v2449 = vpow.pop %v2448
        %v2450 = vmul.f32 %v2410, 1.442695
        %v2451 = vpow.pop %v2450
        %v2452 = vmul.f32 %v2411, 1.442695
        %v2453 = vpow.pop %v2452
        %v2454 = vmul.f32 %v2412, 1.442695
        %v2455 = vpow.pop %v2454
        %v2456 = vmul.f32 %v2413, 1.442695
        %v2457 = vpow.pop %v2456
        %v2458 = vmul.f32 %v2414, 1.442695
        %v2459 = vpow.pop %v2458
        %v2460 = vmul.f32 %v2415, 1.442695
        %v2461 = vpow.pop %v2460
        %v2462 = vmul.f32 %v2416, 1.442695
        %v2463 = vpow.pop %v2462
        %v2464 = vmul.f32 %v2417, 1.442695
        %v2465 = vpow.pop %v2464
        %v2466 = vmul.f32 %v2418, 1.442695
        %v2467 = vpow.pop %v2466
        %v2468 = vmul.f32 %v2419, 1.442695
        %v2469 = vpow.pop %v2468
        %v2470 = vmul.f32 %v2420, 1.442695
        %v2471 = vpow.pop %v2470
        %v2472 = vmul.f32 %v2421, 1.442695
        %v2473 = vpow.pop %v2472
        %v2474 = vmul.f32 %v2422, 1.442695
        %v2475 = vpow.pop %v2474
        %v2476 = vmul.f32 %v2423, 1.442695
        %v2477 = vpow.pop %v2476
        %v2478 = vmul.f32 %v2424, 1.442695
        %v2479 = vpow.pop %v2478
        %v2480 = vmul.f32 %v2425, 1.442695
        %v2481 = vpow.pop %v2480
        %v2482 = vmul.f32 %v2426, 1.442695
        %v2483 = vpow.pop %v2482
        %v2484 = vmul.f32 %v2427, 1.442695
        %v2485 = vpow.pop %v2484
        %v2486 = vmul.f32 %v2428, 1.442695
        %v2487 = vpow.pop %v2486
        %v2488 = vmul.f32 %v2429, 1.442695
        %v2489 = vpow.pop %v2488
        %v2490 = vmul.f32 %v2430, 1.442695
        %v2491 = vpow.pop %v2490
        %v2492 = vmul.f32 %v2431, 1.442695
        %v2493 = vpow.pop %v2492
        %v2494 = vmul.f32 %v2432, 1.442695
        %v2495 = vpow.pop %v2494
        %v2496 = vmul.f32 %v2433, 1.442695
        %v2497 = vpow.pop %v2496
        %v2498 = vadd.f32 %v2435, %v2437
        %2499 = vadd.xlane.f32.xlu0 %v2498
        %v2500 = vpop.xlane.xlu0 %2499
        %v2501 = vadd.f32 %v2439, %v2441
        %2502 = vadd.xlane.f32.xlu0 %v2501
        %v2503 = vpop.xlane.xlu0 %2502
        %v2504 = vadd.f32 %v2443, %v2445
        %2505 = vadd.xlane.f32.xlu0 %v2504
        %v2506 = vpop.xlane.xlu0 %2505
        %v2507 = vadd.f32 %v2447, %v2449
        %2508 = vadd.xlane.f32.xlu0 %v2507
        %v2509 = vpop.xlane.xlu0 %2508
        %v2510 = vadd.f32 %v2451, %v2453
        %2511 = vadd.xlane.f32.xlu0 %v2510
        %v2512 = vpop.xlane.xlu0 %2511
        %v2513 = vadd.f32 %v2455, %v2457
        %2514 = vadd.xlane.f32.xlu0 %v2513
        %v2515 = vpop.xlane.xlu0 %2514
        %v2516 = vadd.f32 %v2459, %v2461
        %2517 = vadd.xlane.f32.xlu0 %v2516
        %v2518 = vpop.xlane.xlu0 %2517
        %v2519 = vadd.f32 %v2463, %v2465
        %2520 = vadd.xlane.f32.xlu0 %v2519
        %v2521 = vpop.xlane.xlu0 %2520
        %v2522 = vadd.f32 %v2467, %v2469
        %2523 = vadd.xlane.f32.xlu0 %v2522
        %v2524 = vpop.xlane.xlu0 %2523
        %v2525 = vadd.f32 %v2471, %v2473
        %2526 = vadd.xlane.f32.xlu0 %v2525
        %v2527 = vpop.xlane.xlu0 %2526
        %v2528 = vadd.f32 %v2475, %v2477
        %2529 = vadd.xlane.f32.xlu0 %v2528
        %v2530 = vpop.xlane.xlu0 %2529
        %v2531 = vadd.f32 %v2479, %v2481
        %2532 = vadd.xlane.f32.xlu0 %v2531
        %v2533 = vpop.xlane.xlu0 %2532
        %v2534 = vadd.f32 %v2483, %v2485
        %2535 = vadd.xlane.f32.xlu0 %v2534
        %v2536 = vpop.xlane.xlu0 %2535
        %v2537 = vadd.f32 %v2487, %v2489
        %2538 = vadd.xlane.f32.xlu0 %v2537
        %v2539 = vpop.xlane.xlu0 %2538
        %v2540 = vadd.f32 %v2491, %v2493
        %2541 = vadd.xlane.f32.xlu0 %v2540
        %v2542 = vpop.xlane.xlu0 %2541
        %v2543 = vadd.f32 %v2495, %v2497
        %2544 = vadd.xlane.f32.xlu0 %v2543
        %v2545 = vpop.xlane.xlu0 %2544
        %v2546 = vrcp.pop %v2500
        %v2547 = vrcp.pop %v2503
        %v2548 = vrcp.pop %v2506
        %v2549 = vrcp.pop %v2509
        %v2550 = vrcp.pop %v2512
        %v2551 = vrcp.pop %v2515
        %v2552 = vrcp.pop %v2518
        %v2553 = vrcp.pop %v2521
        %v2554 = vrcp.pop %v2524
        %v2555 = vrcp.pop %v2527
        %v2556 = vrcp.pop %v2530
        %v2557 = vrcp.pop %v2533
        %v2558 = vrcp.pop %v2536
        %v2559 = vrcp.pop %v2539
        %v2560 = vrcp.pop %v2542
        %v2561 = vrcp.pop %v2545
        %v2562 = vmul.f32 %v2435, %v2546
        %v2563 = vmul.f32 %v2437, %v2546
        %v2564 = vmul.f32 %v2439, %v2547
        %v2565 = vmul.f32 %v2441, %v2547
        %v2566 = vmul.f32 %v2443, %v2548
        %v2567 = vmul.f32 %v2445, %v2548
        %v2568 = vmul.f32 %v2447, %v2549
        %v2569 = vmul.f32 %v2449, %v2549
        %v2570 = vmul.f32 %v2451, %v2550
        %v2571 = vmul.f32 %v2453, %v2550
        %v2572 = vmul.f32 %v2455, %v2551
        %v2573 = vmul.f32 %v2457, %v2551
        %v2574 = vmul.f32 %v2459, %v2552
        %v2575 = vmul.f32 %v2461, %v2552
        %v2576 = vmul.f32 %v2463, %v2553
        %v2577 = vmul.f32 %v2465, %v2553
        %v2578 = vmul.f32 %v2467, %v2554
        %v2579 = vmul.f32 %v2469, %v2554
        %v2580 = vmul.f32 %v2471, %v2555
        %v2581 = vmul.f32 %v2473, %v2555
        %v2582 = vmul.f32 %v2475, %v2556
        %v2583 = vmul.f32 %v2477, %v2556
        %v2584 = vmul.f32 %v2479, %v2557
        %v2585 = vmul.f32 %v2481, %v2557
        %v2586 = vmul.f32 %v2483, %v2558
        %v2587 = vmul.f32 %v2485, %v2558
        %v2588 = vmul.f32 %v2487, %v2559
        %v2589 = vmul.f32 %v2489, %v2559
        %v2590 = vmul.f32 %v2491, %v2560
        %v2591 = vmul.f32 %v2493, %v2560
        %v2592 = vmul.f32 %v2495, %v2561
        %v2593 = vmul.f32 %v2497, %v2561
        %v2594 = vpack.c.bf16 %v2564, %v2562
        %v2595 = vpack.c.bf16 %v2565, %v2563
        %v2596 = vpack.c.bf16 %v2568, %v2566
        %v2597 = vpack.c.bf16 %v2569, %v2567
        %v2598 = vpack.c.bf16 %v2572, %v2570
        %v2599 = vpack.c.bf16 %v2573, %v2571
        %v2600 = vpack.c.bf16 %v2576, %v2574
        %v2601 = vpack.c.bf16 %v2577, %v2575
        %v2602 = vpack.c.bf16 %v2580, %v2578
        %v2603 = vpack.c.bf16 %v2581, %v2579
        %v2604 = vpack.c.bf16 %v2584, %v2582
        %v2605 = vpack.c.bf16 %v2585, %v2583
        %v2606 = vpack.c.bf16 %v2588, %v2586
        %v2607 = vpack.c.bf16 %v2589, %v2587
        %v2608 = vpack.c.bf16 %v2592, %v2590
        %v2609 = vpack.c.bf16 %v2593, %v2591
        %v2610 = vld [vmem:[#allocation3] sm:$0xff]
        %v2611 = vld [vmem:[#allocation3 + $0x10] sm:$0xff]
        %v2612 = vld [vmem:[#allocation3 + $0x20] sm:$0xff]
        %v2613 = vld [vmem:[#allocation3 + $0x30] sm:$0xff]
        %v2614 = vld [vmem:[#allocation3 + $0x40] sm:$0xff]
        %v2615 = vld [vmem:[#allocation3 + $0x50] sm:$0xff]
        %v2616 = vld [vmem:[#allocation3 + $0x60] sm:$0xff]
        %v2617 = vld [vmem:[#allocation3 + $0x70] sm:$0xff]
        %v2618 = vld [vmem:[#allocation3 + $0x80] sm:$0xff]
        %v2619 = vld [vmem:[#allocation3 + $0x90] sm:$0xff]
        %v2620 = vld [vmem:[#allocation3 + $0xa0] sm:$0xff]
        %v2621 = vld [vmem:[#allocation3 + $0xb0] sm:$0xff]
        %v2622 = vld [vmem:[#allocation3 + $0xc0] sm:$0xff]
        %v2623 = vld [vmem:[#allocation3 + $0xd0] sm:$0xff]
        %v2624 = vld [vmem:[#allocation3 + $0xe0] sm:$0xff]
        %v2625 = vld [vmem:[#allocation3 + $0xf0] sm:$0xff]
        %2626 = vmatprep.subr.bf16.mxu0 0
        %2627 = vmatpush1.bf16.msra.mxu0 %v2610
        %2628 = vmatprep.subr.bf16.mxu0 0
        %2629 = vmatpush1.bf16.msra.mxu0 %v2611
        %2630 = vmatprep.subr.bf16.mxu0 0
        %2631 = vmatpush1.bf16.msra.mxu0 %v2612
        %2632 = vmatprep.subr.bf16.mxu0 0
        %2633 = vmatpush1.bf16.msra.mxu0 %v2613
        %2634 = vmatprep.subr.bf16.mxu0 0
        %2635 = vmatpush1.bf16.msra.mxu0 %v2614
        %2636 = vmatprep.subr.bf16.mxu0 0
        %2637 = vmatpush1.bf16.msra.mxu0 %v2615
        %2638 = vmatprep.subr.bf16.mxu0 0
        %2639 = vmatpush1.bf16.msra.mxu0 %v2616
        %2640 = vmatprep.subr.bf16.mxu0 0
        %2641 = vmatpush1.bf16.msra.mxu0 %v2617
        %2642 = vmatprep.subr.bf16.mxu0 0
        %2643 = vmatpush1.bf16.msra.mxu0 %v2618
        %2644 = vmatprep.subr.bf16.mxu0 0
        %2645 = vmatpush1.bf16.msra.mxu0 %v2619
        %2646 = vmatprep.subr.bf16.mxu0 0
        %2647 = vmatpush1.bf16.msra.mxu0 %v2620
        %2648 = vmatprep.subr.bf16.mxu0 0
        %2649 = vmatpush1.bf16.msra.mxu0 %v2621
        %2650 = vmatprep.subr.bf16.mxu0 0
        %2651 = vmatpush1.bf16.msra.mxu0 %v2622
        %2652 = vmatprep.subr.bf16.mxu0 0
        %2653 = vmatpush1.bf16.msra.mxu0 %v2623
        %2654 = vmatprep.subr.bf16.mxu0 0
        %2655 = vmatpush1.bf16.msra.mxu0 %v2624
        %2656 = vmatprep.subr.bf16.mxu0 0
        %2657 = vmatpush1.bf16.msra.mxu0 %v2625
        %2658 = vmatprep.mubr.bf16.mxu0 %v2595
        %2659 = vmatmul.mubr.bf16.gmra.mrb[0].mxu0 %v2594
        %v2660 = vpop.f32.mrb[0].mxu0
        %v2661 = vadd.f32 0.0, %v2660
        %v2662 = vpop.f32.mrb[0].mxu0
        %v2663 = vpop.f32.mrb[0].mxu0
        %v2664 = vadd.f32 0.0, %v2663
        %v2665 = vpop.f32.mrb[0].mxu0
        %2666 = vmatprep.mubr.bf16.mxu0 %v2597
        %2667 = vmatmul.mubr.bf16.gmra.mrb[0].mxu0 %v2596
        %v2668 = vpop.f32.mrb[0].mxu0
        %v2669 = vadd.f32 0.0, %v2668
        %v2670 = vpop.f32.mrb[0].mxu0
        %v2671 = vpop.f32.mrb[0].mxu0
        %v2672 = vadd.f32 0.0, %v2671
        %v2673 = vpop.f32.mrb[0].mxu0
        %2674 = vmatprep.mubr.bf16.mxu0 %v2599
        %2675 = vmatmul.mubr.bf16.gmra.mrb[0].mxu0 %v2598
        %v2676 = vpop.f32.mrb[0].mxu0
        %v2677 = vadd.f32 0.0, %v2676
        %v2678 = vpop.f32.mrb[0].mxu0
        %v2679 = vpop.f32.mrb[0].mxu0
        %v2680 = vadd.f32 0.0, %v2679
        %v2681 = vpop.f32.mrb[0].mxu0
        %2682 = vmatprep.mubr.bf16.mxu0 %v2601
        %2683 = vmatmul.mubr.bf16.gmra.mrb[0].mxu0 %v2600
        %v2684 = vpop.f32.mrb[0].mxu0
        %v2685 = vadd.f32 0.0, %v2684
        %v2686 = vpop.f32.mrb[0].mxu0
        %v2687 = vpop.f32.mrb[0].mxu0
        %v2688 = vadd.f32 0.0, %v2687
        %v2689 = vpop.f32.mrb[0].mxu0
        %2690 = vmatprep.mubr.bf16.mxu0 %v2603
        %2691 = vmatmul.mubr.bf16.gmra.mrb[0].mxu0 %v2602
        %v2692 = vpop.f32.mrb[0].mxu0
        %v2693 = vadd.f32 0.0, %v2692
        %v2694 = vpop.f32.mrb[0].mxu0
        %v2695 = vpop.f32.mrb[0].mxu0
        %v2696 = vadd.f32 0.0, %v2695
        %v2697 = vpop.f32.mrb[0].mxu0
        %2698 = vmatprep.mubr.bf16.mxu0 %v2605
        %2699 = vmatmul.mubr.bf16.gmra.mrb[0].mxu0 %v2604
        %v2700 = vpop.f32.mrb[0].mxu0
        %v2701 = vadd.f32 0.0, %v2700
        %v2702 = vpop.f32.mrb[0].mxu0
        %v2703 = vpop.f32.mrb[0].mxu0
        %v2704 = vadd.f32 0.0, %v2703
        %v2705 = vpop.f32.mrb[0].mxu0
        %2706 = vmatprep.mubr.bf16.mxu0 %v2607
        %2707 = vmatmul.mubr.bf16.gmra.mrb[0].mxu0 %v2606
        %v2708 = vpop.f32.mrb[0].mxu0
        %v2709 = vadd.f32 0.0, %v2708
        %v2710 = vpop.f32.mrb[0].mxu0
        %v2711 = vpop.f32.mrb[0].mxu0
        %v2712 = vadd.f32 0.0, %v2711
        %v2713 = vpop.f32.mrb[0].mxu0
        %2714 = vmatprep.mubr.bf16.mxu0 %v2609
        %2715 = vmatmul.mubr.bf16.gmra.mrb[0].mxu0 %v2608
        %v2716 = vpop.f32.mrb[0].mxu0
        %v2717 = vadd.f32 0.0, %v2716
        %v2718 = vpop.f32.mrb[0].mxu0
        %v2719 = vpop.f32.mrb[0].mxu0
        %v2720 = vadd.f32 0.0, %v2719
        %v2721 = vpop.f32.mrb[0].mxu0
        %2722 = vdwg.mxu0
        %v2723 = vpack.c.bf16 %v2664, %v2661
        %v2724 = vpack.c.bf16 %v2672, %v2669
        %v2725 = vpack.c.bf16 %v2680, %v2677
        %v2726 = vpack.c.bf16 %v2688, %v2685
        %v2727 = vpack.c.bf16 %v2696, %v2693
        %v2728 = vpack.c.bf16 %v2704, %v2701
        %v2729 = vpack.c.bf16 %v2712, %v2709
        %v2730 = vpack.c.bf16 %v2720, %v2717
        %2731 = vst [vmem:[#allocation4] sm:$0xff] %v2723
        %2732 = vst [vmem:[#allocation4 + $0x10] sm:$0xff] %v2724
        %2733 = vst [vmem:[#allocation4 + $0x20] sm:$0xff] %v2725
        %2734 = vst [vmem:[#allocation4 + $0x30] sm:$0xff] %v2726
        %2735 = vst [vmem:[#allocation4 + $0x40] sm:$0xff] %v2727
        %2736 = vst [vmem:[#allocation4 + $0x50] sm:$0xff] %v2728
        %2737 = vst [vmem:[#allocation4 + $0x60] sm:$0xff] %v2729
        %2738 = vst [vmem:[#allocation4 + $0x70] sm:$0xff] %v2730
        %v2739 = vld [vmem:[#allocation2 + $0x8] sm:$0xff]
        %v2740 = vld [vmem:[#allocation2 + $0x18] sm:$0xff]
        %v2741 = vld [vmem:[#allocation2 + $0x28] sm:$0xff]
        %v2742 = vld [vmem:[#allocation2 + $0x38] sm:$0xff]
        %v2743 = vld [vmem:[#allocation2 + $0x48] sm:$0xff]
        %v2744 = vld [vmem:[#allocation2 + $0x58] sm:$0xff]
        %v2745 = vld [vmem:[#allocation2 + $0x68] sm:$0xff]
        %v2746 = vld [vmem:[#allocation2 + $0x78] sm:$0xff]
        %v2747 = vld [vmem:[#allocation2 + $0x88] sm:$0xff]
        %v2748 = vld [vmem:[#allocation2 + $0x98] sm:$0xff]
        %v2749 = vld [vmem:[#allocation2 + $0xa8] sm:$0xff]
        %v2750 = vld [vmem:[#allocation2 + $0xb8] sm:$0xff]
        %v2751 = vld [vmem:[#allocation2 + $0xc8] sm:$0xff]
        %v2752 = vld [vmem:[#allocation2 + $0xd8] sm:$0xff]
        %v2753 = vld [vmem:[#allocation2 + $0xe8] sm:$0xff]
        %v2754 = vld [vmem:[#allocation2 + $0xf8] sm:$0xff]
        %2755 = vmatprep.subr.bf16.mxu0 0
        %2756 = vmatpush1.bf16.xpose.msra.mxu0 %v2739
        %2757 = vmatprep.subr.bf16.mxu0 0
        %2758 = vmatpush1.bf16.xpose.msra.mxu0 %v2740
        %2759 = vmatprep.subr.bf16.mxu0 0
        %2760 = vmatpush1.bf16.xpose.msra.mxu0 %v2741
        %2761 = vmatprep.subr.bf16.mxu0 0
        %2762 = vmatpush1.bf16.xpose.msra.mxu0 %v2742
        %2763 = vmatprep.subr.bf16.mxu0 0
        %2764 = vmatpush1.bf16.xpose.msra.mxu0 %v2743
        %2765 = vmatprep.subr.bf16.mxu0 0
        %2766 = vmatpush1.bf16.xpose.msra.mxu0 %v2744
        %2767 = vmatprep.subr.bf16.mxu0 0
        %2768 = vmatpush1.bf16.xpose.msra.mxu0 %v2745
        %2769 = vmatprep.subr.bf16.mxu0 0
        %2770 = vmatpush1.bf16.xpose.msra.mxu0 %v2746
        %2771 = vmatprep.subr.bf16.mxu0 0
        %2772 = vmatpush1.bf16.xpose.msra.mxu0 %v2747
        %2773 = vmatprep.subr.bf16.mxu0 0
        %2774 = vmatpush1.bf16.xpose.msra.mxu0 %v2748
        %2775 = vmatprep.subr.bf16.mxu0 0
        %2776 = vmatpush1.bf16.xpose.msra.mxu0 %v2749
        %2777 = vmatprep.subr.bf16.mxu0 0
        %2778 = vmatpush1.bf16.xpose.msra.mxu0 %v2750
        %2779 = vmatprep.subr.bf16.mxu0 0
        %2780 = vmatpush1.bf16.xpose.msra.mxu0 %v2751
        %2781 = vmatprep.subr.bf16.mxu0 0
        %2782 = vmatpush1.bf16.xpose.msra.mxu0 %v2752
        %2783 = vmatprep.subr.bf16.mxu0 0
        %2784 = vmatpush1.bf16.xpose.msra.mxu0 %v2753
        %2785 = vmatprep.subr.bf16.mxu0 0
        %2786 = vmatpush1.bf16.xpose.msra.mxu0 %v2754
        %2787 = vmatprep.mubr.bf16.mxu0 0
        %2788 = vmatmul.mubr.bf16.gmra.mrb[0].mxu0 %v2199
        %v2789 = vpop.f32.mrb[0].mxu0
        %v2790 = vadd.f32 %v2234, %v2789
        %v2791 = vpop.f32.mrb[0].mxu0
        %v2792 = vadd.f32 %v2238, %v2791
        %v2793 = vpop.f32.mrb[0].mxu0
        %v2794 = vadd.f32 %v2234, %v2793
        %v2795 = vpop.f32.mrb[0].mxu0
        %v2796 = vadd.f32 %v2238, %v2795
        %2797 = vmatprep.mubr.bf16.mxu0 0
        %2798 = vmatmul.mubr.bf16.gmra.mrb[0].mxu0 %v2201
        %v2799 = vpop.f32.mrb[0].mxu0
        %v2800 = vadd.f32 %v2234, %v2799
        %v2801 = vpop.f32.mrb[0].mxu0
        %v2802 = vadd.f32 %v2238, %v2801
        %v2803 = vpop.f32.mrb[0].mxu0
        %v2804 = vadd.f32 %v2234, %v2803
        %v2805 = vpop.f32.mrb[0].mxu0
        %v2806 = vadd.f32 %v2238, %v2805
        %2807 = vmatprep.mubr.bf16.mxu0 0
        %2808 = vmatmul.mubr.bf16.gmra.mrb[0].mxu0 %v2203
        %v2809 = vpop.f32.mrb[0].mxu0
        %v2810 = vadd.f32 %v2234, %v2809
        %v2811 = vpop.f32.mrb[0].mxu0
        %v2812 = vadd.f32 %v2238, %v2811
        %v2813 = vpop.f32.mrb[0].mxu0
        %v2814 = vadd.f32 %v2234, %v2813
        %v2815 = vpop.f32.mrb[0].mxu0
        %v2816 = vadd.f32 %v2238, %v2815
        %2817 = vmatprep.mubr.bf16.mxu0 0
        %2818 = vmatmul.mubr.bf16.gmra.mrb[0].mxu0 %v2205
        %v2819 = vpop.f32.mrb[0].mxu0
        %v2820 = vadd.f32 %v2234, %v2819
        %v2821 = vpop.f32.mrb[0].mxu0
        %v2822 = vadd.f32 %v2238, %v2821
        %v2823 = vpop.f32.mrb[0].mxu0
        %v2824 = vadd.f32 %v2234, %v2823
        %v2825 = vpop.f32.mrb[0].mxu0
        %v2826 = vadd.f32 %v2238, %v2825
        %2827 = vmatprep.mubr.bf16.mxu0 0
        %2828 = vmatmul.mubr.bf16.gmra.mrb[0].mxu0 %v2207
        %v2829 = vpop.f32.mrb[0].mxu0
        %v2830 = vadd.f32 %v2234, %v2829
        %v2831 = vpop.f32.mrb[0].mxu0
        %v2832 = vadd.f32 %v2238, %v2831
        %v2833 = vpop.f32.mrb[0].mxu0
        %v2834 = vadd.f32 %v2234, %v2833
        %v2835 = vpop.f32.mrb[0].mxu0
        %v2836 = vadd.f32 %v2238, %v2835
        %2837 = vmatprep.mubr.bf16.mxu0 0
        %2838 = vmatmul.mubr.bf16.gmra.mrb[0].mxu0 %v2209
        %v2839 = vpop.f32.mrb[0].mxu0
        %v2840 = vadd.f32 %v2234, %v2839
        %v2841 = vpop.f32.mrb[0].mxu0
        %v2842 = vadd.f32 %v2238, %v2841
        %v2843 = vpop.f32.mrb[0].mxu0
        %v2844 = vadd.f32 %v2234, %v2843
        %v2845 = vpop.f32.mrb[0].mxu0
        %v2846 = vadd.f32 %v2238, %v2845
        %2847 = vmatprep.mubr.bf16.mxu0 0
        %2848 = vmatmul.mubr.bf16.gmra.mrb[0].mxu0 %v2211
        %v2849 = vpop.f32.mrb[0].mxu0
        %v2850 = vadd.f32 %v2234, %v2849
        %v2851 = vpop.f32.mrb[0].mxu0
        %v2852 = vadd.f32 %v2238, %v2851
        %v2853 = vpop.f32.mrb[0].mxu0
        %v2854 = vadd.f32 %v2234, %v2853
        %v2855 = vpop.f32.mrb[0].mxu0
        %v2856 = vadd.f32 %v2238, %v2855
        %2857 = vmatprep.mubr.bf16.mxu0 0
        %2858 = vmatmul.mubr.bf16.gmra.mrb[0].mxu0 %v2213
        %v2859 = vpop.f32.mrb[0].mxu0
        %v2860 = vadd.f32 %v2234, %v2859
        %v2861 = vpop.f32.mrb[0].mxu0
        %v2862 = vadd.f32 %v2238, %v2861
        %v2863 = vpop.f32.mrb[0].mxu0
        %v2864 = vadd.f32 %v2234, %v2863
        %v2865 = vpop.f32.mrb[0].mxu0
        %v2866 = vadd.f32 %v2238, %v2865
        %2867 = vdwg.mxu0
        %v2868 = vmax.f32 %v2790, %v2792
        %2869 = vmax.xlane.f32.xlu0 %v2868
        %v2870 = vpop.xlane.xlu0 %2869
        %v2871 = vmax.f32 %v2794, %v2796
        %2872 = vmax.xlane.f32.xlu0 %v2871
        %v2873 = vpop.xlane.xlu0 %2872
        %v2874 = vmax.f32 %v2800, %v2802
        %2875 = vmax.xlane.f32.xlu0 %v2874
        %v2876 = vpop.xlane.xlu0 %2875
        %v2877 = vmax.f32 %v2804, %v2806
        %2878 = vmax.xlane.f32.xlu0 %v2877
        %v2879 = vpop.xlane.xlu0 %2878
        %v2880 = vmax.f32 %v2810, %v2812
        %2881 = vmax.xlane.f32.xlu0 %v2880
        %v2882 = vpop.xlane.xlu0 %2881
        %v2883 = vmax.f32 %v2814, %v2816
        %2884 = vmax.xlane.f32.xlu0 %v2883
        %v2885 = vpop.xlane.xlu0 %2884
        %v2886 = vmax.f32 %v2820, %v2822
        %2887 = vmax.xlane.f32.xlu0 %v2886
        %v2888 = vpop.xlane.xlu0 %2887
        %v2889 = vmax.f32 %v2824, %v2826
        %2890 = vmax.xlane.f32.xlu0 %v2889
        %v2891 = vpop.xlane.xlu0 %2890
        %v2892 = vmax.f32 %v2830, %v2832
        %2893 = vmax.xlane.f32.xlu0 %v2892
        %v2894 = vpop.xlane.xlu0 %2893
        %v2895 = vmax.f32 %v2834, %v2836
        %2896 = vmax.xlane.f32.xlu0 %v2895
        %v2897 = vpop.xlane.xlu0 %2896
        %v2898 = vmax.f32 %v2840, %v2842
        %2899 = vmax.xlane.f32.xlu0 %v2898
        %v2900 = vpop.xlane.xlu0 %2899
        %v2901 = vmax.f32 %v2844, %v2846
        %2902 = vmax.xlane.f32.xlu0 %v2901
        %v2903 = vpop.xlane.xlu0 %2902
        %v2904 = vmax.f32 %v2850, %v2852
        %2905 = vmax.xlane.f32.xlu0 %v2904
        %v2906 = vpop.xlane.xlu0 %2905
        %v2907 = vmax.f32 %v2854, %v2856
        %2908 = vmax.xlane.f32.xlu0 %v2907
        %v2909 = vpop.xlane.xlu0 %2908
        %v2910 = vmax.f32 %v2860, %v2862
        %2911 = vmax.xlane.f32.xlu0 %v2910
        %v2912 = vpop.xlane.xlu0 %2911
        %v2913 = vmax.f32 %v2864, %v2866
        %2914 = vmax.xlane.f32.xlu0 %v2913
        %v2915 = vpop.xlane.xlu0 %2914
        %v2916 = vsub.f32 %v2790, %v2870
        %v2917 = vsub.f32 %v2792, %v2870
        %v2918 = vsub.f32 %v2794, %v2873
        %v2919 = vsub.f32 %v2796, %v2873
        %v2920 = vsub.f32 %v2800, %v2876
        %v2921 = vsub.f32 %v2802, %v2876
        %v2922 = vsub.f32 %v2804, %v2879
        %v2923 = vsub.f32 %v2806, %v2879
        %v2924 = vsub.f32 %v2810, %v2882
        %v2925 = vsub.f32 %v2812, %v2882
        %v2926 = vsub.f32 %v2814, %v2885
        %v2927 = vsub.f32 %v2816, %v2885
        %v2928 = vsub.f32 %v2820, %v2888
        %v2929 = vsub.f32 %v2822, %v2888
        %v2930 = vsub.f32 %v2824, %v2891
        %v2931 = vsub.f32 %v2826, %v2891
        %v2932 = vsub.f32 %v2830, %v2894
        %v2933 = vsub.f32 %v2832, %v2894
        %v2934 = vsub.f32 %v2834, %v2897
        %v2935 = vsub.f32 %v2836, %v2897
        %v2936 = vsub.f32 %v2840, %v2900
        %v2937 = vsub.f32 %v2842, %v2900
        %v2938 = vsub.f32 %v2844, %v2903
        %v2939 = vsub.f32 %v2846, %v2903
        %v2940 = vsub.f32 %v2850, %v2906
        %v2941 = vsub.f32 %v2852, %v2906
        %v2942 = vsub.f32 %v2854, %v2909
        %v2943 = vsub.f32 %v2856, %v2909
        %v2944 = vsub.f32 %v2860, %v2912
        %v2945 = vsub.f32 %v2862, %v2912
        %v2946 = vsub.f32 %v2864, %v2915
        %v2947 = vsub.f32 %v2866, %v2915
        %v2948 = vmul.f32 %v2916, 1.442695
        %v2949 = vpow.pop %v2948
        %v2950 = vmul.f32 %v2917, 1.442695
        %v2951 = vpow.pop %v2950
        %v2952 = vmul.f32 %v2918, 1.442695
        %v2953 = vpow.pop %v2952
        %v2954 = vmul.f32 %v2919, 1.442695
        %v2955 = vpow.pop %v2954
        %v2956 = vmul.f32 %v2920, 1.442695
        %v2957 = vpow.pop %v2956
        %v2958 = vmul.f32 %v2921, 1.442695
        %v2959 = vpow.pop %v2958
        %v2960 = vmul.f32 %v2922, 1.442695
        %v2961 = vpow.pop %v2960
        %v2962 = vmul.f32 %v2923, 1.442695
        %v2963 = vpow.pop %v2962
        %v2964 = vmul.f32 %v2924, 1.442695
        %v2965 = vpow.pop %v2964
        %v2966 = vmul.f32 %v2925, 1.442695
        %v2967 = vpow.pop %v2966
        %v2968 = vmul.f32 %v2926, 1.442695
        %v2969 = vpow.pop %v2968
        %v2970 = vmul.f32 %v2927, 1.442695
        %v2971 = vpow.pop %v2970
        %v2972 = vmul.f32 %v2928, 1.442695
        %v2973 = vpow.pop %v2972
        %v2974 = vmul.f32 %v2929, 1.442695
        %v2975 = vpow.pop %v2974
        %v2976 = vmul.f32 %v2930, 1.442695
        %v2977 = vpow.pop %v2976
        %v2978 = vmul.f32 %v2931, 1.442695
        %v2979 = vpow.pop %v2978
        %v2980 = vmul.f32 %v2932, 1.442695
        %v2981 = vpow.pop %v2980
        %v2982 = vmul.f32 %v2933, 1.442695
        %v2983 = vpow.pop %v2982
        %v2984 = vmul.f32 %v2934, 1.442695
        %v2985 = vpow.pop %v2984
        %v2986 = vmul.f32 %v2935, 1.442695
        %v2987 = vpow.pop %v2986
        %v2988 = vmul.f32 %v2936, 1.442695
        %v2989 = vpow.pop %v2988
        %v2990 = vmul.f32 %v2937, 1.442695
        %v2991 = vpow.pop %v2990
        %v2992 = vmul.f32 %v2938, 1.442695
        %v2993 = vpow.pop %v2992
        %v2994 = vmul.f32 %v2939, 1.442695
        %v2995 = vpow.pop %v2994
        %v2996 = vmul.f32 %v2940, 1.442695
        %v2997 = vpow.pop %v2996
        %v2998 = vmul.f32 %v2941, 1.442695
        %v2999 = vpow.pop %v2998
        %v3000 = vmul.f32 %v2942, 1.442695
        %v3001 = vpow.pop %v3000
        %v3002 = vmul.f32 %v2943, 1.442695
        %v3003 = vpow.pop %v3002
        %v3004 = vmul.f32 %v2944, 1.442695
        %v3005 = vpow.pop %v3004
        %v3006 = vmul.f32 %v2945, 1.442695
        %v3007 = vpow.pop %v3006
        %v3008 = vmul.f32 %v2946, 1.442695
        %v3009 = vpow.pop %v3008
        %v3010 = vmul.f32 %v2947, 1.442695
        %v3011 = vpow.pop %v3010
        %v3012 = vadd.f32 %v2949, %v2951
        %3013 = vadd.xlane.f32.xlu0 %v3012
        %v3014 = vpop.xlane.xlu0 %3013
        %v3015 = vadd.f32 %v2953, %v2955
        %3016 = vadd.xlane.f32.xlu0 %v3015
        %v3017 = vpop.xlane.xlu0 %3016
        %v3018 = vadd.f32 %v2957, %v2959
        %3019 = vadd.xlane.f32.xlu0 %v3018
        %v3020 = vpop.xlane.xlu0 %3019
        %v3021 = vadd.f32 %v2961, %v2963
        %3022 = vadd.xlane.f32.xlu0 %v3021
        %v3023 = vpop.xlane.xlu0 %3022
        %v3024 = vadd.f32 %v2965, %v2967
        %3025 = vadd.xlane.f32.xlu0 %v3024
        %v3026 = vpop.xlane.xlu0 %3025
        %v3027 = vadd.f32 %v2969, %v2971
        %3028 = vadd.xlane.f32.xlu0 %v3027
        %v3029 = vpop.xlane.xlu0 %3028
        %v3030 = vadd.f32 %v2973, %v2975
        %3031 = vadd.xlane.f32.xlu0 %v3030
        %v3032 = vpop.xlane.xlu0 %3031
        %v3033 = vadd.f32 %v2977, %v2979
        %3034 = vadd.xlane.f32.xlu0 %v3033
        %v3035 = vpop.xlane.xlu0 %3034
        %v3036 = vadd.f32 %v2981, %v2983
        %3037 = vadd.xlane.f32.xlu0 %v3036
        %v3038 = vpop.xlane.xlu0 %3037
        %v3039 = vadd.f32 %v2985, %v2987
        %3040 = vadd.xlane.f32.xlu0 %v3039
        %v3041 = vpop.xlane.xlu0 %3040
        %v3042 = vadd.f32 %v2989, %v2991
        %3043 = vadd.xlane.f32.xlu0 %v3042
        %v3044 = vpop.xlane.xlu0 %3043
        %v3045 = vadd.f32 %v2993, %v2995
        %3046 = vadd.xlane.f32.xlu0 %v3045
        %v3047 = vpop.xlane.xlu0 %3046
        %v3048 = vadd.f32 %v2997, %v2999
        %3049 = vadd.xlane.f32.xlu0 %v3048
        %v3050 = vpop.xlane.xlu0 %3049
        %v3051 = vadd.f32 %v3001, %v3003
        %3052 = vadd.xlane.f32.xlu0 %v3051
        %v3053 = vpop.xlane.xlu0 %3052
        %v3054 = vadd.f32 %v3005, %v3007
        %3055 = vadd.xlane.f32.xlu0 %v3054
        %v3056 = vpop.xlane.xlu0 %3055
        %v3057 = vadd.f32 %v3009, %v3011
        %3058 = vadd.xlane.f32.xlu0 %v3057
        %v3059 = vpop.xlane.xlu0 %3058
        %v3060 = vrcp.pop %v3014
        %v3061 = vrcp.pop %v3017
        %v3062 = vrcp.pop %v3020
        %v3063 = vrcp.pop %v3023
        %v3064 = vrcp.pop %v3026
        %v3065 = vrcp.pop %v3029
        %v3066 = vrcp.pop %v3032
        %v3067 = vrcp.pop %v3035
        %v3068 = vrcp.pop %v3038
        %v3069 = vrcp.pop %v3041
        %v3070 = vrcp.pop %v3044
        %v3071 = vrcp.pop %v3047
        %v3072 = vrcp.pop %v3050
        %v3073 = vrcp.pop %v3053
        %v3074 = vrcp.pop %v3056
        %v3075 = vrcp.pop %v3059
        %v3076 = vmul.f32 %v2949, %v3060
        %v3077 = vmul.f32 %v2951, %v3060
        %v3078 = vmul.f32 %v2953, %v3061
        %v3079 = vmul.f32 %v2955, %v3061
        %v3080 = vmul.f32 %v2957, %v3062
        %v3081 = vmul.f32 %v2959, %v3062
        %v3082 = vmul.f32 %v2961, %v3063
        %v3083 = vmul.f32 %v2963, %v3063
        %v3084 = vmul.f32 %v2965, %v3064
        %v3085 = vmul.f32 %v2967, %v3064
        %v3086 = vmul.f32 %v2969, %v3065
        %v3087 = vmul.f32 %v2971, %v3065
        %v3088 = vmul.f32 %v2973, %v3066
        %v3089 = vmul.f32 %v2975, %v3066
        %v3090 = vmul.f32 %v2977, %v3067
        %v3091 = vmul.f32 %v2979, %v3067
        %v3092 = vmul.f32 %v2981, %v3068
        %v3093 = vmul.f32 %v2983, %v3068
        %v3094 = vmul.f32 %v2985, %v3069
        %v3095 = vmul.f32 %v2987, %v3069
        %v3096 = vmul.f32 %v2989, %v3070
        %v3097 = vmul.f32 %v2991, %v3070
        %v3098 = vmul.f32 %v2993, %v3071
        %v3099 = vmul.f32 %v2995, %v3071
        %v3100 = vmul.f32 %v2997, %v3072
        %v3101 = vmul.f32 %v2999, %v3072
        %v3102 = vmul.f32 %v3001, %v3073
        %v3103 = vmul.f32 %v3003, %v3073
        %v3104 = vmul.f32 %v3005, %v3074
        %v3105 = vmul.f32 %v3007, %v3074
        %v3106 = vmul.f32 %v3009, %v3075
        %v3107 = vmul.f32 %v3011, %v3075
        %v3108 = vpack.c.bf16 %v3078, %v3076
        %v3109 = vpack.c.bf16 %v3079, %v3077
        %v3110 = vpack.c.bf16 %v3082, %v3080
        %v3111 = vpack.c.bf16 %v3083, %v3081
        %v3112 = vpack.c.bf16 %v3086, %v3084
        %v3113 = vpack.c.bf16 %v3087, %v3085
        %v3114 = vpack.c.bf16 %v3090, %v3088
        %v3115 = vpack.c.bf16 %v3091, %v3089
        %v3116 = vpack.c.bf16 %v3094, %v3092
        %v3117 = vpack.c.bf16 %v3095, %v3093
        %v3118 = vpack.c.bf16 %v3098, %v3096
        %v3119 = vpack.c.bf16 %v3099, %v3097
        %v3120 = vpack.c.bf16 %v3102, %v3100
        %v3121 = vpack.c.bf16 %v3103, %v3101
        %v3122 = vpack.c.bf16 %v3106, %v3104
        %v3123 = vpack.c.bf16 %v3107, %v3105
        %v3124 = vld [vmem:[#allocation3 + $0x8] sm:$0xff]
        %v3125 = vld [vmem:[#allocation3 + $0x18] sm:$0xff]
        %v3126 = vld [vmem:[#allocation3 + $0x28] sm:$0xff]
        %v3127 = vld [vmem:[#allocation3 + $0x38] sm:$0xff]
        %v3128 = vld [vmem:[#allocation3 + $0x48] sm:$0xff]
        %v3129 = vld [vmem:[#allocation3 + $0x58] sm:$0xff]
        %v3130 = vld [vmem:[#allocation3 + $0x68] sm:$0xff]
        %v3131 = vld [vmem:[#allocation3 + $0x78] sm:$0xff]
        %v3132 = vld [vmem:[#allocation3 + $0x88] sm:$0xff]
        %v3133 = vld [vmem:[#allocation3 + $0x98] sm:$0xff]
        %v3134 = vld [vmem:[#allocation3 + $0xa8] sm:$0xff]
        %v3135 = vld [vmem:[#allocation3 + $0xb8] sm:$0xff]
        %v3136 = vld [vmem:[#allocation3 + $0xc8] sm:$0xff]
        %v3137 = vld [vmem:[#allocation3 + $0xd8] sm:$0xff]
        %v3138 = vld [vmem:[#allocation3 + $0xe8] sm:$0xff]
        %v3139 = vld [vmem:[#allocation3 + $0xf8] sm:$0xff]
        %3140 = vmatprep.subr.bf16.mxu0 0
        %3141 = vmatpush1.bf16.msra.mxu0 %v3124
        %3142 = vmatprep.subr.bf16.mxu0 0
        %3143 = vmatpush1.bf16.msra.mxu0 %v3125
        %3144 = vmatprep.subr.bf16.mxu0 0
        %3145 = vmatpush1.bf16.msra.mxu0 %v3126
        %3146 = vmatprep.subr.bf16.mxu0 0
        %3147 = vmatpush1.bf16.msra.mxu0 %v3127
        %3148 = vmatprep.subr.bf16.mxu0 0
        %3149 = vmatpush1.bf16.msra.mxu0 %v3128
        %3150 = vmatprep.subr.bf16.mxu0 0
        %3151 = vmatpush1.bf16.msra.mxu0 %v3129
        %3152 = vmatprep.subr.bf16.mxu0 0
        %3153 = vmatpush1.bf16.msra.mxu0 %v3130
        %3154 = vmatprep.subr.bf16.mxu0 0
        %3155 = vmatpush1.bf16.msra.mxu0 %v3131
        %3156 = vmatprep.subr.bf16.mxu0 0
        %3157 = vmatpush1.bf16.msra.mxu0 %v3132
        %3158 = vmatprep.subr.bf16.mxu0 0
        %3159 = vmatpush1.bf16.msra.mxu0 %v3133
        %3160 = vmatprep.subr.bf16.mxu0 0
        %3161 = vmatpush1.bf16.msra.mxu0 %v3134
        %3162 = vmatprep.subr.bf16.mxu0 0
        %3163 = vmatpush1.bf16.msra.mxu0 %v3135
        %3164 = vmatprep.subr.bf16.mxu0 0
        %3165 = vmatpush1.bf16.msra.mxu0 %v3136
        %3166 = vmatprep.subr.bf16.mxu0 0
        %3167 = vmatpush1.bf16.msra.mxu0 %v3137
        %3168 = vmatprep.subr.bf16.mxu0 0
        %3169 = vmatpush1.bf16.msra.mxu0 %v3138
        %3170 = vmatprep.subr.bf16.mxu0 0
        %3171 = vmatpush1.bf16.msra.mxu0 %v3139
        %3172 = vmatprep.mubr.bf16.mxu0 %v3109
        %3173 = vmatmul.mubr.bf16.gmra.mrb[0].mxu0 %v3108
        %v3174 = vpop.f32.mrb[0].mxu0
        %v3175 = vadd.f32 0.0, %v3174
        %v3176 = vpop.f32.mrb[0].mxu0
        %v3177 = vpop.f32.mrb[0].mxu0
        %v3178 = vadd.f32 0.0, %v3177
        %v3179 = vpop.f32.mrb[0].mxu0
        %3180 = vmatprep.mubr.bf16.mxu0 %v3111
        %3181 = vmatmul.mubr.bf16.gmra.mrb[0].mxu0 %v3110
        %v3182 = vpop.f32.mrb[0].mxu0
        %v3183 = vadd.f32 0.0, %v3182
        %v3184 = vpop.f32.mrb[0].mxu0
        %v3185 = vpop.f32.mrb[0].mxu0
        %v3186 = vadd.f32 0.0, %v3185
        %v3187 = vpop.f32.mrb[0].mxu0
        %3188 = vmatprep.mubr.bf16.mxu0 %v3113
        %3189 = vmatmul.mubr.bf16.gmra.mrb[0].mxu0 %v3112
        %v3190 = vpop.f32.mrb[0].mxu0
        %v3191 = vadd.f32 0.0, %v3190
        %v3192 = vpop.f32.mrb[0].mxu0
        %v3193 = vpop.f32.mrb[0].mxu0
        %v3194 = vadd.f32 0.0, %v3193
        %v3195 = vpop.f32.mrb[0].mxu0
        %3196 = vmatprep.mubr.bf16.mxu0 %v3115
        %3197 = vmatmul.mubr.bf16.gmra.mrb[0].mxu0 %v3114
        %v3198 = vpop.f32.mrb[0].mxu0
        %v3199 = vadd.f32 0.0, %v3198
        %v3200 = vpop.f32.mrb[0].mxu0
        %v3201 = vpop.f32.mrb[0].mxu0
        %v3202 = vadd.f32 0.0, %v3201
        %v3203 = vpop.f32.mrb[0].mxu0
        %3204 = vmatprep.mubr.bf16.mxu0 %v3117
        %3205 = vmatmul.mubr.bf16.gmra.mrb[0].mxu0 %v3116
        %v3206 = vpop.f32.mrb[0].mxu0
        %v3207 = vadd.f32 0.0, %v3206
        %v3208 = vpop.f32.mrb[0].mxu0
        %v3209 = vpop.f32.mrb[0].mxu0
        %v3210 = vadd.f32 0.0, %v3209
        %v3211 = vpop.f32.mrb[0].mxu0
        %3212 = vmatprep.mubr.bf16.mxu0 %v3119
        %3213 = vmatmul.mubr.bf16.gmra.mrb[0].mxu0 %v3118
        %v3214 = vpop.f32.mrb[0].mxu0
        %v3215 = vadd.f32 0.0, %v3214
        %v3216 = vpop.f32.mrb[0].mxu0
        %v3217 = vpop.f32.mrb[0].mxu0
        %v3218 = vadd.f32 0.0, %v3217
        %v3219 = vpop.f32.mrb[0].mxu0
        %3220 = vmatprep.mubr.bf16.mxu0 %v3121
        %3221 = vmatmul.mubr.bf16.gmra.mrb[0].mxu0 %v3120
        %v3222 = vpop.f32.mrb[0].mxu0
        %v3223 = vadd.f32 0.0, %v3222
        %v3224 = vpop.f32.mrb[0].mxu0
        %v3225 = vpop.f32.mrb[0].mxu0
        %v3226 = vadd.f32 0.0, %v3225
        %v3227 = vpop.f32.mrb[0].mxu0
        %3228 = vmatprep.mubr.bf16.mxu0 %v3123
        %3229 = vmatmul.mubr.bf16.gmra.mrb[0].mxu0 %v3122
        %v3230 = vpop.f32.mrb[0].mxu0
        %v3231 = vadd.f32 0.0, %v3230
        %v3232 = vpop.f32.mrb[0].mxu0
        %v3233 = vpop.f32.mrb[0].mxu0
        %v3234 = vadd.f32 0.0, %v3233
        %v3235 = vpop.f32.mrb[0].mxu0
        %3236 = vdwg.mxu0
        %v3237 = vpack.c.bf16 %v3178, %v3175
        %v3238 = vpack.c.bf16 %v3186, %v3183
        %v3239 = vpack.c.bf16 %v3194, %v3191
        %v3240 = vpack.c.bf16 %v3202, %v3199
        %v3241 = vpack.c.bf16 %v3210, %v3207
        %v3242 = vpack.c.bf16 %v3218, %v3215
        %v3243 = vpack.c.bf16 %v3226, %v3223
        %v3244 = vpack.c.bf16 %v3234, %v3231
        %3245 = vst [vmem:[#allocation4 + $0x8] sm:$0xff] %v3237
        %3246 = vst [vmem:[#allocation4 + $0x18] sm:$0xff] %v3238
        %3247 = vst [vmem:[#allocation4 + $0x28] sm:$0xff] %v3239
        %3248 = vst [vmem:[#allocation4 + $0x38] sm:$0xff] %v3240
        %3249 = vst [vmem:[#allocation4 + $0x48] sm:$0xff] %v3241
        %3250 = vst [vmem:[#allocation4 + $0x58] sm:$0xff] %v3242
        %3251 = vst [vmem:[#allocation4 + $0x68] sm:$0xff] %v3243
        %3252 = vst [vmem:[#allocation4 + $0x78] sm:$0xff] %v3244
        %v3253 = vld [vmem:[#allocation4] sm:$0xff]
        %v3254 = vld [vmem:[#allocation4 + $0x8] sm:$0xff]
        %v3255 = vld [vmem:[#allocation4 + $0x10] sm:$0xff]
        %v3256 = vld [vmem:[#allocation4 + $0x18] sm:$0xff]
        %v3257 = vld [vmem:[#allocation4 + $0x20] sm:$0xff]
        %v3258 = vld [vmem:[#allocation4 + $0x28] sm:$0xff]
        %v3259 = vld [vmem:[#allocation4 + $0x30] sm:$0xff]
        %v3260 = vld [vmem:[#allocation4 + $0x38] sm:$0xff]
        %v3261 = vld [vmem:[#allocation4 + $0x40] sm:$0xff]
        %v3262 = vld [vmem:[#allocation4 + $0x48] sm:$0xff]
        %v3263 = vld [vmem:[#allocation4 + $0x50] sm:$0xff]
        %v3264 = vld [vmem:[#allocation4 + $0x58] sm:$0xff]
        %v3265 = vld [vmem:[#allocation4 + $0x60] sm:$0xff]
        %v3266 = vld [vmem:[#allocation4 + $0x68] sm:$0xff]
        %v3267 = vld [vmem:[#allocation4 + $0x70] sm:$0xff]
        %v3268 = vld [vmem:[#allocation4 + $0x78] sm:$0xff]
        %v3269 = vld [vmem:[#allocation11] sm:$0xff]
        %v3270 = vld [vmem:[#allocation11 + $0x8] sm:$0xff]
        %v3271 = vld [vmem:[#allocation11 + $0x10] sm:$0xff]
        %v3272 = vld [vmem:[#allocation11 + $0x18] sm:$0xff]
        %v3273 = vld [vmem:[#allocation11 + $0x20] sm:$0xff]
        %v3274 = vld [vmem:[#allocation11 + $0x28] sm:$0xff]
        %v3275 = vld [vmem:[#allocation11 + $0x30] sm:$0xff]
        %v3276 = vld [vmem:[#allocation11 + $0x38] sm:$0xff]
        %v3277 = vld [vmem:[#allocation11 + $0x40] sm:$0xff]
        %v3278 = vld [vmem:[#allocation11 + $0x48] sm:$0xff]
        %v3279 = vld [vmem:[#allocation11 + $0x50] sm:$0xff]
        %v3280 = vld [vmem:[#allocation11 + $0x58] sm:$0xff]
        %v3281 = vld [vmem:[#allocation11 + $0x60] sm:$0xff]
        %v3282 = vld [vmem:[#allocation11 + $0x68] sm:$0xff]
        %v3283 = vld [vmem:[#allocation11 + $0x70] sm:$0xff]
        %v3284 = vld [vmem:[#allocation11 + $0x78] sm:$0xff]
        %v3285 = vld [vmem:[#allocation11 + $0x80] sm:$0xff]
        %v3286 = vld [vmem:[#allocation11 + $0x88] sm:$0xff]
        %v3287 = vld [vmem:[#allocation11 + $0x90] sm:$0xff]
        %v3288 = vld [vmem:[#allocation11 + $0x98] sm:$0xff]
        %v3289 = vld [vmem:[#allocation11 + $0xa0] sm:$0xff]
        %v3290 = vld [vmem:[#allocation11 + $0xa8] sm:$0xff]
        %v3291 = vld [vmem:[#allocation11 + $0xb0] sm:$0xff]
        %v3292 = vld [vmem:[#allocation11 + $0xb8] sm:$0xff]
        %v3293 = vld [vmem:[#allocation11 + $0xc0] sm:$0xff]
        %v3294 = vld [vmem:[#allocation11 + $0xc8] sm:$0xff]
        %v3295 = vld [vmem:[#allocation11 + $0xd0] sm:$0xff]
        %v3296 = vld [vmem:[#allocation11 + $0xd8] sm:$0xff]
        %v3297 = vld [vmem:[#allocation11 + $0xe0] sm:$0xff]
        %v3298 = vld [vmem:[#allocation11 + $0xe8] sm:$0xff]
        %v3299 = vld [vmem:[#allocation11 + $0xf0] sm:$0xff]
        %v3300 = vld [vmem:[#allocation11 + $0xf8] sm:$0xff]
        %v3301 = vld [vmem:[%s5] sm:$0x3]
        %v3303 = vlaneseq
        %v3304 = vshrl.u32 %v3303, 7
        %v3305 = vsub.s32 0, %v3304
        %v3306 = vrot.slane %v3301, %v3305
        %v3307 = vlaneseq
        %v3308 = vshrl.u32 %v3307, 7
        %v3309 = vsub.s32 1, %v3308
        %v3310 = vrot.slane %v3301, %v3309
        %v3345 = vunpack.c.l.b16 %v3269
        %v3346 = vunpack.c.h.b16 %v3269
        %v3347 = vunpack.c.l.b16 %v3270
        %v3348 = vunpack.c.h.b16 %v3270
        %v3349 = vunpack.c.l.b16 %v3271
        %v3350 = vunpack.c.h.b16 %v3271
        %v3351 = vunpack.c.l.b16 %v3272
        %v3352 = vunpack.c.h.b16 %v3272
        %v3353 = vunpack.c.l.b16 %v3273
        %v3354 = vunpack.c.h.b16 %v3273
        %v3355 = vunpack.c.l.b16 %v3274
        %v3356 = vunpack.c.h.b16 %v3274
        %v3357 = vunpack.c.l.b16 %v3275
        %v3358 = vunpack.c.h.b16 %v3275
        %v3359 = vunpack.c.l.b16 %v3276
        %v3360 = vunpack.c.h.b16 %v3276
        %v3361 = vunpack.c.l.b16 %v3277
        %v3362 = vunpack.c.h.b16 %v3277
        %v3363 = vunpack.c.l.b16 %v3278
        %v3364 = vunpack.c.h.b16 %v3278
        %v3365 = vunpack.c.l.b16 %v3279
        %v3366 = vunpack.c.h.b16 %v3279
        %v3367 = vunpack.c.l.b16 %v3280
        %v3368 = vunpack.c.h.b16 %v3280
        %v3369 = vunpack.c.l.b16 %v3281
        %v3370 = vunpack.c.h.b16 %v3281
        %v3371 = vunpack.c.l.b16 %v3282
        %v3372 = vunpack.c.h.b16 %v3282
        %v3373 = vunpack.c.l.b16 %v3283
        %v3374 = vunpack.c.h.b16 %v3283
        %v3375 = vunpack.c.l.b16 %v3284
        %v3376 = vunpack.c.h.b16 %v3284
        %v3377 = vunpack.c.l.b16 %v3285
        %v3378 = vunpack.c.h.b16 %v3285
        %v3379 = vunpack.c.l.b16 %v3286
        %v3380 = vunpack.c.h.b16 %v3286
        %v3381 = vunpack.c.l.b16 %v3287
        %v3382 = vunpack.c.h.b16 %v3287
        %v3383 = vunpack.c.l.b16 %v3288
        %v3384 = vunpack.c.h.b16 %v3288
        %v3385 = vunpack.c.l.b16 %v3289
        %v3386 = vunpack.c.h.b16 %v3289
        %v3387 = vunpack.c.l.b16 %v3290
        %v3388 = vunpack.c.h.b16 %v3290
        %v3389 = vunpack.c.l.b16 %v3291
        %v3390 = vunpack.c.h.b16 %v3291
        %v3391 = vunpack.c.l.b16 %v3292
        %v3392 = vunpack.c.h.b16 %v3292
        %v3393 = vunpack.c.l.b16 %v3293
        %v3394 = vunpack.c.h.b16 %v3293
        %v3395 = vunpack.c.l.b16 %v3294
        %v3396 = vunpack.c.h.b16 %v3294
        %v3397 = vunpack.c.l.b16 %v3295
        %v3398 = vunpack.c.h.b16 %v3295
        %v3399 = vunpack.c.l.b16 %v3296
        %v3400 = vunpack.c.h.b16 %v3296
        %v3401 = vunpack.c.l.b16 %v3297
        %v3402 = vunpack.c.h.b16 %v3297
        %v3403 = vunpack.c.l.b16 %v3298
        %v3404 = vunpack.c.h.b16 %v3298
        %v3405 = vunpack.c.l.b16 %v3299
        %v3406 = vunpack.c.h.b16 %v3299
        %v3407 = vunpack.c.l.b16 %v3300
        %v3408 = vunpack.c.h.b16 %v3300
        %v3409 = vpack.c.b16 %v3347, %v3345
        %v3410 = vpack.c.b16 %v3348, %v3346
        %v3411 = vpack.c.b16 %v3351, %v3349
        %v3412 = vpack.c.b16 %v3352, %v3350
        %v3413 = vpack.c.b16 %v3355, %v3353
        %v3414 = vpack.c.b16 %v3356, %v3354
        %v3415 = vpack.c.b16 %v3359, %v3357
        %v3416 = vpack.c.b16 %v3360, %v3358
        %v3417 = vpack.c.b16 %v3363, %v3361
        %v3418 = vpack.c.b16 %v3364, %v3362
        %v3419 = vpack.c.b16 %v3367, %v3365
        %v3420 = vpack.c.b16 %v3368, %v3366
        %v3421 = vpack.c.b16 %v3371, %v3369
        %v3422 = vpack.c.b16 %v3372, %v3370
        %v3423 = vpack.c.b16 %v3375, %v3373
        %v3424 = vpack.c.b16 %v3376, %v3374
        %v3425 = vpack.c.b16 %v3379, %v3377
        %v3426 = vpack.c.b16 %v3380, %v3378
        %v3427 = vpack.c.b16 %v3383, %v3381
        %v3428 = vpack.c.b16 %v3384, %v3382
        %v3429 = vpack.c.b16 %v3387, %v3385
        %v3430 = vpack.c.b16 %v3388, %v3386
        %v3431 = vpack.c.b16 %v3391, %v3389
        %v3432 = vpack.c.b16 %v3392, %v3390
        %v3433 = vpack.c.b16 %v3395, %v3393
        %v3434 = vpack.c.b16 %v3396, %v3394
        %v3435 = vpack.c.b16 %v3399, %v3397
        %v3436 = vpack.c.b16 %v3400, %v3398
        %v3437 = vpack.c.b16 %v3403, %v3401
        %v3438 = vpack.c.b16 %v3404, %v3402
        %v3439 = vpack.c.b16 %v3407, %v3405
        %v3440 = vpack.c.b16 %v3408, %v3406
        %3473 = vmatprep.subr.bf16.mxu0 %v3410
        %3474 = vmatpush1.bf16.msra.mxu0 %v3409
        %3475 = vmatprep.subr.bf16.mxu0 %v3412
        %3476 = vmatpush1.bf16.msra.mxu0 %v3411
        %3477 = vmatprep.subr.bf16.mxu0 %v3414
        %3478 = vmatpush1.bf16.msra.mxu0 %v3413
        %3479 = vmatprep.subr.bf16.mxu0 %v3416
        %3480 = vmatpush1.bf16.msra.mxu0 %v3415
        %3481 = vmatprep.subr.bf16.mxu0 %v3418
        %3482 = vmatpush1.bf16.msra.mxu0 %v3417
        %3483 = vmatprep.subr.bf16.mxu0 %v3420
        %3484 = vmatpush1.bf16.msra.mxu0 %v3419
        %3485 = vmatprep.subr.bf16.mxu0 %v3422
        %3486 = vmatpush1.bf16.msra.mxu0 %v3421
        %3487 = vmatprep.subr.bf16.mxu0 %v3424
        %3488 = vmatpush1.bf16.msra.mxu0 %v3423
        %3489 = vmatprep.subr.bf16.mxu0 %v3426
        %3490 = vmatpush1.bf16.msra.mxu0 %v3425
        %3491 = vmatprep.subr.bf16.mxu0 %v3428
        %3492 = vmatpush1.bf16.msra.mxu0 %v3427
        %3493 = vmatprep.subr.bf16.mxu0 %v3430
        %3494 = vmatpush1.bf16.msra.mxu0 %v3429
        %3495 = vmatprep.subr.bf16.mxu0 %v3432
        %3496 = vmatpush1.bf16.msra.mxu0 %v3431
        %3497 = vmatprep.subr.bf16.mxu0 %v3434
        %3498 = vmatpush1.bf16.msra.mxu0 %v3433
        %3499 = vmatprep.subr.bf16.mxu0 %v3436
        %3500 = vmatpush1.bf16.msra.mxu0 %v3435
        %3501 = vmatprep.subr.bf16.mxu0 %v3438
        %3502 = vmatpush1.bf16.msra.mxu0 %v3437
        %3503 = vmatprep.subr.bf16.mxu0 %v3440
        %3504 = vmatpush1.bf16.msra.mxu0 %v3439
        %3505 = vmatprep.mubr.bf16.mxu0 %v3254
        %3506 = vmatmul.mubr.bf16.gmra.mrb[0].mxu0 %v3253
        %v3507 = vpop.f32.mrb[0].mxu0
        %v3508 = vadd.f32 %v3306, %v3507
        %v3509 = vpop.f32.mrb[0].mxu0
        %v3510 = vadd.f32 %v3310, %v3509
        %v3511 = vpop.f32.mrb[0].mxu0
        %v3512 = vadd.f32 %v3306, %v3511
        %v3513 = vpop.f32.mrb[0].mxu0
        %v3514 = vadd.f32 %v3310, %v3513
        %3515 = vmatprep.mubr.bf16.mxu0 %v3256
        %3516 = vmatmul.mubr.bf16.gmra.mrb[0].mxu0 %v3255
        %v3517 = vpop.f32.mrb[0].mxu0
        %v3518 = vadd.f32 %v3306, %v3517
        %v3519 = vpop.f32.mrb[0].mxu0
        %v3520 = vadd.f32 %v3310, %v3519
        %v3521 = vpop.f32.mrb[0].mxu0
        %v3522 = vadd.f32 %v3306, %v3521
        %v3523 = vpop.f32.mrb[0].mxu0
        %v3524 = vadd.f32 %v3310, %v3523
        %3525 = vmatprep.mubr.bf16.mxu0 %v3258
        %3526 = vmatmul.mubr.bf16.gmra.mrb[0].mxu0 %v3257
        %v3527 = vpop.f32.mrb[0].mxu0
        %v3528 = vadd.f32 %v3306, %v3527
        %v3529 = vpop.f32.mrb[0].mxu0
        %v3530 = vadd.f32 %v3310, %v3529
        %v3531 = vpop.f32.mrb[0].mxu0
        %v3532 = vadd.f32 %v3306, %v3531
        %v3533 = vpop.f32.mrb[0].mxu0
        %v3534 = vadd.f32 %v3310, %v3533
        %3535 = vmatprep.mubr.bf16.mxu0 %v3260
        %3536 = vmatmul.mubr.bf16.gmra.mrb[0].mxu0 %v3259
        %v3537 = vpop.f32.mrb[0].mxu0
        %v3538 = vadd.f32 %v3306, %v3537
        %v3539 = vpop.f32.mrb[0].mxu0
        %v3540 = vadd.f32 %v3310, %v3539
        %v3541 = vpop.f32.mrb[0].mxu0
        %v3542 = vadd.f32 %v3306, %v3541
        %v3543 = vpop.f32.mrb[0].mxu0
        %v3544 = vadd.f32 %v3310, %v3543
        %3545 = vmatprep.mubr.bf16.mxu0 %v3262
        %3546 = vmatmul.mubr.bf16.gmra.mrb[0].mxu0 %v3261
        %v3547 = vpop.f32.mrb[0].mxu0
        %v3548 = vadd.f32 %v3306, %v3547
        %v3549 = vpop.f32.mrb[0].mxu0
        %v3550 = vadd.f32 %v3310, %v3549
        %v3551 = vpop.f32.mrb[0].mxu0
        %v3552 = vadd.f32 %v3306, %v3551
        %v3553 = vpop.f32.mrb[0].mxu0
        %v3554 = vadd.f32 %v3310, %v3553
        %3555 = vmatprep.mubr.bf16.mxu0 %v3264
        %3556 = vmatmul.mubr.bf16.gmra.mrb[0].mxu0 %v3263
        %v3557 = vpop.f32.mrb[0].mxu0
        %v3558 = vadd.f32 %v3306, %v3557
        %v3559 = vpop.f32.mrb[0].mxu0
        %v3560 = vadd.f32 %v3310, %v3559
        %v3561 = vpop.f32.mrb[0].mxu0
        %v3562 = vadd.f32 %v3306, %v3561
        %v3563 = vpop.f32.mrb[0].mxu0
        %v3564 = vadd.f32 %v3310, %v3563
        %3565 = vmatprep.mubr.bf16.mxu0 %v3266
        %3566 = vmatmul.mubr.bf16.gmra.mrb[0].mxu0 %v3265
        %v3567 = vpop.f32.mrb[0].mxu0
        %v3568 = vadd.f32 %v3306, %v3567
        %v3569 = vpop.f32.mrb[0].mxu0
        %v3570 = vadd.f32 %v3310, %v3569
        %v3571 = vpop.f32.mrb[0].mxu0
        %v3572 = vadd.f32 %v3306, %v3571
        %v3573 = vpop.f32.mrb[0].mxu0
        %v3574 = vadd.f32 %v3310, %v3573
        %3575 = vmatprep.mubr.bf16.mxu0 %v3268
        %3576 = vmatmul.mubr.bf16.gmra.mrb[0].mxu0 %v3267
        %v3577 = vpop.f32.mrb[0].mxu0
        %v3578 = vadd.f32 %v3306, %v3577
        %v3579 = vpop.f32.mrb[0].mxu0
        %v3580 = vadd.f32 %v3310, %v3579
        %v3581 = vpop.f32.mrb[0].mxu0
        %v3582 = vadd.f32 %v3306, %v3581
        %v3583 = vpop.f32.mrb[0].mxu0
        %v3584 = vadd.f32 %v3310, %v3583
        %3585 = vdwg.mxu0
        %v3586 = vadd.f32 %v1736, %v3508
        %v3587 = vadd.f32 %v1737, %v3510
        %v3588 = vadd.f32 %v1738, %v3512
        %v3589 = vadd.f32 %v1739, %v3514
        %v3590 = vadd.f32 %v1740, %v3518
        %v3591 = vadd.f32 %v1741, %v3520
        %v3592 = vadd.f32 %v1742, %v3522
        %v3593 = vadd.f32 %v1743, %v3524
        %v3594 = vadd.f32 %v1744, %v3528
        %v3595 = vadd.f32 %v1745, %v3530
        %v3596 = vadd.f32 %v1746, %v3532
        %v3597 = vadd.f32 %v1747, %v3534
        %v3598 = vadd.f32 %v1748, %v3538
        %v3599 = vadd.f32 %v1749, %v3540
        %v3600 = vadd.f32 %v1750, %v3542
        %v3601 = vadd.f32 %v1751, %v3544
        %v3602 = vadd.f32 %v1752, %v3548
        %v3603 = vadd.f32 %v1753, %v3550
        %v3604 = vadd.f32 %v1754, %v3552
        %v3605 = vadd.f32 %v1755, %v3554
        %v3606 = vadd.f32 %v1756, %v3558
        %v3607 = vadd.f32 %v1757, %v3560
        %v3608 = vadd.f32 %v1758, %v3562
        %v3609 = vadd.f32 %v1759, %v3564
        %v3610 = vadd.f32 %v1760, %v3568
        %v3611 = vadd.f32 %v1761, %v3570
        %v3612 = vadd.f32 %v1762, %v3572
        %v3613 = vadd.f32 %v1763, %v3574
        %v3614 = vadd.f32 %v1764, %v3578
        %v3615 = vadd.f32 %v1765, %v3580
        %v3616 = vadd.f32 %v1766, %v3582
        %v3617 = vadd.f32 %v1767, %v3584
        %v3618 = vld [vmem:[%s6] sm:$0x3]
        %v3619 = vld [vmem:[%s7] sm:$0x3]
        %v3620 = vadd.f32 %v3586, %v3587
        %3621 = vadd.xlane.f32.xlu0 %v3620
        %v3622 = vpop.xlane.xlu0 %3621
        %v3623 = vadd.f32 %v3588, %v3589
        %3624 = vadd.xlane.f32.xlu0 %v3623
        %v3625 = vpop.xlane.xlu0 %3624
        %v3626 = vadd.f32 %v3590, %v3591
        %3627 = vadd.xlane.f32.xlu0 %v3626
        %v3628 = vpop.xlane.xlu0 %3627
        %v3629 = vadd.f32 %v3592, %v3593
        %3630 = vadd.xlane.f32.xlu0 %v3629
        %v3631 = vpop.xlane.xlu0 %3630
        %v3632 = vadd.f32 %v3594, %v3595
        %3633 = vadd.xlane.f32.xlu0 %v3632
        %v3634 = vpop.xlane.xlu0 %3633
        %v3635 = vadd.f32 %v3596, %v3597
        %3636 = vadd.xlane.f32.xlu0 %v3635
        %v3637 = vpop.xlane.xlu0 %3636
        %v3638 = vadd.f32 %v3598, %v3599
        %3639 = vadd.xlane.f32.xlu0 %v3638
        %v3640 = vpop.xlane.xlu0 %3639
        %v3641 = vadd.f32 %v3600, %v3601
        %3642 = vadd.xlane.f32.xlu0 %v3641
        %v3643 = vpop.xlane.xlu0 %3642
        %v3644 = vadd.f32 %v3602, %v3603
        %3645 = vadd.xlane.f32.xlu0 %v3644
        %v3646 = vpop.xlane.xlu0 %3645
        %v3647 = vadd.f32 %v3604, %v3605
        %3648 = vadd.xlane.f32.xlu0 %v3647
        %v3649 = vpop.xlane.xlu0 %3648
        %v3650 = vadd.f32 %v3606, %v3607
        %3651 = vadd.xlane.f32.xlu0 %v3650
        %v3652 = vpop.xlane.xlu0 %3651
        %v3653 = vadd.f32 %v3608, %v3609
        %3654 = vadd.xlane.f32.xlu0 %v3653
        %v3655 = vpop.xlane.xlu0 %3654
        %v3656 = vadd.f32 %v3610, %v3611
        %3657 = vadd.xlane.f32.xlu0 %v3656
        %v3658 = vpop.xlane.xlu0 %3657
        %v3659 = vadd.f32 %v3612, %v3613
        %3660 = vadd.xlane.f32.xlu0 %v3659
        %v3661 = vpop.xlane.xlu0 %3660
        %v3662 = vadd.f32 %v3614, %v3615
        %3663 = vadd.xlane.f32.xlu0 %v3662
        %v3664 = vpop.xlane.xlu0 %3663
        %v3665 = vadd.f32 %v3616, %v3617
        %3666 = vadd.xlane.f32.xlu0 %v3665
        %v3667 = vpop.xlane.xlu0 %3666
        %v3668 = vrcp.pop 256.0
        %v3669 = vmul.f32 %v3622, %v3668
        %v3670 = vmul.f32 %v3625, %v3668
        %v3671 = vmul.f32 %v3628, %v3668
        %v3672 = vmul.f32 %v3631, %v3668
        %v3673 = vmul.f32 %v3634, %v3668
        %v3674 = vmul.f32 %v3637, %v3668
        %v3675 = vmul.f32 %v3640, %v3668
        %v3676 = vmul.f32 %v3643, %v3668
        %v3677 = vmul.f32 %v3646, %v3668
        %v3678 = vmul.f32 %v3649, %v3668
        %v3679 = vmul.f32 %v3652, %v3668
        %v3680 = vmul.f32 %v3655, %v3668
        %v3681 = vmul.f32 %v3658, %v3668
        %v3682 = vmul.f32 %v3661, %v3668
        %v3683 = vmul.f32 %v3664, %v3668
        %v3684 = vmul.f32 %v3667, %v3668
        %v3685 = vsub.f32 %v3586, %v3669
        %v3686 = vsub.f32 %v3587, %v3669
        %v3687 = vsub.f32 %v3588, %v3670
        %v3688 = vsub.f32 %v3589, %v3670
        %v3689 = vsub.f32 %v3590, %v3671
        %v3690 = vsub.f32 %v3591, %v3671
        %v3691 = vsub.f32 %v3592, %v3672
        %v3692 = vsub.f32 %v3593, %v3672
        %v3693 = vsub.f32 %v3594, %v3673
        %v3694 = vsub.f32 %v3595, %v3673
        %v3695 = vsub.f32 %v3596, %v3674
        %v3696 = vsub.f32 %v3597, %v3674
        %v3697 = vsub.f32 %v3598, %v3675
        %v3698 = vsub.f32 %v3599, %v3675
        %v3699 = vsub.f32 %v3600, %v3676
        %v3700 = vsub.f32 %v3601, %v3676
        %v3701 = vsub.f32 %v3602, %v3677
        %v3702 = vsub.f32 %v3603, %v3677
        %v3703 = vsub.f32 %v3604, %v3678
        %v3704 = vsub.f32 %v3605, %v3678
        %v3705 = vsub.f32 %v3606, %v3679
        %v3706 = vsub.f32 %v3607, %v3679
        %v3707 = vsub.f32 %v3608, %v3680
        %v3708 = vsub.f32 %v3609, %v3680
        %v3709 = vsub.f32 %v3610, %v3681
        %v3710 = vsub.f32 %v3611, %v3681
        %v3711 = vsub.f32 %v3612, %v3682
        %v3712 = vsub.f32 %v3613, %v3682
        %v3713 = vsub.f32 %v3614, %v3683
        %v3714 = vsub.f32 %v3615, %v3683
        %v3715 = vsub.f32 %v3616, %v3684
        %v3716 = vsub.f32 %v3617, %v3684
        %v3717 = vmul.f32 %v3685, %v3685
        %v3718 = vmul.f32 %v3686, %v3686
        %v3719 = vmul.f32 %v3687, %v3687
        %v3720 = vmul.f32 %v3688, %v3688
        %v3721 = vmul.f32 %v3689, %v3689
        %v3722 = vmul.f32 %v3690, %v3690
        %v3723 = vmul.f32 %v3691, %v3691
        %v3724 = vmul.f32 %v3692, %v3692
        %v3725 = vmul.f32 %v3693, %v3693
        %v3726 = vmul.f32 %v3694, %v3694
        %v3727 = vmul.f32 %v3695, %v3695
        %v3728 = vmul.f32 %v3696, %v3696
        %v3729 = vmul.f32 %v3697, %v3697
        %v3730 = vmul.f32 %v3698, %v3698
        %v3731 = vmul.f32 %v3699, %v3699
        %v3732 = vmul.f32 %v3700, %v3700
        %v3733 = vmul.f32 %v3701, %v3701
        %v3734 = vmul.f32 %v3702, %v3702
        %v3735 = vmul.f32 %v3703, %v3703
        %v3736 = vmul.f32 %v3704, %v3704
        %v3737 = vmul.f32 %v3705, %v3705
        %v3738 = vmul.f32 %v3706, %v3706
        %v3739 = vmul.f32 %v3707, %v3707
        %v3740 = vmul.f32 %v3708, %v3708
        %v3741 = vmul.f32 %v3709, %v3709
        %v3742 = vmul.f32 %v3710, %v3710
        %v3743 = vmul.f32 %v3711, %v3711
        %v3744 = vmul.f32 %v3712, %v3712
        %v3745 = vmul.f32 %v3713, %v3713
        %v3746 = vmul.f32 %v3714, %v3714
        %v3747 = vmul.f32 %v3715, %v3715
        %v3748 = vmul.f32 %v3716, %v3716
        %v3749 = vadd.f32 %v3717, %v3718
        %3750 = vadd.xlane.f32.xlu0 %v3749
        %v3751 = vpop.xlane.xlu0 %3750
        %v3752 = vadd.f32 %v3719, %v3720
        %3753 = vadd.xlane.f32.xlu0 %v3752
        %v3754 = vpop.xlane.xlu0 %3753
        %v3755 = vadd.f32 %v3721, %v3722
        %3756 = vadd.xlane.f32.xlu0 %v3755
        %v3757 = vpop.xlane.xlu0 %3756
        %v3758 = vadd.f32 %v3723, %v3724
        %3759 = vadd.xlane.f32.xlu0 %v3758
        %v3760 = vpop.xlane.xlu0 %3759
        %v3761 = vadd.f32 %v3725, %v3726
        %3762 = vadd.xlane.f32.xlu0 %v3761
        %v3763 = vpop.xlane.xlu0 %3762
        %v3764 = vadd.f32 %v3727, %v3728
        %3765 = vadd.xlane.f32.xlu0 %v3764
        %v3766 = vpop.xlane.xlu0 %3765
        %v3767 = vadd.f32 %v3729, %v3730
        %3768 = vadd.xlane.f32.xlu0 %v3767
        %v3769 = vpop.xlane.xlu0 %3768
        %v3770 = vadd.f32 %v3731, %v3732
        %3771 = vadd.xlane.f32.xlu0 %v3770
        %v3772 = vpop.xlane.xlu0 %3771
        %v3773 = vadd.f32 %v3733, %v3734
        %3774 = vadd.xlane.f32.xlu0 %v3773
        %v3775 = vpop.xlane.xlu0 %3774
        %v3776 = vadd.f32 %v3735, %v3736
        %3777 = vadd.xlane.f32.xlu0 %v3776
        %v3778 = vpop.xlane.xlu0 %3777
        %v3779 = vadd.f32 %v3737, %v3738
        %3780 = vadd.xlane.f32.xlu0 %v3779
        %v3781 = vpop.xlane.xlu0 %3780
        %v3782 = vadd.f32 %v3739, %v3740
        %3783 = vadd.xlane.f32.xlu0 %v3782
        %v3784 = vpop.xlane.xlu0 %3783
        %v3785 = vadd.f32 %v3741, %v3742
        %3786 = vadd.xlane.f32.xlu0 %v3785
        %v3787 = vpop.xlane.xlu0 %3786
        %v3788 = vadd.f32 %v3743, %v3744
        %3789 = vadd.xlane.f32.xlu0 %v3788
        %v3790 = vpop.xlane.xlu0 %3789
        %v3791 = vadd.f32 %v3745, %v3746
        %3792 = vadd.xlane.f32.xlu0 %v3791
        %v3793 = vpop.xlane.xlu0 %3792
        %v3794 = vadd.f32 %v3747, %v3748
        %3795 = vadd.xlane.f32.xlu0 %v3794
        %v3796 = vpop.xlane.xlu0 %3795
        %v3797 = vmul.f32 %v3751, %v3668
        %v3798 = vmul.f32 %v3754, %v3668
        %v3799 = vmul.f32 %v3757, %v3668
        %v3800 = vmul.f32 %v3760, %v3668
        %v3801 = vmul.f32 %v3763, %v3668
        %v3802 = vmul.f32 %v3766, %v3668
        %v3803 = vmul.f32 %v3769, %v3668
        %v3804 = vmul.f32 %v3772, %v3668
        %v3805 = vmul.f32 %v3775, %v3668
        %v3806 = vmul.f32 %v3778, %v3668
        %v3807 = vmul.f32 %v3781, %v3668
        %v3808 = vmul.f32 %v3784, %v3668
        %v3809 = vmul.f32 %v3787, %v3668
        %v3810 = vmul.f32 %v3790, %v3668
        %v3811 = vmul.f32 %v3793, %v3668
        %v3812 = vmul.f32 %v3796, %v3668
        %v3813 = vadd.f32 %v3797, 1e-12
        %v3814 = vadd.f32 %v3798, 1e-12
        %v3815 = vadd.f32 %v3799, 1e-12
        %v3816 = vadd.f32 %v3800, 1e-12
        %v3817 = vadd.f32 %v3801, 1e-12
        %v3818 = vadd.f32 %v3802, 1e-12
        %v3819 = vadd.f32 %v3803, 1e-12
        %v3820 = vadd.f32 %v3804, 1e-12
        %v3821 = vadd.f32 %v3805, 1e-12
        %v3822 = vadd.f32 %v3806, 1e-12
        %v3823 = vadd.f32 %v3807, 1e-12
        %v3824 = vadd.f32 %v3808, 1e-12
        %v3825 = vadd.f32 %v3809, 1e-12
        %v3826 = vadd.f32 %v3810, 1e-12
        %v3827 = vadd.f32 %v3811, 1e-12
        %v3828 = vadd.f32 %v3812, 1e-12
        %v3829 = vrsqrt.pop %v3813
        %v3830 = vrsqrt.pop %v3814
        %v3831 = vrsqrt.pop %v3815
        %v3832 = vrsqrt.pop %v3816
        %v3833 = vrsqrt.pop %v3817
        %v3834 = vrsqrt.pop %v3818
        %v3835 = vrsqrt.pop %v3819
        %v3836 = vrsqrt.pop %v3820
        %v3837 = vrsqrt.pop %v3821
        %v3838 = vrsqrt.pop %v3822
        %v3839 = vrsqrt.pop %v3823
        %v3840 = vrsqrt.pop %v3824
        %v3841 = vrsqrt.pop %v3825
        %v3842 = vrsqrt.pop %v3826
        %v3843 = vrsqrt.pop %v3827
        %v3844 = vrsqrt.pop %v3828
        %v3845 = vmul.f32 %v3685, %v3829
        %v3846 = vmul.f32 %v3686, %v3829
        %v3847 = vmul.f32 %v3687, %v3830
        %v3848 = vmul.f32 %v3688, %v3830
        %v3849 = vmul.f32 %v3689, %v3831
        %v3850 = vmul.f32 %v3690, %v3831
        %v3851 = vmul.f32 %v3691, %v3832
        %v3852 = vmul.f32 %v3692, %v3832
        %v3853 = vmul.f32 %v3693, %v3833
        %v3854 = vmul.f32 %v3694, %v3833
        %v3855 = vmul.f32 %v3695, %v3834
        %v3856 = vmul.f32 %v3696, %v3834
        %v3857 = vmul.f32 %v3697, %v3835
        %v3858 = vmul.f32 %v3698, %v3835
        %v3859 = vmul.f32 %v3699, %v3836
        %v3860 = vmul.f32 %v3700, %v3836
        %v3861 = vmul.f32 %v3701, %v3837
        %v3862 = vmul.f32 %v3702, %v3837
        %v3863 = vmul.f32 %v3703, %v3838
        %v3864 = vmul.f32 %v3704, %v3838
        %v3865 = vmul.f32 %v3705, %v3839
        %v3866 = vmul.f32 %v3706, %v3839
        %v3867 = vmul.f32 %v3707, %v3840
        %v3868 = vmul.f32 %v3708, %v3840
        %v3869 = vmul.f32 %v3709, %v3841
        %v3870 = vmul.f32 %v3710, %v3841
        %v3871 = vmul.f32 %v3711, %v3842
        %v3872 = vmul.f32 %v3712, %v3842
        %v3873 = vmul.f32 %v3713, %v3843
        %v3874 = vmul.f32 %v3714, %v3843
        %v3875 = vmul.f32 %v3715, %v3844
        %v3876 = vmul.f32 %v3716, %v3844
        %v3878 = vlaneseq
        %v3879 = vshrl.u32 %v3878, 7
        %v3880 = vsub.s32 0, %v3879
        %v3881 = vrot.slane %v3618, %v3880
        %v3882 = vlaneseq
        %v3883 = vshrl.u32 %v3882, 7
        %v3884 = vsub.s32 1, %v3883
        %v3885 = vrot.slane %v3618, %v3884
        %v3888 = vmul.f32 %v3845, %v3881
        %v3889 = vmul.f32 %v3846, %v3885
        %v3890 = vmul.f32 %v3847, %v3881
        %v3891 = vmul.f32 %v3848, %v3885
        %v3892 = vmul.f32 %v3849, %v3881
        %v3893 = vmul.f32 %v3850, %v3885
        %v3894 = vmul.f32 %v3851, %v3881
        %v3895 = vmul.f32 %v3852, %v3885
        %v3896 = vmul.f32 %v3853, %v3881
        %v3897 = vmul.f32 %v3854, %v3885
        %v3898 = vmul.f32 %v3855, %v3881
        %v3899 = vmul.f32 %v3856, %v3885
        %v3900 = vmul.f32 %v3857, %v3881
        %v3901 = vmul.f32 %v3858, %v3885
        %v3902 = vmul.f32 %v3859, %v3881
        %v3903 = vmul.f32 %v3860, %v3885
        %v3904 = vmul.f32 %v3861, %v3881
        %v3905 = vmul.f32 %v3862, %v3885
        %v3906 = vmul.f32 %v3863, %v3881
        %v3907 = vmul.f32 %v3864, %v3885
        %v3908 = vmul.f32 %v3865, %v3881
        %v3909 = vmul.f32 %v3866, %v3885
        %v3910 = vmul.f32 %v3867, %v3881
        %v3911 = vmul.f32 %v3868, %v3885
        %v3912 = vmul.f32 %v3869, %v3881
        %v3913 = vmul.f32 %v3870, %v3885
        %v3914 = vmul.f32 %v3871, %v3881
        %v3915 = vmul.f32 %v3872, %v3885
        %v3916 = vmul.f32 %v3873, %v3881
        %v3917 = vmul.f32 %v3874, %v3885
        %v3918 = vmul.f32 %v3875, %v3881
        %v3919 = vmul.f32 %v3876, %v3885
        %v3921 = vlaneseq
        %v3922 = vshrl.u32 %v3921, 7
        %v3923 = vsub.s32 0, %v3922
        %v3924 = vrot.slane %v3619, %v3923
        %v3925 = vlaneseq
        %v3926 = vshrl.u32 %v3925, 7
        %v3927 = vsub.s32 1, %v3926
        %v3928 = vrot.slane %v3619, %v3927
        %v3931 = vadd.f32 %v3888, %v3924
        %v3932 = vadd.f32 %v3889, %v3928
        %v3933 = vadd.f32 %v3890, %v3924
        %v3934 = vadd.f32 %v3891, %v3928
        %v3935 = vadd.f32 %v3892, %v3924
        %v3936 = vadd.f32 %v3893, %v3928
        %v3937 = vadd.f32 %v3894, %v3924
        %v3938 = vadd.f32 %v3895, %v3928
        %v3939 = vadd.f32 %v3896, %v3924
        %v3940 = vadd.f32 %v3897, %v3928
        %v3941 = vadd.f32 %v3898, %v3924
        %v3942 = vadd.f32 %v3899, %v3928
        %v3943 = vadd.f32 %v3900, %v3924
        %v3944 = vadd.f32 %v3901, %v3928
        %v3945 = vadd.f32 %v3902, %v3924
        %v3946 = vadd.f32 %v3903, %v3928
        %v3947 = vadd.f32 %v3904, %v3924
        %v3948 = vadd.f32 %v3905, %v3928
        %v3949 = vadd.f32 %v3906, %v3924
        %v3950 = vadd.f32 %v3907, %v3928
        %v3951 = vadd.f32 %v3908, %v3924
        %v3952 = vadd.f32 %v3909, %v3928
        %v3953 = vadd.f32 %v3910, %v3924
        %v3954 = vadd.f32 %v3911, %v3928
        %v3955 = vadd.f32 %v3912, %v3924
        %v3956 = vadd.f32 %v3913, %v3928
        %v3957 = vadd.f32 %v3914, %v3924
        %v3958 = vadd.f32 %v3915, %v3928
        %v3959 = vadd.f32 %v3916, %v3924
        %v3960 = vadd.f32 %v3917, %v3928
        %v3961 = vadd.f32 %v3918, %v3924
        %v3962 = vadd.f32 %v3919, %v3928
        %v3963 = vpack.c.bf16 %v3933, %v3931
        %v3964 = vpack.c.bf16 %v3934, %v3932
        %v3965 = vpack.c.bf16 %v3937, %v3935
        %v3966 = vpack.c.bf16 %v3938, %v3936
        %v3967 = vpack.c.bf16 %v3941, %v3939
        %v3968 = vpack.c.bf16 %v3942, %v3940
        %v3969 = vpack.c.bf16 %v3945, %v3943
        %v3970 = vpack.c.bf16 %v3946, %v3944
        %v3971 = vpack.c.bf16 %v3949, %v3947
        %v3972 = vpack.c.bf16 %v3950, %v3948
        %v3973 = vpack.c.bf16 %v3953, %v3951
        %v3974 = vpack.c.bf16 %v3954, %v3952
        %v3975 = vpack.c.bf16 %v3957, %v3955
        %v3976 = vpack.c.bf16 %v3958, %v3956
        %v3977 = vpack.c.bf16 %v3961, %v3959
        %v3978 = vpack.c.bf16 %v3962, %v3960
        %v3979 = vld [vmem:[#allocation13] sm:$0xff]
        %v3980 = vld [vmem:[#allocation13 + $0x8] sm:$0xff]
        %v3981 = vld [vmem:[#allocation13 + $0x10] sm:$0xff]
        %v3982 = vld [vmem:[#allocation13 + $0x18] sm:$0xff]
        %v3983 = vld [vmem:[#allocation13 + $0x20] sm:$0xff]
        %v3984 = vld [vmem:[#allocation13 + $0x28] sm:$0xff]
        %v3985 = vld [vmem:[#allocation13 + $0x30] sm:$0xff]
        %v3986 = vld [vmem:[#allocation13 + $0x38] sm:$0xff]
        %v3987 = vld [vmem:[#allocation13 + $0x40] sm:$0xff]
        %v3988 = vld [vmem:[#allocation13 + $0x48] sm:$0xff]
        %v3989 = vld [vmem:[#allocation13 + $0x50] sm:$0xff]
        %v3990 = vld [vmem:[#allocation13 + $0x58] sm:$0xff]
        %v3991 = vld [vmem:[#allocation13 + $0x60] sm:$0xff]
        %v3992 = vld [vmem:[#allocation13 + $0x68] sm:$0xff]
        %v3993 = vld [vmem:[#allocation13 + $0x70] sm:$0xff]
        %v3994 = vld [vmem:[#allocation13 + $0x78] sm:$0xff]
        %v3995 = vld [vmem:[#allocation13 + $0x80] sm:$0xff]
        %v3996 = vld [vmem:[#allocation13 + $0x88] sm:$0xff]
        %v3997 = vld [vmem:[#allocation13 + $0x90] sm:$0xff]
        %v3998 = vld [vmem:[#allocation13 + $0x98] sm:$0xff]
        %v3999 = vld [vmem:[#allocation13 + $0xa0] sm:$0xff]
        %v4000 = vld [vmem:[#allocation13 + $0xa8] sm:$0xff]
        %v4001 = vld [vmem:[#allocation13 + $0xb0] sm:$0xff]
        %v4002 = vld [vmem:[#allocation13 + $0xb8] sm:$0xff]
        %v4003 = vld [vmem:[#allocation13 + $0xc0] sm:$0xff]
        %v4004 = vld [vmem:[#allocation13 + $0xc8] sm:$0xff]
        %v4005 = vld [vmem:[#allocation13 + $0xd0] sm:$0xff]
        %v4006 = vld [vmem:[#allocation13 + $0xd8] sm:$0xff]
        %v4007 = vld [vmem:[#allocation13 + $0xe0] sm:$0xff]
        %v4008 = vld [vmem:[#allocation13 + $0xe8] sm:$0xff]
        %v4009 = vld [vmem:[#allocation13 + $0xf0] sm:$0xff]
        %v4010 = vld [vmem:[#allocation13 + $0xf8] sm:$0xff]
        %v4011 = vld [vmem:[#allocation13 + $0x100] sm:$0xff]
        %v4012 = vld [vmem:[#allocation13 + $0x108] sm:$0xff]
        %v4013 = vld [vmem:[#allocation13 + $0x110] sm:$0xff]
        %v4014 = vld [vmem:[#allocation13 + $0x118] sm:$0xff]
        %v4015 = vld [vmem:[#allocation13 + $0x120] sm:$0xff]
        %v4016 = vld [vmem:[#allocation13 + $0x128] sm:$0xff]
        %v4017 = vld [vmem:[#allocation13 + $0x130] sm:$0xff]
        %v4018 = vld [vmem:[#allocation13 + $0x138] sm:$0xff]
        %v4019 = vld [vmem:[#allocation13 + $0x140] sm:$0xff]
        %v4020 = vld [vmem:[#allocation13 + $0x148] sm:$0xff]
        %v4021 = vld [vmem:[#allocation13 + $0x150] sm:$0xff]
        %v4022 = vld [vmem:[#allocation13 + $0x158] sm:$0xff]
        %v4023 = vld [vmem:[#allocation13 + $0x160] sm:$0xff]
        %v4024 = vld [vmem:[#allocation13 + $0x168] sm:$0xff]
        %v4025 = vld [vmem:[#allocation13 + $0x170] sm:$0xff]
        %v4026 = vld [vmem:[#allocation13 + $0x178] sm:$0xff]
        %v4027 = vld [vmem:[#allocation13 + $0x180] sm:$0xff]
        %v4028 = vld [vmem:[#allocation13 + $0x188] sm:$0xff]
        %v4029 = vld [vmem:[#allocation13 + $0x190] sm:$0xff]
        %v4030 = vld [vmem:[#allocation13 + $0x198] sm:$0xff]
        %v4031 = vld [vmem:[#allocation13 + $0x1a0] sm:$0xff]
        %v4032 = vld [vmem:[#allocation13 + $0x1a8] sm:$0xff]
        %v4033 = vld [vmem:[#allocation13 + $0x1b0] sm:$0xff]
        %v4034 = vld [vmem:[#allocation13 + $0x1b8] sm:$0xff]
        %v4035 = vld [vmem:[#allocation13 + $0x1c0] sm:$0xff]
        %v4036 = vld [vmem:[#allocation13 + $0x1c8] sm:$0xff]
        %v4037 = vld [vmem:[#allocation13 + $0x1d0] sm:$0xff]
        %v4038 = vld [vmem:[#allocation13 + $0x1d8] sm:$0xff]
        %v4039 = vld [vmem:[#allocation13 + $0x1e0] sm:$0xff]
        %v4040 = vld [vmem:[#allocation13 + $0x1e8] sm:$0xff]
        %v4041 = vld [vmem:[#allocation13 + $0x1f0] sm:$0xff]
        %v4042 = vld [vmem:[#allocation13 + $0x1f8] sm:$0xff]
        %v4043 = vld [vmem:[%s9] sm:$0xf]
        %v4045 = vlaneseq
        %v4046 = vshrl.u32 %v4045, 7
        %v4047 = vsub.s32 0, %v4046
        %v4048 = vrot.slane %v4043, %v4047
        %v4049 = vlaneseq
        %v4050 = vshrl.u32 %v4049, 7
        %v4051 = vsub.s32 1, %v4050
        %v4052 = vrot.slane %v4043, %v4051
        %v4053 = vlaneseq
        %v4054 = vshrl.u32 %v4053, 7
        %v4055 = vsub.s32 2, %v4054
        %v4056 = vrot.slane %v4043, %v4055
        %v4057 = vlaneseq
        %v4058 = vshrl.u32 %v4057, 7
        %v4059 = vsub.s32 3, %v4058
        %v4060 = vrot.slane %v4043, %v4059
        %v4129 = vunpack.c.l.b16 %v3979
        %v4130 = vunpack.c.h.b16 %v3979
        %v4131 = vunpack.c.l.b16 %v3980
        %v4132 = vunpack.c.h.b16 %v3980
        %v4133 = vunpack.c.l.b16 %v3981
        %v4134 = vunpack.c.h.b16 %v3981
        %v4135 = vunpack.c.l.b16 %v3982
        %v4136 = vunpack.c.h.b16 %v3982
        %v4137 = vunpack.c.l.b16 %v3983
        %v4138 = vunpack.c.h.b16 %v3983
        %v4139 = vunpack.c.l.b16 %v3984
        %v4140 = vunpack.c.h.b16 %v3984
        %v4141 = vunpack.c.l.b16 %v3985
        %v4142 = vunpack.c.h.b16 %v3985
        %v4143 = vunpack.c.l.b16 %v3986
        %v4144 = vunpack.c.h.b16 %v3986
        %v4145 = vunpack.c.l.b16 %v3987
        %v4146 = vunpack.c.h.b16 %v3987
        %v4147 = vunpack.c.l.b16 %v3988
        %v4148 = vunpack.c.h.b16 %v3988
        %v4149 = vunpack.c.l.b16 %v3989
        %v4150 = vunpack.c.h.b16 %v3989
        %v4151 = vunpack.c.l.b16 %v3990
        %v4152 = vunpack.c.h.b16 %v3990
        %v4153 = vunpack.c.l.b16 %v3991
        %v4154 = vunpack.c.h.b16 %v3991
        %v4155 = vunpack.c.l.b16 %v3992
        %v4156 = vunpack.c.h.b16 %v3992
        %v4157 = vunpack.c.l.b16 %v3993
        %v4158 = vunpack.c.h.b16 %v3993
        %v4159 = vunpack.c.l.b16 %v3994
        %v4160 = vunpack.c.h.b16 %v3994
        %v4161 = vunpack.c.l.b16 %v3995
        %v4162 = vunpack.c.h.b16 %v3995
        %v4163 = vunpack.c.l.b16 %v3996
        %v4164 = vunpack.c.h.b16 %v3996
        %v4165 = vunpack.c.l.b16 %v3997
        %v4166 = vunpack.c.h.b16 %v3997
        %v4167 = vunpack.c.l.b16 %v3998
        %v4168 = vunpack.c.h.b16 %v3998
        %v4169 = vunpack.c.l.b16 %v3999
        %v4170 = vunpack.c.h.b16 %v3999
        %v4171 = vunpack.c.l.b16 %v4000
        %v4172 = vunpack.c.h.b16 %v4000
        %v4173 = vunpack.c.l.b16 %v4001
        %v4174 = vunpack.c.h.b16 %v4001
        %v4175 = vunpack.c.l.b16 %v4002
        %v4176 = vunpack.c.h.b16 %v4002
        %v4177 = vunpack.c.l.b16 %v4003
        %v4178 = vunpack.c.h.b16 %v4003
        %v4179 = vunpack.c.l.b16 %v4004
        %v4180 = vunpack.c.h.b16 %v4004
        %v4181 = vunpack.c.l.b16 %v4005
        %v4182 = vunpack.c.h.b16 %v4005
        %v4183 = vunpack.c.l.b16 %v4006
        %v4184 = vunpack.c.h.b16 %v4006
        %v4185 = vunpack.c.l.b16 %v4007
        %v4186 = vunpack.c.h.b16 %v4007
        %v4187 = vunpack.c.l.b16 %v4008
        %v4188 = vunpack.c.h.b16 %v4008
        %v4189 = vunpack.c.l.b16 %v4009
        %v4190 = vunpack.c.h.b16 %v4009
        %v4191 = vunpack.c.l.b16 %v4010
        %v4192 = vunpack.c.h.b16 %v4010
        %v4193 = vunpack.c.l.b16 %v4011
        %v4194 = vunpack.c.h.b16 %v4011
        %v4195 = vunpack.c.l.b16 %v4012
        %v4196 = vunpack.c.h.b16 %v4012
        %v4197 = vunpack.c.l.b16 %v4013
        %v4198 = vunpack.c.h.b16 %v4013
        %v4199 = vunpack.c.l.b16 %v4014
        %v4200 = vunpack.c.h.b16 %v4014
        %v4201 = vunpack.c.l.b16 %v4015
        %v4202 = vunpack.c.h.b16 %v4015
        %v4203 = vunpack.c.l.b16 %v4016
        %v4204 = vunpack.c.h.b16 %v4016
        %v4205 = vunpack.c.l.b16 %v4017
        %v4206 = vunpack.c.h.b16 %v4017
        %v4207 = vunpack.c.l.b16 %v4018
        %v4208 = vunpack.c.h.b16 %v4018
        %v4209 = vunpack.c.l.b16 %v4019
        %v4210 = vunpack.c.h.b16 %v4019
        %v4211 = vunpack.c.l.b16 %v4020
        %v4212 = vunpack.c.h.b16 %v4020
        %v4213 = vunpack.c.l.b16 %v4021
        %v4214 = vunpack.c.h.b16 %v4021
        %v4215 = vunpack.c.l.b16 %v4022
        %v4216 = vunpack.c.h.b16 %v4022
        %v4217 = vunpack.c.l.b16 %v4023
        %v4218 = vunpack.c.h.b16 %v4023
        %v4219 = vunpack.c.l.b16 %v4024
        %v4220 = vunpack.c.h.b16 %v4024
        %v4221 = vunpack.c.l.b16 %v4025
        %v4222 = vunpack.c.h.b16 %v4025
        %v4223 = vunpack.c.l.b16 %v4026
        %v4224 = vunpack.c.h.b16 %v4026
        %v4225 = vunpack.c.l.b16 %v4027
        %v4226 = vunpack.c.h.b16 %v4027
        %v4227 = vunpack.c.l.b16 %v4028
        %v4228 = vunpack.c.h.b16 %v4028
        %v4229 = vunpack.c.l.b16 %v4029
        %v4230 = vunpack.c.h.b16 %v4029
        %v4231 = vunpack.c.l.b16 %v4030
        %v4232 = vunpack.c.h.b16 %v4030
        %v4233 = vunpack.c.l.b16 %v4031
        %v4234 = vunpack.c.h.b16 %v4031
        %v4235 = vunpack.c.l.b16 %v4032
        %v4236 = vunpack.c.h.b16 %v4032
        %v4237 = vunpack.c.l.b16 %v4033
        %v4238 = vunpack.c.h.b16 %v4033
        %v4239 = vunpack.c.l.b16 %v4034
        %v4240 = vunpack.c.h.b16 %v4034
        %v4241 = vunpack.c.l.b16 %v4035
        %v4242 = vunpack.c.h.b16 %v4035
        %v4243 = vunpack.c.l.b16 %v4036
        %v4244 = vunpack.c.h.b16 %v4036
        %v4245 = vunpack.c.l.b16 %v4037
        %v4246 = vunpack.c.h.b16 %v4037
        %v4247 = vunpack.c.l.b16 %v4038
        %v4248 = vunpack.c.h.b16 %v4038
        %v4249 = vunpack.c.l.b16 %v4039
        %v4250 = vunpack.c.h.b16 %v4039
        %v4251 = vunpack.c.l.b16 %v4040
        %v4252 = vunpack.c.h.b16 %v4040
        %v4253 = vunpack.c.l.b16 %v4041
        %v4254 = vunpack.c.h.b16 %v4041
        %v4255 = vunpack.c.l.b16 %v4042
        %v4256 = vunpack.c.h.b16 %v4042
        %v4257 = vpack.c.b16 %v4133, %v4129
        %v4258 = vpack.c.b16 %v4134, %v4130
        %v4259 = vpack.c.b16 %v4135, %v4131
        %v4260 = vpack.c.b16 %v4136, %v4132
        %v4261 = vpack.c.b16 %v4141, %v4137
        %v4262 = vpack.c.b16 %v4142, %v4138
        %v4263 = vpack.c.b16 %v4143, %v4139
        %v4264 = vpack.c.b16 %v4144, %v4140
        %v4265 = vpack.c.b16 %v4149, %v4145
        %v4266 = vpack.c.b16 %v4150, %v4146
        %v4267 = vpack.c.b16 %v4151, %v4147
        %v4268 = vpack.c.b16 %v4152, %v4148
        %v4269 = vpack.c.b16 %v4157, %v4153
        %v4270 = vpack.c.b16 %v4158, %v4154
        %v4271 = vpack.c.b16 %v4159, %v4155
        %v4272 = vpack.c.b16 %v4160, %v4156
        %v4273 = vpack.c.b16 %v4165, %v4161
        %v4274 = vpack.c.b16 %v4166, %v4162
        %v4275 = vpack.c.b16 %v4167, %v4163
        %v4276 = vpack.c.b16 %v4168, %v4164
        %v4277 = vpack.c.b16 %v4173, %v4169
        %v4278 = vpack.c.b16 %v4174, %v4170
        %v4279 = vpack.c.b16 %v4175, %v4171
        %v4280 = vpack.c.b16 %v4176, %v4172
        %v4281 = vpack.c.b16 %v4181, %v4177
        %v4282 = vpack.c.b16 %v4182, %v4178
        %v4283 = vpack.c.b16 %v4183, %v4179
        %v4284 = vpack.c.b16 %v4184, %v4180
        %v4285 = vpack.c.b16 %v4189, %v4185
        %v4286 = vpack.c.b16 %v4190, %v4186
        %v4287 = vpack.c.b16 %v4191, %v4187
        %v4288 = vpack.c.b16 %v4192, %v4188
        %v4289 = vpack.c.b16 %v4197, %v4193
        %v4290 = vpack.c.b16 %v4198, %v4194
        %v4291 = vpack.c.b16 %v4199, %v4195
        %v4292 = vpack.c.b16 %v4200, %v4196
        %v4293 = vpack.c.b16 %v4205, %v4201
        %v4294 = vpack.c.b16 %v4206, %v4202
        %v4295 = vpack.c.b16 %v4207, %v4203
        %v4296 = vpack.c.b16 %v4208, %v4204
        %v4297 = vpack.c.b16 %v4213, %v4209
        %v4298 = vpack.c.b16 %v4214, %v4210
        %v4299 = vpack.c.b16 %v4215, %v4211
        %v4300 = vpack.c.b16 %v4216, %v4212
        %v4301 = vpack.c.b16 %v4221, %v4217
        %v4302 = vpack.c.b16 %v4222, %v4218
        %v4303 = vpack.c.b16 %v4223, %v4219
        %v4304 = vpack.c.b16 %v4224, %v4220
        %v4305 = vpack.c.b16 %v4229, %v4225
        %v4306 = vpack.c.b16 %v4230, %v4226
        %v4307 = vpack.c.b16 %v4231, %v4227
        %v4308 = vpack.c.b16 %v4232, %v4228
        %v4309 = vpack.c.b16 %v4237, %v4233
        %v4310 = vpack.c.b16 %v4238, %v4234
        %v4311 = vpack.c.b16 %v4239, %v4235
        %v4312 = vpack.c.b16 %v4240, %v4236
        %v4313 = vpack.c.b16 %v4245, %v4241
        %v4314 = vpack.c.b16 %v4246, %v4242
        %v4315 = vpack.c.b16 %v4247, %v4243
        %v4316 = vpack.c.b16 %v4248, %v4244
        %v4317 = vpack.c.b16 %v4253, %v4249
        %v4318 = vpack.c.b16 %v4254, %v4250
        %v4319 = vpack.c.b16 %v4255, %v4251
        %v4320 = vpack.c.b16 %v4256, %v4252
        %4385 = vmatprep.subr.bf16.mxu0 %v4258
        %4386 = vmatpush1.bf16.msra.mxu0 %v4257
        %4387 = vmatprep.subr.bf16.mxu0 %v4262
        %4388 = vmatpush1.bf16.msra.mxu0 %v4261
        %4389 = vmatprep.subr.bf16.mxu0 %v4266
        %4390 = vmatpush1.bf16.msra.mxu0 %v4265
        %4391 = vmatprep.subr.bf16.mxu0 %v4270
        %4392 = vmatpush1.bf16.msra.mxu0 %v4269
        %4393 = vmatprep.subr.bf16.mxu0 %v4274
        %4394 = vmatpush1.bf16.msra.mxu0 %v4273
        %4395 = vmatprep.subr.bf16.mxu0 %v4278
        %4396 = vmatpush1.bf16.msra.mxu0 %v4277
        %4397 = vmatprep.subr.bf16.mxu0 %v4282
        %4398 = vmatpush1.bf16.msra.mxu0 %v4281
        %4399 = vmatprep.subr.bf16.mxu0 %v4286
        %4400 = vmatpush1.bf16.msra.mxu0 %v4285
        %4401 = vmatprep.subr.bf16.mxu0 %v4290
        %4402 = vmatpush1.bf16.msra.mxu0 %v4289
        %4403 = vmatprep.subr.bf16.mxu0 %v4294
        %4404 = vmatpush1.bf16.msra.mxu0 %v4293
        %4405 = vmatprep.subr.bf16.mxu0 %v4298
        %4406 = vmatpush1.bf16.msra.mxu0 %v4297
        %4407 = vmatprep.subr.bf16.mxu0 %v4302
        %4408 = vmatpush1.bf16.msra.mxu0 %v4301
        %4409 = vmatprep.subr.bf16.mxu0 %v4306
        %4410 = vmatpush1.bf16.msra.mxu0 %v4305
        %4411 = vmatprep.subr.bf16.mxu0 %v4310
        %4412 = vmatpush1.bf16.msra.mxu0 %v4309
        %4413 = vmatprep.subr.bf16.mxu0 %v4314
        %4414 = vmatpush1.bf16.msra.mxu0 %v4313
        %4415 = vmatprep.subr.bf16.mxu0 %v4318
        %4416 = vmatpush1.bf16.msra.mxu0 %v4317
        %4417 = vmatprep.mubr.bf16.mxu0 %v3964
        %4418 = vmatmul.mubr.bf16.gmra.mrb[0].mxu0 %v3963
        %v4419 = vpop.f32.mrb[0].mxu0
        %v4420 = vadd.f32 %v4048, %v4419
        %v4421 = vpop.f32.mrb[0].mxu0
        %v4422 = vadd.f32 %v4052, %v4421
        %v4423 = vpop.f32.mrb[0].mxu0
        %v4424 = vadd.f32 %v4048, %v4423
        %v4425 = vpop.f32.mrb[0].mxu0
        %v4426 = vadd.f32 %v4052, %v4425
        %4427 = vmatprep.mubr.bf16.mxu0 %v3966
        %4428 = vmatmul.mubr.bf16.gmra.mrb[0].mxu0 %v3965
        %v4429 = vpop.f32.mrb[0].mxu0
        %v4430 = vadd.f32 %v4048, %v4429
        %v4431 = vpop.f32.mrb[0].mxu0
        %v4432 = vadd.f32 %v4052, %v4431
        %v4433 = vpop.f32.mrb[0].mxu0
        %v4434 = vadd.f32 %v4048, %v4433
        %v4435 = vpop.f32.mrb[0].mxu0
        %v4436 = vadd.f32 %v4052, %v4435
        %4437 = vmatprep.mubr.bf16.mxu0 %v3968
        %4438 = vmatmul.mubr.bf16.gmra.mrb[0].mxu0 %v3967
        %v4439 = vpop.f32.mrb[0].mxu0
        %v4440 = vadd.f32 %v4048, %v4439
        %v4441 = vpop.f32.mrb[0].mxu0
        %v4442 = vadd.f32 %v4052, %v4441
        %v4443 = vpop.f32.mrb[0].mxu0
        %v4444 = vadd.f32 %v4048, %v4443
        %v4445 = vpop.f32.mrb[0].mxu0
        %v4446 = vadd.f32 %v4052, %v4445
        %4447 = vmatprep.mubr.bf16.mxu0 %v3970
        %4448 = vmatmul.mubr.bf16.gmra.mrb[0].mxu0 %v3969
        %v4449 = vpop.f32.mrb[0].mxu0
        %v4450 = vadd.f32 %v4048, %v4449
        %v4451 = vpop.f32.mrb[0].mxu0
        %v4452 = vadd.f32 %v4052, %v4451
        %v4453 = vpop.f32.mrb[0].mxu0
        %v4454 = vadd.f32 %v4048, %v4453
        %v4455 = vpop.f32.mrb[0].mxu0
        %v4456 = vadd.f32 %v4052, %v4455
        %4457 = vmatprep.mubr.bf16.mxu0 %v3972
        %4458 = vmatmul.mubr.bf16.gmra.mrb[0].mxu0 %v3971
        %v4459 = vpop.f32.mrb[0].mxu0
        %v4460 = vadd.f32 %v4048, %v4459
        %v4461 = vpop.f32.mrb[0].mxu0
        %v4462 = vadd.f32 %v4052, %v4461
        %v4463 = vpop.f32.mrb[0].mxu0
        %v4464 = vadd.f32 %v4048, %v4463
        %v4465 = vpop.f32.mrb[0].mxu0
        %v4466 = vadd.f32 %v4052, %v4465
        %4467 = vmatprep.mubr.bf16.mxu0 %v3974
        %4468 = vmatmul.mubr.bf16.gmra.mrb[0].mxu0 %v3973
        %v4469 = vpop.f32.mrb[0].mxu0
        %v4470 = vadd.f32 %v4048, %v4469
        %v4471 = vpop.f32.mrb[0].mxu0
        %v4472 = vadd.f32 %v4052, %v4471
        %v4473 = vpop.f32.mrb[0].mxu0
        %v4474 = vadd.f32 %v4048, %v4473
        %v4475 = vpop.f32.mrb[0].mxu0
        %v4476 = vadd.f32 %v4052, %v4475
        %4477 = vmatprep.mubr.bf16.mxu0 %v3976
        %4478 = vmatmul.mubr.bf16.gmra.mrb[0].mxu0 %v3975
        %v4479 = vpop.f32.mrb[0].mxu0
        %v4480 = vadd.f32 %v4048, %v4479
        %v4481 = vpop.f32.mrb[0].mxu0
        %v4482 = vadd.f32 %v4052, %v4481
        %v4483 = vpop.f32.mrb[0].mxu0
        %v4484 = vadd.f32 %v4048, %v4483
        %v4485 = vpop.f32.mrb[0].mxu0
        %v4486 = vadd.f32 %v4052, %v4485
        %4487 = vmatprep.mubr.bf16.mxu0 %v3978
        %4488 = vmatmul.mubr.bf16.gmra.mrb[0].mxu0 %v3977
        %v4489 = vpop.f32.mrb[0].mxu0
        %v4490 = vadd.f32 %v4048, %v4489
        %v4491 = vpop.f32.mrb[0].mxu0
        %v4492 = vadd.f32 %v4052, %v4491
        %v4493 = vpop.f32.mrb[0].mxu0
        %v4494 = vadd.f32 %v4048, %v4493
        %v4495 = vpop.f32.mrb[0].mxu0
        %v4496 = vadd.f32 %v4052, %v4495
        %4497 = vdwg.mxu0
        %4498 = vmatprep.subr.bf16.mxu0 %v4260
        %4499 = vmatpush1.bf16.msra.mxu0 %v4259
        %4500 = vmatprep.subr.bf16.mxu0 %v4264
        %4501 = vmatpush1.bf16.msra.mxu0 %v4263
        %4502 = vmatprep.subr.bf16.mxu0 %v4268
        %4503 = vmatpush1.bf16.msra.mxu0 %v4267
        %4504 = vmatprep.subr.bf16.mxu0 %v4272
        %4505 = vmatpush1.bf16.msra.mxu0 %v4271
        %4506 = vmatprep.subr.bf16.mxu0 %v4276
        %4507 = vmatpush1.bf16.msra.mxu0 %v4275
        %4508 = vmatprep.subr.bf16.mxu0 %v4280
        %4509 = vmatpush1.bf16.msra.mxu0 %v4279
        %4510 = vmatprep.subr.bf16.mxu0 %v4284
        %4511 = vmatpush1.bf16.msra.mxu0 %v4283
        %4512 = vmatprep.subr.bf16.mxu0 %v4288
        %4513 = vmatpush1.bf16.msra.mxu0 %v4287
        %4514 = vmatprep.subr.bf16.mxu0 %v4292
        %4515 = vmatpush1.bf16.msra.mxu0 %v4291
        %4516 = vmatprep.subr.bf16.mxu0 %v4296
        %4517 = vmatpush1.bf16.msra.mxu0 %v4295
        %4518 = vmatprep.subr.bf16.mxu0 %v4300
        %4519 = vmatpush1.bf16.msra.mxu0 %v4299
        %4520 = vmatprep.subr.bf16.mxu0 %v4304
        %4521 = vmatpush1.bf16.msra.mxu0 %v4303
        %4522 = vmatprep.subr.bf16.mxu0 %v4308
        %4523 = vmatpush1.bf16.msra.mxu0 %v4307
        %4524 = vmatprep.subr.bf16.mxu0 %v4312
        %4525 = vmatpush1.bf16.msra.mxu0 %v4311
        %4526 = vmatprep.subr.bf16.mxu0 %v4316
        %4527 = vmatpush1.bf16.msra.mxu0 %v4315
        %4528 = vmatprep.subr.bf16.mxu0 %v4320
        %4529 = vmatpush1.bf16.msra.mxu0 %v4319
        %4530 = vmatprep.mubr.bf16.mxu0 %v3964
        %4531 = vmatmul.mubr.bf16.gmra.mrb[0].mxu0 %v3963
        %v4532 = vpop.f32.mrb[0].mxu0
        %v4533 = vadd.f32 %v4056, %v4532
        %v4534 = vpop.f32.mrb[0].mxu0
        %v4535 = vadd.f32 %v4060, %v4534
        %v4536 = vpop.f32.mrb[0].mxu0
        %v4537 = vadd.f32 %v4056, %v4536
        %v4538 = vpop.f32.mrb[0].mxu0
        %v4539 = vadd.f32 %v4060, %v4538
        %4540 = vmatprep.mubr.bf16.mxu0 %v3966
        %4541 = vmatmul.mubr.bf16.gmra.mrb[0].mxu0 %v3965
        %v4542 = vpop.f32.mrb[0].mxu0
        %v4543 = vadd.f32 %v4056, %v4542
        %v4544 = vpop.f32.mrb[0].mxu0
        %v4545 = vadd.f32 %v4060, %v4544
        %v4546 = vpop.f32.mrb[0].mxu0
        %v4547 = vadd.f32 %v4056, %v4546
        %v4548 = vpop.f32.mrb[0].mxu0
        %v4549 = vadd.f32 %v4060, %v4548
        %4550 = vmatprep.mubr.bf16.mxu0 %v3968
        %4551 = vmatmul.mubr.bf16.gmra.mrb[0].mxu0 %v3967
        %v4552 = vpop.f32.mrb[0].mxu0
        %v4553 = vadd.f32 %v4056, %v4552
        %v4554 = vpop.f32.mrb[0].mxu0
        %v4555 = vadd.f32 %v4060, %v4554
        %v4556 = vpop.f32.mrb[0].mxu0
        %v4557 = vadd.f32 %v4056, %v4556
        %v4558 = vpop.f32.mrb[0].mxu0
        %v4559 = vadd.f32 %v4060, %v4558
        %4560 = vmatprep.mubr.bf16.mxu0 %v3970
        %4561 = vmatmul.mubr.bf16.gmra.mrb[0].mxu0 %v3969
        %v4562 = vpop.f32.mrb[0].mxu0
        %v4563 = vadd.f32 %v4056, %v4562
        %v4564 = vpop.f32.mrb[0].mxu0
        %v4565 = vadd.f32 %v4060, %v4564
        %v4566 = vpop.f32.mrb[0].mxu0
        %v4567 = vadd.f32 %v4056, %v4566
        %v4568 = vpop.f32.mrb[0].mxu0
        %v4569 = vadd.f32 %v4060, %v4568
        %4570 = vmatprep.mubr.bf16.mxu0 %v3972
        %4571 = vmatmul.mubr.bf16.gmra.mrb[0].mxu0 %v3971
        %v4572 = vpop.f32.mrb[0].mxu0
        %v4573 = vadd.f32 %v4056, %v4572
        %v4574 = vpop.f32.mrb[0].mxu0
        %v4575 = vadd.f32 %v4060, %v4574
        %v4576 = vpop.f32.mrb[0].mxu0
        %v4577 = vadd.f32 %v4056, %v4576
        %v4578 = vpop.f32.mrb[0].mxu0
        %v4579 = vadd.f32 %v4060, %v4578
        %4580 = vmatprep.mubr.bf16.mxu0 %v3974
        %4581 = vmatmul.mubr.bf16.gmra.mrb[0].mxu0 %v3973
        %v4582 = vpop.f32.mrb[0].mxu0
        %v4583 = vadd.f32 %v4056, %v4582
        %v4584 = vpop.f32.mrb[0].mxu0
        %v4585 = vadd.f32 %v4060, %v4584
        %v4586 = vpop.f32.mrb[0].mxu0
        %v4587 = vadd.f32 %v4056, %v4586
        %v4588 = vpop.f32.mrb[0].mxu0
        %v4589 = vadd.f32 %v4060, %v4588
        %4590 = vmatprep.mubr.bf16.mxu0 %v3976
        %4591 = vmatmul.mubr.bf16.gmra.mrb[0].mxu0 %v3975
        %v4592 = vpop.f32.mrb[0].mxu0
        %v4593 = vadd.f32 %v4056, %v4592
        %v4594 = vpop.f32.mrb[0].mxu0
        %v4595 = vadd.f32 %v4060, %v4594
        %v4596 = vpop.f32.mrb[0].mxu0
        %v4597 = vadd.f32 %v4056, %v4596
        %v4598 = vpop.f32.mrb[0].mxu0
        %v4599 = vadd.f32 %v4060, %v4598
        %4600 = vmatprep.mubr.bf16.mxu0 %v3978
        %4601 = vmatmul.mubr.bf16.gmra.mrb[0].mxu0 %v3977
        %v4602 = vpop.f32.mrb[0].mxu0
        %v4603 = vadd.f32 %v4056, %v4602
        %v4604 = vpop.f32.mrb[0].mxu0
        %v4605 = vadd.f32 %v4060, %v4604
        %v4606 = vpop.f32.mrb[0].mxu0
        %v4607 = vadd.f32 %v4056, %v4606
        %v4608 = vpop.f32.mrb[0].mxu0
        %v4609 = vadd.f32 %v4060, %v4608
        %4610 = vdwg.mxu0
        %v4611 = vmul.f32 %v4420, %v4420
        %v4612 = vmul.f32 %v4422, %v4422
        %v4613 = vmul.f32 %v4533, %v4533
        %v4614 = vmul.f32 %v4535, %v4535
        %v4615 = vmul.f32 %v4424, %v4424
        %v4616 = vmul.f32 %v4426, %v4426
        %v4617 = vmul.f32 %v4537, %v4537
        %v4618 = vmul.f32 %v4539, %v4539
        %v4619 = vmul.f32 %v4430, %v4430
        %v4620 = vmul.f32 %v4432, %v4432
        %v4621 = vmul.f32 %v4543, %v4543
        %v4622 = vmul.f32 %v4545, %v4545
        %v4623 = vmul.f32 %v4434, %v4434
        %v4624 = vmul.f32 %v4436, %v4436
        %v4625 = vmul.f32 %v4547, %v4547
        %v4626 = vmul.f32 %v4549, %v4549
        %v4627 = vmul.f32 %v4440, %v4440
        %v4628 = vmul.f32 %v4442, %v4442
        %v4629 = vmul.f32 %v4553, %v4553
        %v4630 = vmul.f32 %v4555, %v4555
        %v4631 = vmul.f32 %v4444, %v4444
        %v4632 = vmul.f32 %v4446, %v4446
        %v4633 = vmul.f32 %v4557, %v4557
        %v4634 = vmul.f32 %v4559, %v4559
        %v4635 = vmul.f32 %v4450, %v4450
        %v4636 = vmul.f32 %v4452, %v4452
        %v4637 = vmul.f32 %v4563, %v4563
        %v4638 = vmul.f32 %v4565, %v4565
        %v4639 = vmul.f32 %v4454, %v4454
        %v4640 = vmul.f32 %v4456, %v4456
        %v4641 = vmul.f32 %v4567, %v4567
        %v4642 = vmul.f32 %v4569, %v4569
        %v4643 = vmul.f32 %v4460, %v4460
        %v4644 = vmul.f32 %v4462, %v4462
        %v4645 = vmul.f32 %v4573, %v4573
        %v4646 = vmul.f32 %v4575, %v4575
        %v4647 = vmul.f32 %v4464, %v4464
        %v4648 = vmul.f32 %v4466, %v4466
        %v4649 = vmul.f32 %v4577, %v4577
        %v4650 = vmul.f32 %v4579, %v4579
        %v4651 = vmul.f32 %v4470, %v4470
        %v4652 = vmul.f32 %v4472, %v4472
        %v4653 = vmul.f32 %v4583, %v4583
        %v4654 = vmul.f32 %v4585, %v4585
        %v4655 = vmul.f32 %v4474, %v4474
        %v4656 = vmul.f32 %v4476, %v4476
        %v4657 = vmul.f32 %v4587, %v4587
        %v4658 = vmul.f32 %v4589, %v4589
        %v4659 = vmul.f32 %v4480, %v4480
        %v4660 = vmul.f32 %v4482, %v4482
        %v4661 = vmul.f32 %v4593, %v4593
        %v4662 = vmul.f32 %v4595, %v4595
        %v4663 = vmul.f32 %v4484, %v4484
        %v4664 = vmul.f32 %v4486, %v4486
        %v4665 = vmul.f32 %v4597, %v4597
        %v4666 = vmul.f32 %v4599, %v4599
        %v4667 = vmul.f32 %v4490, %v4490
        %v4668 = vmul.f32 %v4492, %v4492
        %v4669 = vmul.f32 %v4603, %v4603
        %v4670 = vmul.f32 %v4605, %v4605
        %v4671 = vmul.f32 %v4494, %v4494
        %v4672 = vmul.f32 %v4496, %v4496
        %v4673 = vmul.f32 %v4607, %v4607
        %v4674 = vmul.f32 %v4609, %v4609
        %v4675 = vmul.f32 %v4420, %v4611
        %v4676 = vmul.f32 %v4422, %v4612
        %v4677 = vmul.f32 %v4533, %v4613
        %v4678 = vmul.f32 %v4535, %v4614
        %v4679 = vmul.f32 %v4424, %v4615
        %v4680 = vmul.f32 %v4426, %v4616
        %v4681 = vmul.f32 %v4537, %v4617
        %v4682 = vmul.f32 %v4539, %v4618
        %v4683 = vmul.f32 %v4430, %v4619
        %v4684 = vmul.f32 %v4432, %v4620
        %v4685 = vmul.f32 %v4543, %v4621
        %v4686 = vmul.f32 %v4545, %v4622
        %v4687 = vmul.f32 %v4434, %v4623
        %v4688 = vmul.f32 %v4436, %v4624
        %v4689 = vmul.f32 %v4547, %v4625
        %v4690 = vmul.f32 %v4549, %v4626
        %v4691 = vmul.f32 %v4440, %v4627
        %v4692 = vmul.f32 %v4442, %v4628
        %v4693 = vmul.f32 %v4553, %v4629
        %v4694 = vmul.f32 %v4555, %v4630
        %v4695 = vmul.f32 %v4444, %v4631
        %v4696 = vmul.f32 %v4446, %v4632
        %v4697 = vmul.f32 %v4557, %v4633
        %v4698 = vmul.f32 %v4559, %v4634
        %v4699 = vmul.f32 %v4450, %v4635
        %v4700 = vmul.f32 %v4452, %v4636
        %v4701 = vmul.f32 %v4563, %v4637
        %v4702 = vmul.f32 %v4565, %v4638
        %v4703 = vmul.f32 %v4454, %v4639
        %v4704 = vmul.f32 %v4456, %v4640
        %v4705 = vmul.f32 %v4567, %v4641
        %v4706 = vmul.f32 %v4569, %v4642
        %v4707 = vmul.f32 %v4460, %v4643
        %v4708 = vmul.f32 %v4462, %v4644
        %v4709 = vmul.f32 %v4573, %v4645
        %v4710 = vmul.f32 %v4575, %v4646
        %v4711 = vmul.f32 %v4464, %v4647
        %v4712 = vmul.f32 %v4466, %v4648
        %v4713 = vmul.f32 %v4577, %v4649
        %v4714 = vmul.f32 %v4579, %v4650
        %v4715 = vmul.f32 %v4470, %v4651
        %v4716 = vmul.f32 %v4472, %v4652
        %v4717 = vmul.f32 %v4583, %v4653
        %v4718 = vmul.f32 %v4585, %v4654
        %v4719 = vmul.f32 %v4474, %v4655
        %v4720 = vmul.f32 %v4476, %v4656
        %v4721 = vmul.f32 %v4587, %v4657
        %v4722 = vmul.f32 %v4589, %v4658
        %v4723 = vmul.f32 %v4480, %v4659
        %v4724 = vmul.f32 %v4482, %v4660
        %v4725 = vmul.f32 %v4593, %v4661
        %v4726 = vmul.f32 %v4595, %v4662
        %v4727 = vmul.f32 %v4484, %v4663
        %v4728 = vmul.f32 %v4486, %v4664
        %v4729 = vmul.f32 %v4597, %v4665
        %v4730 = vmul.f32 %v4599, %v4666
        %v4731 = vmul.f32 %v4490, %v4667
        %v4732 = vmul.f32 %v4492, %v4668
        %v4733 = vmul.f32 %v4603, %v4669
        %v4734 = vmul.f32 %v4605, %v4670
        %v4735 = vmul.f32 %v4494, %v4671
        %v4736 = vmul.f32 %v4496, %v4672
        %v4737 = vmul.f32 %v4607, %v4673
        %v4738 = vmul.f32 %v4609, %v4674
        %v4739 = vmul.f32 %v4675, 0.044715
        %v4740 = vmul.f32 %v4676, 0.044715
        %v4741 = vmul.f32 %v4677, 0.044715
        %v4742 = vmul.f32 %v4678, 0.044715
        %v4743 = vmul.f32 %v4679, 0.044715
        %v4744 = vmul.f32 %v4680, 0.044715
        %v4745 = vmul.f32 %v4681, 0.044715
        %v4746 = vmul.f32 %v4682, 0.044715
        %v4747 = vmul.f32 %v4683, 0.044715
        %v4748 = vmul.f32 %v4684, 0.044715
        %v4749 = vmul.f32 %v4685, 0.044715
        %v4750 = vmul.f32 %v4686, 0.044715
        %v4751 = vmul.f32 %v4687, 0.044715
        %v4752 = vmul.f32 %v4688, 0.044715
        %v4753 = vmul.f32 %v4689, 0.044715
        %v4754 = vmul.f32 %v4690, 0.044715
        %v4755 = vmul.f32 %v4691, 0.044715
        %v4756 = vmul.f32 %v4692, 0.044715
        %v4757 = vmul.f32 %v4693, 0.044715
        %v4758 = vmul.f32 %v4694, 0.044715
        %v4759 = vmul.f32 %v4695, 0.044715
        %v4760 = vmul.f32 %v4696, 0.044715
        %v4761 = vmul.f32 %v4697, 0.044715
        %v4762 = vmul.f32 %v4698, 0.044715
        %v4763 = vmul.f32 %v4699, 0.044715
        %v4764 = vmul.f32 %v4700, 0.044715
        %v4765 = vmul.f32 %v4701, 0.044715
        %v4766 = vmul.f32 %v4702, 0.044715
        %v4767 = vmul.f32 %v4703, 0.044715
        %v4768 = vmul.f32 %v4704, 0.044715
        %v4769 = vmul.f32 %v4705, 0.044715
        %v4770 = vmul.f32 %v4706, 0.044715
        %v4771 = vmul.f32 %v4707, 0.044715
        %v4772 = vmul.f32 %v4708, 0.044715
        %v4773 = vmul.f32 %v4709, 0.044715
        %v4774 = vmul.f32 %v4710, 0.044715
        %v4775 = vmul.f32 %v4711, 0.044715
        %v4776 = vmul.f32 %v4712, 0.044715
        %v4777 = vmul.f32 %v4713, 0.044715
        %v4778 = vmul.f32 %v4714, 0.044715
        %v4779 = vmul.f32 %v4715, 0.044715
        %v4780 = vmul.f32 %v4716, 0.044715
        %v4781 = vmul.f32 %v4717, 0.044715
        %v4782 = vmul.f32 %v4718, 0.044715
        %v4783 = vmul.f32 %v4719, 0.044715
        %v4784 = vmul.f32 %v4720, 0.044715
        %v4785 = vmul.f32 %v4721, 0.044715
        %v4786 = vmul.f32 %v4722, 0.044715
        %v4787 = vmul.f32 %v4723, 0.044715
        %v4788 = vmul.f32 %v4724, 0.044715
        %v4789 = vmul.f32 %v4725, 0.044715
        %v4790 = vmul.f32 %v4726, 0.044715
        %v4791 = vmul.f32 %v4727, 0.044715
        %v4792 = vmul.f32 %v4728, 0.044715
        %v4793 = vmul.f32 %v4729, 0.044715
        %v4794 = vmul.f32 %v4730, 0.044715
        %v4795 = vmul.f32 %v4731, 0.044715
        %v4796 = vmul.f32 %v4732, 0.044715
        %v4797 = vmul.f32 %v4733, 0.044715
        %v4798 = vmul.f32 %v4734, 0.044715
        %v4799 = vmul.f32 %v4735, 0.044715
        %v4800 = vmul.f32 %v4736, 0.044715
        %v4801 = vmul.f32 %v4737, 0.044715
        %v4802 = vmul.f32 %v4738, 0.044715
        %v4803 = vadd.f32 %v4420, %v4739
        %v4804 = vadd.f32 %v4422, %v4740
        %v4805 = vadd.f32 %v4533, %v4741
        %v4806 = vadd.f32 %v4535, %v4742
        %v4807 = vadd.f32 %v4424, %v4743
        %v4808 = vadd.f32 %v4426, %v4744
        %v4809 = vadd.f32 %v4537, %v4745
        %v4810 = vadd.f32 %v4539, %v4746
        %v4811 = vadd.f32 %v4430, %v4747
        %v4812 = vadd.f32 %v4432, %v4748
        %v4813 = vadd.f32 %v4543, %v4749
        %v4814 = vadd.f32 %v4545, %v4750
        %v4815 = vadd.f32 %v4434, %v4751
        %v4816 = vadd.f32 %v4436, %v4752
        %v4817 = vadd.f32 %v4547, %v4753
        %v4818 = vadd.f32 %v4549, %v4754
        %v4819 = vadd.f32 %v4440, %v4755
        %v4820 = vadd.f32 %v4442, %v4756
        %v4821 = vadd.f32 %v4553, %v4757
        %v4822 = vadd.f32 %v4555, %v4758
        %v4823 = vadd.f32 %v4444, %v4759
        %v4824 = vadd.f32 %v4446, %v4760
        %v4825 = vadd.f32 %v4557, %v4761
        %v4826 = vadd.f32 %v4559, %v4762
        %v4827 = vadd.f32 %v4450, %v4763
        %v4828 = vadd.f32 %v4452, %v4764
        %v4829 = vadd.f32 %v4563, %v4765
        %v4830 = vadd.f32 %v4565, %v4766
        %v4831 = vadd.f32 %v4454, %v4767
        %v4832 = vadd.f32 %v4456, %v4768
        %v4833 = vadd.f32 %v4567, %v4769
        %v4834 = vadd.f32 %v4569, %v4770
        %v4835 = vadd.f32 %v4460, %v4771
        %v4836 = vadd.f32 %v4462, %v4772
        %v4837 = vadd.f32 %v4573, %v4773
        %v4838 = vadd.f32 %v4575, %v4774
        %v4839 = vadd.f32 %v4464, %v4775
        %v4840 = vadd.f32 %v4466, %v4776
        %v4841 = vadd.f32 %v4577, %v4777
        %v4842 = vadd.f32 %v4579, %v4778
        %v4843 = vadd.f32 %v4470, %v4779
        %v4844 = vadd.f32 %v4472, %v4780
        %v4845 = vadd.f32 %v4583, %v4781
        %v4846 = vadd.f32 %v4585, %v4782
        %v4847 = vadd.f32 %v4474, %v4783
        %v4848 = vadd.f32 %v4476, %v4784
        %v4849 = vadd.f32 %v4587, %v4785
        %v4850 = vadd.f32 %v4589, %v4786
        %v4851 = vadd.f32 %v4480, %v4787
        %v4852 = vadd.f32 %v4482, %v4788
        %v4853 = vadd.f32 %v4593, %v4789
        %v4854 = vadd.f32 %v4595, %v4790
        %v4855 = vadd.f32 %v4484, %v4791
        %v4856 = vadd.f32 %v4486, %v4792
        %v4857 = vadd.f32 %v4597, %v4793
        %v4858 = vadd.f32 %v4599, %v4794
        %v4859 = vadd.f32 %v4490, %v4795
        %v4860 = vadd.f32 %v4492, %v4796
        %v4861 = vadd.f32 %v4603, %v4797
        %v4862 = vadd.f32 %v4605, %v4798
        %v4863 = vadd.f32 %v4494, %v4799
        %v4864 = vadd.f32 %v4496, %v4800
        %v4865 = vadd.f32 %v4607, %v4801
        %v4866 = vadd.f32 %v4609, %v4802
        %v4867 = vmul.f32 %v4803, 0.7978846
        %v4868 = vmul.f32 %v4804, 0.7978846
        %v4869 = vmul.f32 %v4805, 0.7978846
        %v4870 = vmul.f32 %v4806, 0.7978846
        %v4871 = vmul.f32 %v4807, 0.7978846
        %v4872 = vmul.f32 %v4808, 0.7978846
        %v4873 = vmul.f32 %v4809, 0.7978846
        %v4874 = vmul.f32 %v4810, 0.7978846
        %v4875 = vmul.f32 %v4811, 0.7978846
        %v4876 = vmul.f32 %v4812, 0.7978846
        %v4877 = vmul.f32 %v4813, 0.7978846
        %v4878 = vmul.f32 %v4814, 0.7978846
        %v4879 = vmul.f32 %v4815, 0.7978846
        %v4880 = vmul.f32 %v4816, 0.7978846
        %v4881 = vmul.f32 %v4817, 0.7978846
        %v4882 = vmul.f32 %v4818, 0.7978846
        %v4883 = vmul.f32 %v4819, 0.7978846
        %v4884 = vmul.f32 %v4820, 0.7978846
        %v4885 = vmul.f32 %v4821, 0.7978846
        %v4886 = vmul.f32 %v4822, 0.7978846
        %v4887 = vmul.f32 %v4823, 0.7978846
        %v4888 = vmul.f32 %v4824, 0.7978846
        %v4889 = vmul.f32 %v4825, 0.7978846
        %v4890 = vmul.f32 %v4826, 0.7978846
        %v4891 = vmul.f32 %v4827, 0.7978846
        %v4892 = vmul.f32 %v4828, 0.7978846
        %v4893 = vmul.f32 %v4829, 0.7978846
        %v4894 = vmul.f32 %v4830, 0.7978846
        %v4895 = vmul.f32 %v4831, 0.7978846
        %v4896 = vmul.f32 %v4832, 0.7978846
        %v4897 = vmul.f32 %v4833, 0.7978846
        %v4898 = vmul.f32 %v4834, 0.7978846
        %v4899 = vmul.f32 %v4835, 0.7978846
        %v4900 = vmul.f32 %v4836, 0.7978846
        %v4901 = vmul.f32 %v4837, 0.7978846
        %v4902 = vmul.f32 %v4838, 0.7978846
        %v4903 = vmul.f32 %v4839, 0.7978846
        %v4904 = vmul.f32 %v4840, 0.7978846
        %v4905 = vmul.f32 %v4841, 0.7978846
        %v4906 = vmul.f32 %v4842, 0.7978846
        %v4907 = vmul.f32 %v4843, 0.7978846
        %v4908 = vmul.f32 %v4844, 0.7978846
        %v4909 = vmul.f32 %v4845, 0.7978846
        %v4910 = vmul.f32 %v4846, 0.7978846
        %v4911 = vmul.f32 %v4847, 0.7978846
        %v4912 = vmul.f32 %v4848, 0.7978846
        %v4913 = vmul.f32 %v4849, 0.7978846
        %v4914 = vmul.f32 %v4850, 0.7978846
        %v4915 = vmul.f32 %v4851, 0.7978846
        %v4916 = vmul.f32 %v4852, 0.7978846
        %v4917 = vmul.f32 %v4853, 0.7978846
        %v4918 = vmul.f32 %v4854, 0.7978846
        %v4919 = vmul.f32 %v4855, 0.7978846
        %v4920 = vmul.f32 %v4856, 0.7978846
        %v4921 = vmul.f32 %v4857, 0.7978846
        %v4922 = vmul.f32 %v4858, 0.7978846
        %v4923 = vmul.f32 %v4859, 0.7978846
        %v4924 = vmul.f32 %v4860, 0.7978846
        %v4925 = vmul.f32 %v4861, 0.7978846
        %v4926 = vmul.f32 %v4862, 0.7978846
        %v4927 = vmul.f32 %v4863, 0.7978846
        %v4928 = vmul.f32 %v4864, 0.7978846
        %v4929 = vmul.f32 %v4865, 0.7978846
        %v4930 = vmul.f32 %v4866, 0.7978846
        %v4931 = vtanh.pop %v4867
        %v4932 = vtanh.pop %v4868
        %v4933 = vtanh.pop %v4869
        %v4934 = vtanh.pop %v4870
        %v4935 = vtanh.pop %v4871
        %v4936 = vtanh.pop %v4872
        %v4937 = vtanh.pop %v4873
        %v4938 = vtanh.pop %v4874
        %v4939 = vtanh.pop %v4875
        %v4940 = vtanh.pop %v4876
        %v4941 = vtanh.pop %v4877
        %v4942 = vtanh.pop %v4878
        %v4943 = vtanh.pop %v4879
        %v4944 = vtanh.pop %v4880
        %v4945 = vtanh.pop %v4881
        %v4946 = vtanh.pop %v4882
        %v4947 = vtanh.pop %v4883
        %v4948 = vtanh.pop %v4884
        %v4949 = vtanh.pop %v4885
        %v4950 = vtanh.pop %v4886
        %v4951 = vtanh.pop %v4887
        %v4952 = vtanh.pop %v4888
        %v4953 = vtanh.pop %v4889
        %v4954 = vtanh.pop %v4890
        %v4955 = vtanh.pop %v4891
        %v4956 = vtanh.pop %v4892
        %v4957 = vtanh.pop %v4893
        %v4958 = vtanh.pop %v4894
        %v4959 = vtanh.pop %v4895
        %v4960 = vtanh.pop %v4896
        %v4961 = vtanh.pop %v4897
        %v4962 = vtanh.pop %v4898
        %v4963 = vtanh.pop %v4899
        %v4964 = vtanh.pop %v4900
        %v4965 = vtanh.pop %v4901
        %v4966 = vtanh.pop %v4902
        %v4967 = vtanh.pop %v4903
        %v4968 = vtanh.pop %v4904
        %v4969 = vtanh.pop %v4905
        %v4970 = vtanh.pop %v4906
        %v4971 = vtanh.pop %v4907
        %v4972 = vtanh.pop %v4908
        %v4973 = vtanh.pop %v4909
        %v4974 = vtanh.pop %v4910
        %v4975 = vtanh.pop %v4911
        %v4976 = vtanh.pop %v4912
        %v4977 = vtanh.pop %v4913
        %v4978 = vtanh.pop %v4914
        %v4979 = vtanh.pop %v4915
        %v4980 = vtanh.pop %v4916
        %v4981 = vtanh.pop %v4917
        %v4982 = vtanh.pop %v4918
        %v4983 = vtanh.pop %v4919
        %v4984 = vtanh.pop %v4920
        %v4985 = vtanh.pop %v4921
        %v4986 = vtanh.pop %v4922
        %v4987 = vtanh.pop %v4923
        %v4988 = vtanh.pop %v4924
        %v4989 = vtanh.pop %v4925
        %v4990 = vtanh.pop %v4926
        %v4991 = vtanh.pop %v4927
        %v4992 = vtanh.pop %v4928
        %v4993 = vtanh.pop %v4929
        %v4994 = vtanh.pop %v4930
        %v4995 = vadd.f32 %v4931, 1.0
        %v4996 = vadd.f32 %v4932, 1.0
        %v4997 = vadd.f32 %v4933, 1.0
        %v4998 = vadd.f32 %v4934, 1.0
        %v4999 = vadd.f32 %v4935, 1.0
        %v5000 = vadd.f32 %v4936, 1.0
        %v5001 = vadd.f32 %v4937, 1.0
        %v5002 = vadd.f32 %v4938, 1.0
        %v5003 = vadd.f32 %v4939, 1.0
        %v5004 = vadd.f32 %v4940, 1.0
        %v5005 = vadd.f32 %v4941, 1.0
        %v5006 = vadd.f32 %v4942, 1.0
        %v5007 = vadd.f32 %v4943, 1.0
        %v5008 = vadd.f32 %v4944, 1.0
        %v5009 = vadd.f32 %v4945, 1.0
        %v5010 = vadd.f32 %v4946, 1.0
        %v5011 = vadd.f32 %v4947, 1.0
        %v5012 = vadd.f32 %v4948, 1.0
        %v5013 = vadd.f32 %v4949, 1.0
        %v5014 = vadd.f32 %v4950, 1.0
        %v5015 = vadd.f32 %v4951, 1.0
        %v5016 = vadd.f32 %v4952, 1.0
        %v5017 = vadd.f32 %v4953, 1.0
        %v5018 = vadd.f32 %v4954, 1.0
        %v5019 = vadd.f32 %v4955, 1.0
        %v5020 = vadd.f32 %v4956, 1.0
        %v5021 = vadd.f32 %v4957, 1.0
        %v5022 = vadd.f32 %v4958, 1.0
        %v5023 = vadd.f32 %v4959, 1.0
        %v5024 = vadd.f32 %v4960, 1.0
        %v5025 = vadd.f32 %v4961, 1.0
        %v5026 = vadd.f32 %v4962, 1.0
        %v5027 = vadd.f32 %v4963, 1.0
        %v5028 = vadd.f32 %v4964, 1.0
        %v5029 = vadd.f32 %v4965, 1.0
        %v5030 = vadd.f32 %v4966, 1.0
        %v5031 = vadd.f32 %v4967, 1.0
        %v5032 = vadd.f32 %v4968, 1.0
        %v5033 = vadd.f32 %v4969, 1.0
        %v5034 = vadd.f32 %v4970, 1.0
        %v5035 = vadd.f32 %v4971, 1.0
        %v5036 = vadd.f32 %v4972, 1.0
        %v5037 = vadd.f32 %v4973, 1.0
        %v5038 = vadd.f32 %v4974, 1.0
        %v5039 = vadd.f32 %v4975, 1.0
        %v5040 = vadd.f32 %v4976, 1.0
        %v5041 = vadd.f32 %v4977, 1.0
        %v5042 = vadd.f32 %v4978, 1.0
        %v5043 = vadd.f32 %v4979, 1.0
        %v5044 = vadd.f32 %v4980, 1.0
        %v5045 = vadd.f32 %v4981, 1.0
        %v5046 = vadd.f32 %v4982, 1.0
        %v5047 = vadd.f32 %v4983, 1.0
        %v5048 = vadd.f32 %v4984, 1.0
        %v5049 = vadd.f32 %v4985, 1.0
        %v5050 = vadd.f32 %v4986, 1.0
        %v5051 = vadd.f32 %v4987, 1.0
        %v5052 = vadd.f32 %v4988, 1.0
        %v5053 = vadd.f32 %v4989, 1.0
        %v5054 = vadd.f32 %v4990, 1.0
        %v5055 = vadd.f32 %v4991, 1.0
        %v5056 = vadd.f32 %v4992, 1.0
        %v5057 = vadd.f32 %v4993, 1.0
        %v5058 = vadd.f32 %v4994, 1.0
        %v5059 = vmul.f32 %v4995, 0.5
        %v5060 = vmul.f32 %v4996, 0.5
        %v5061 = vmul.f32 %v4997, 0.5
        %v5062 = vmul.f32 %v4998, 0.5
        %v5063 = vmul.f32 %v4999, 0.5
        %v5064 = vmul.f32 %v5000, 0.5
        %v5065 = vmul.f32 %v5001, 0.5
        %v5066 = vmul.f32 %v5002, 0.5
        %v5067 = vmul.f32 %v5003, 0.5
        %v5068 = vmul.f32 %v5004, 0.5
        %v5069 = vmul.f32 %v5005, 0.5
        %v5070 = vmul.f32 %v5006, 0.5
        %v5071 = vmul.f32 %v5007, 0.5
        %v5072 = vmul.f32 %v5008, 0.5
        %v5073 = vmul.f32 %v5009, 0.5
        %v5074 = vmul.f32 %v5010, 0.5
        %v5075 = vmul.f32 %v5011, 0.5
        %v5076 = vmul.f32 %v5012, 0.5
        %v5077 = vmul.f32 %v5013, 0.5
        %v5078 = vmul.f32 %v5014, 0.5
        %v5079 = vmul.f32 %v5015, 0.5
        %v5080 = vmul.f32 %v5016, 0.5
        %v5081 = vmul.f32 %v5017, 0.5
        %v5082 = vmul.f32 %v5018, 0.5
        %v5083 = vmul.f32 %v5019, 0.5
        %v5084 = vmul.f32 %v5020, 0.5
        %v5085 = vmul.f32 %v5021, 0.5
        %v5086 = vmul.f32 %v5022, 0.5
        %v5087 = vmul.f32 %v5023, 0.5
        %v5088 = vmul.f32 %v5024, 0.5
        %v5089 = vmul.f32 %v5025, 0.5
        %v5090 = vmul.f32 %v5026, 0.5
        %v5091 = vmul.f32 %v5027, 0.5
        %v5092 = vmul.f32 %v5028, 0.5
        %v5093 = vmul.f32 %v5029, 0.5
        %v5094 = vmul.f32 %v5030, 0.5
        %v5095 = vmul.f32 %v5031, 0.5
        %v5096 = vmul.f32 %v5032, 0.5
        %v5097 = vmul.f32 %v5033, 0.5
        %v5098 = vmul.f32 %v5034, 0.5
        %v5099 = vmul.f32 %v5035, 0.5
        %v5100 = vmul.f32 %v5036, 0.5
        %v5101 = vmul.f32 %v5037, 0.5
        %v5102 = vmul.f32 %v5038, 0.5
        %v5103 = vmul.f32 %v5039, 0.5
        %v5104 = vmul.f32 %v5040, 0.5
        %v5105 = vmul.f32 %v5041, 0.5
        %v5106 = vmul.f32 %v5042, 0.5
        %v5107 = vmul.f32 %v5043, 0.5
        %v5108 = vmul.f32 %v5044, 0.5
        %v5109 = vmul.f32 %v5045, 0.5
        %v5110 = vmul.f32 %v5046, 0.5
        %v5111 = vmul.f32 %v5047, 0.5
        %v5112 = vmul.f32 %v5048, 0.5
        %v5113 = vmul.f32 %v5049, 0.5
        %v5114 = vmul.f32 %v5050, 0.5
        %v5115 = vmul.f32 %v5051, 0.5
        %v5116 = vmul.f32 %v5052, 0.5
        %v5117 = vmul.f32 %v5053, 0.5
        %v5118 = vmul.f32 %v5054, 0.5
        %v5119 = vmul.f32 %v5055, 0.5
        %v5120 = vmul.f32 %v5056, 0.5
        %v5121 = vmul.f32 %v5057, 0.5
        %v5122 = vmul.f32 %v5058, 0.5
        %v5123 = vmul.f32 %v4420, %v5059
        %v5124 = vmul.f32 %v4422, %v5060
        %v5125 = vmul.f32 %v4533, %v5061
        %v5126 = vmul.f32 %v4535, %v5062
        %v5127 = vmul.f32 %v4424, %v5063
        %v5128 = vmul.f32 %v4426, %v5064
        %v5129 = vmul.f32 %v4537, %v5065
        %v5130 = vmul.f32 %v4539, %v5066
        %v5131 = vmul.f32 %v4430, %v5067
        %v5132 = vmul.f32 %v4432, %v5068
        %v5133 = vmul.f32 %v4543, %v5069
        %v5134 = vmul.f32 %v4545, %v5070
        %v5135 = vmul.f32 %v4434, %v5071
        %v5136 = vmul.f32 %v4436, %v5072
        %v5137 = vmul.f32 %v4547, %v5073
        %v5138 = vmul.f32 %v4549, %v5074
        %v5139 = vmul.f32 %v4440, %v5075
        %v5140 = vmul.f32 %v4442, %v5076
        %v5141 = vmul.f32 %v4553, %v5077
        %v5142 = vmul.f32 %v4555, %v5078
        %v5143 = vmul.f32 %v4444, %v5079
        %v5144 = vmul.f32 %v4446, %v5080
        %v5145 = vmul.f32 %v4557, %v5081
        %v5146 = vmul.f32 %v4559, %v5082
        %v5147 = vmul.f32 %v4450, %v5083
        %v5148 = vmul.f32 %v4452, %v5084
        %v5149 = vmul.f32 %v4563, %v5085
        %v5150 = vmul.f32 %v4565, %v5086
        %v5151 = vmul.f32 %v4454, %v5087
        %v5152 = vmul.f32 %v4456, %v5088
        %v5153 = vmul.f32 %v4567, %v5089
        %v5154 = vmul.f32 %v4569, %v5090
        %v5155 = vmul.f32 %v4460, %v5091
        %v5156 = vmul.f32 %v4462, %v5092
        %v5157 = vmul.f32 %v4573, %v5093
        %v5158 = vmul.f32 %v4575, %v5094
        %v5159 = vmul.f32 %v4464, %v5095
        %v5160 = vmul.f32 %v4466, %v5096
        %v5161 = vmul.f32 %v4577, %v5097
        %v5162 = vmul.f32 %v4579, %v5098
        %v5163 = vmul.f32 %v4470, %v5099
        %v5164 = vmul.f32 %v4472, %v5100
        %v5165 = vmul.f32 %v4583, %v5101
        %v5166 = vmul.f32 %v4585, %v5102
        %v5167 = vmul.f32 %v4474, %v5103
        %v5168 = vmul.f32 %v4476, %v5104
        %v5169 = vmul.f32 %v4587, %v5105
        %v5170 = vmul.f32 %v4589, %v5106
        %v5171 = vmul.f32 %v4480, %v5107
        %v5172 = vmul.f32 %v4482, %v5108
        %v5173 = vmul.f32 %v4593, %v5109
        %v5174 = vmul.f32 %v4595, %v5110
        %v5175 = vmul.f32 %v4484, %v5111
        %v5176 = vmul.f32 %v4486, %v5112
        %v5177 = vmul.f32 %v4597, %v5113
        %v5178 = vmul.f32 %v4599, %v5114
        %v5179 = vmul.f32 %v4490, %v5115
        %v5180 = vmul.f32 %v4492, %v5116
        %v5181 = vmul.f32 %v4603, %v5117
        %v5182 = vmul.f32 %v4605, %v5118
        %v5183 = vmul.f32 %v4494, %v5119
        %v5184 = vmul.f32 %v4496, %v5120
        %v5185 = vmul.f32 %v4607, %v5121
        %v5186 = vmul.f32 %v4609, %v5122
        %v5187 = vpack.c.bf16 %v5127, %v5123
        %v5188 = vpack.c.bf16 %v5128, %v5124
        %v5189 = vpack.c.bf16 %v5129, %v5125
        %v5190 = vpack.c.bf16 %v5130, %v5126
        %v5191 = vpack.c.bf16 %v5135, %v5131
        %v5192 = vpack.c.bf16 %v5136, %v5132
        %v5193 = vpack.c.bf16 %v5137, %v5133
        %v5194 = vpack.c.bf16 %v5138, %v5134
        %v5195 = vpack.c.bf16 %v5143, %v5139
        %v5196 = vpack.c.bf16 %v5144, %v5140
        %v5197 = vpack.c.bf16 %v5145, %v5141
        %v5198 = vpack.c.bf16 %v5146, %v5142
        %v5199 = vpack.c.bf16 %v5151, %v5147
        %v5200 = vpack.c.bf16 %v5152, %v5148
        %v5201 = vpack.c.bf16 %v5153, %v5149
        %v5202 = vpack.c.bf16 %v5154, %v5150
        %v5203 = vpack.c.bf16 %v5159, %v5155
        %v5204 = vpack.c.bf16 %v5160, %v5156
        %v5205 = vpack.c.bf16 %v5161, %v5157
        %v5206 = vpack.c.bf16 %v5162, %v5158
        %v5207 = vpack.c.bf16 %v5167, %v5163
        %v5208 = vpack.c.bf16 %v5168, %v5164
        %v5209 = vpack.c.bf16 %v5169, %v5165
        %v5210 = vpack.c.bf16 %v5170, %v5166
        %v5211 = vpack.c.bf16 %v5175, %v5171
        %v5212 = vpack.c.bf16 %v5176, %v5172
        %v5213 = vpack.c.bf16 %v5177, %v5173
        %v5214 = vpack.c.bf16 %v5178, %v5174
        %v5215 = vpack.c.bf16 %v5183, %v5179
        %v5216 = vpack.c.bf16 %v5184, %v5180
        %v5217 = vpack.c.bf16 %v5185, %v5181
        %v5218 = vpack.c.bf16 %v5186, %v5182
        %v5219 = vld [vmem:[#allocation14] sm:$0xff]
        %v5220 = vld [vmem:[#allocation14 + $0x8] sm:$0xff]
        %v5221 = vld [vmem:[#allocation14 + $0x10] sm:$0xff]
        %v5222 = vld [vmem:[#allocation14 + $0x18] sm:$0xff]
        %v5223 = vld [vmem:[#allocation14 + $0x20] sm:$0xff]
        %v5224 = vld [vmem:[#allocation14 + $0x28] sm:$0xff]
        %v5225 = vld [vmem:[#allocation14 + $0x30] sm:$0xff]
        %v5226 = vld [vmem:[#allocation14 + $0x38] sm:$0xff]
        %v5227 = vld [vmem:[#allocation14 + $0x40] sm:$0xff]
        %v5228 = vld [vmem:[#allocation14 + $0x48] sm:$0xff]
        %v5229 = vld [vmem:[#allocation14 + $0x50] sm:$0xff]
        %v5230 = vld [vmem:[#allocation14 + $0x58] sm:$0xff]
        %v5231 = vld [vmem:[#allocation14 + $0x60] sm:$0xff]
        %v5232 = vld [vmem:[#allocation14 + $0x68] sm:$0xff]
        %v5233 = vld [vmem:[#allocation14 + $0x70] sm:$0xff]
        %v5234 = vld [vmem:[#allocation14 + $0x78] sm:$0xff]
        %v5235 = vld [vmem:[#allocation14 + $0x80] sm:$0xff]
        %v5236 = vld [vmem:[#allocation14 + $0x88] sm:$0xff]
        %v5237 = vld [vmem:[#allocation14 + $0x90] sm:$0xff]
        %v5238 = vld [vmem:[#allocation14 + $0x98] sm:$0xff]
        %v5239 = vld [vmem:[#allocation14 + $0xa0] sm:$0xff]
        %v5240 = vld [vmem:[#allocation14 + $0xa8] sm:$0xff]
        %v5241 = vld [vmem:[#allocation14 + $0xb0] sm:$0xff]
        %v5242 = vld [vmem:[#allocation14 + $0xb8] sm:$0xff]
        %v5243 = vld [vmem:[#allocation14 + $0xc0] sm:$0xff]
        %v5244 = vld [vmem:[#allocation14 + $0xc8] sm:$0xff]
        %v5245 = vld [vmem:[#allocation14 + $0xd0] sm:$0xff]
        %v5246 = vld [vmem:[#allocation14 + $0xd8] sm:$0xff]
        %v5247 = vld [vmem:[#allocation14 + $0xe0] sm:$0xff]
        %v5248 = vld [vmem:[#allocation14 + $0xe8] sm:$0xff]
        %v5249 = vld [vmem:[#allocation14 + $0xf0] sm:$0xff]
        %v5250 = vld [vmem:[#allocation14 + $0xf8] sm:$0xff]
        %v5251 = vld [vmem:[#allocation14 + $0x100] sm:$0xff]
        %v5252 = vld [vmem:[#allocation14 + $0x108] sm:$0xff]
        %v5253 = vld [vmem:[#allocation14 + $0x110] sm:$0xff]
        %v5254 = vld [vmem:[#allocation14 + $0x118] sm:$0xff]
        %v5255 = vld [vmem:[#allocation14 + $0x120] sm:$0xff]
        %v5256 = vld [vmem:[#allocation14 + $0x128] sm:$0xff]
        %v5257 = vld [vmem:[#allocation14 + $0x130] sm:$0xff]
        %v5258 = vld [vmem:[#allocation14 + $0x138] sm:$0xff]
        %v5259 = vld [vmem:[#allocation14 + $0x140] sm:$0xff]
        %v5260 = vld [vmem:[#allocation14 + $0x148] sm:$0xff]
        %v5261 = vld [vmem:[#allocation14 + $0x150] sm:$0xff]
        %v5262 = vld [vmem:[#allocation14 + $0x158] sm:$0xff]
        %v5263 = vld [vmem:[#allocation14 + $0x160] sm:$0xff]
        %v5264 = vld [vmem:[#allocation14 + $0x168] sm:$0xff]
        %v5265 = vld [vmem:[#allocation14 + $0x170] sm:$0xff]
        %v5266 = vld [vmem:[#allocation14 + $0x178] sm:$0xff]
        %v5267 = vld [vmem:[#allocation14 + $0x180] sm:$0xff]
        %v5268 = vld [vmem:[#allocation14 + $0x188] sm:$0xff]
        %v5269 = vld [vmem:[#allocation14 + $0x190] sm:$0xff]
        %v5270 = vld [vmem:[#allocation14 + $0x198] sm:$0xff]
        %v5271 = vld [vmem:[#allocation14 + $0x1a0] sm:$0xff]
        %v5272 = vld [vmem:[#allocation14 + $0x1a8] sm:$0xff]
        %v5273 = vld [vmem:[#allocation14 + $0x1b0] sm:$0xff]
        %v5274 = vld [vmem:[#allocation14 + $0x1b8] sm:$0xff]
        %v5275 = vld [vmem:[#allocation14 + $0x1c0] sm:$0xff]
        %v5276 = vld [vmem:[#allocation14 + $0x1c8] sm:$0xff]
        %v5277 = vld [vmem:[#allocation14 + $0x1d0] sm:$0xff]
        %v5278 = vld [vmem:[#allocation14 + $0x1d8] sm:$0xff]
        %v5279 = vld [vmem:[#allocation14 + $0x1e0] sm:$0xff]
        %v5280 = vld [vmem:[#allocation14 + $0x1e8] sm:$0xff]
        %v5281 = vld [vmem:[#allocation14 + $0x1f0] sm:$0xff]
        %v5282 = vld [vmem:[#allocation14 + $0x1f8] sm:$0xff]
        %v5283 = vld [vmem:[%s11] sm:$0x3]
        %v5285 = vlaneseq
        %v5286 = vshrl.u32 %v5285, 7
        %v5287 = vsub.s32 0, %v5286
        %v5288 = vrot.slane %v5283, %v5287
        %v5289 = vlaneseq
        %v5290 = vshrl.u32 %v5289, 7
        %v5291 = vsub.s32 1, %v5290
        %v5292 = vrot.slane %v5283, %v5291
        %v5359 = vunpack.c.l.b16 %v5219
        %v5360 = vunpack.c.h.b16 %v5219
        %v5361 = vunpack.c.l.b16 %v5220
        %v5362 = vunpack.c.h.b16 %v5220
        %v5363 = vunpack.c.l.b16 %v5221
        %v5364 = vunpack.c.h.b16 %v5221
        %v5365 = vunpack.c.l.b16 %v5222
        %v5366 = vunpack.c.h.b16 %v5222
        %v5367 = vunpack.c.l.b16 %v5223
        %v5368 = vunpack.c.h.b16 %v5223
        %v5369 = vunpack.c.l.b16 %v5224
        %v5370 = vunpack.c.h.b16 %v5224
        %v5371 = vunpack.c.l.b16 %v5225
        %v5372 = vunpack.c.h.b16 %v5225
        %v5373 = vunpack.c.l.b16 %v5226
        %v5374 = vunpack.c.h.b16 %v5226
        %v5375 = vunpack.c.l.b16 %v5227
        %v5376 = vunpack.c.h.b16 %v5227
        %v5377 = vunpack.c.l.b16 %v5228
        %v5378 = vunpack.c.h.b16 %v5228
        %v5379 = vunpack.c.l.b16 %v5229
        %v5380 = vunpack.c.h.b16 %v5229
        %v5381 = vunpack.c.l.b16 %v5230
        %v5382 = vunpack.c.h.b16 %v5230
        %v5383 = vunpack.c.l.b16 %v5231
        %v5384 = vunpack.c.h.b16 %v5231
        %v5385 = vunpack.c.l.b16 %v5232
        %v5386 = vunpack.c.h.b16 %v5232
        %v5387 = vunpack.c.l.b16 %v5233
        %v5388 = vunpack.c.h.b16 %v5233
        %v5389 = vunpack.c.l.b16 %v5234
        %v5390 = vunpack.c.h.b16 %v5234
        %v5391 = vunpack.c.l.b16 %v5235
        %v5392 = vunpack.c.h.b16 %v5235
        %v5393 = vunpack.c.l.b16 %v5236
        %v5394 = vunpack.c.h.b16 %v5236
        %v5395 = vunpack.c.l.b16 %v5237
        %v5396 = vunpack.c.h.b16 %v5237
        %v5397 = vunpack.c.l.b16 %v5238
        %v5398 = vunpack.c.h.b16 %v5238
        %v5399 = vunpack.c.l.b16 %v5239
        %v5400 = vunpack.c.h.b16 %v5239
        %v5401 = vunpack.c.l.b16 %v5240
        %v5402 = vunpack.c.h.b16 %v5240
        %v5403 = vunpack.c.l.b16 %v5241
        %v5404 = vunpack.c.h.b16 %v5241
        %v5405 = vunpack.c.l.b16 %v5242
        %v5406 = vunpack.c.h.b16 %v5242
        %v5407 = vunpack.c.l.b16 %v5243
        %v5408 = vunpack.c.h.b16 %v5243
        %v5409 = vunpack.c.l.b16 %v5244
        %v5410 = vunpack.c.h.b16 %v5244
        %v5411 = vunpack.c.l.b16 %v5245
        %v5412 = vunpack.c.h.b16 %v5245
        %v5413 = vunpack.c.l.b16 %v5246
        %v5414 = vunpack.c.h.b16 %v5246
        %v5415 = vunpack.c.l.b16 %v5247
        %v5416 = vunpack.c.h.b16 %v5247
        %v5417 = vunpack.c.l.b16 %v5248
        %v5418 = vunpack.c.h.b16 %v5248
        %v5419 = vunpack.c.l.b16 %v5249
        %v5420 = vunpack.c.h.b16 %v5249
        %v5421 = vunpack.c.l.b16 %v5250
        %v5422 = vunpack.c.h.b16 %v5250
        %v5423 = vunpack.c.l.b16 %v5251
        %v5424 = vunpack.c.h.b16 %v5251
        %v5425 = vunpack.c.l.b16 %v5252
        %v5426 = vunpack.c.h.b16 %v5252
        %v5427 = vunpack.c.l.b16 %v5253
        %v5428 = vunpack.c.h.b16 %v5253
        %v5429 = vunpack.c.l.b16 %v5254
        %v5430 = vunpack.c.h.b16 %v5254
        %v5431 = vunpack.c.l.b16 %v5255
        %v5432 = vunpack.c.h.b16 %v5255
        %v5433 = vunpack.c.l.b16 %v5256
        %v5434 = vunpack.c.h.b16 %v5256
        %v5435 = vunpack.c.l.b16 %v5257
        %v5436 = vunpack.c.h.b16 %v5257
        %v5437 = vunpack.c.l.b16 %v5258
        %v5438 = vunpack.c.h.b16 %v5258
        %v5439 = vunpack.c.l.b16 %v5259
        %v5440 = vunpack.c.h.b16 %v5259
        %v5441 = vunpack.c.l.b16 %v5260
        %v5442 = vunpack.c.h.b16 %v5260
        %v5443 = vunpack.c.l.b16 %v5261
        %v5444 = vunpack.c.h.b16 %v5261
        %v5445 = vunpack.c.l.b16 %v5262
        %v5446 = vunpack.c.h.b16 %v5262
        %v5447 = vunpack.c.l.b16 %v5263
        %v5448 = vunpack.c.h.b16 %v5263
        %v5449 = vunpack.c.l.b16 %v5264
        %v5450 = vunpack.c.h.b16 %v5264
        %v5451 = vunpack.c.l.b16 %v5265
        %v5452 = vunpack.c.h.b16 %v5265
        %v5453 = vunpack.c.l.b16 %v5266
        %v5454 = vunpack.c.h.b16 %v5266
        %v5455 = vunpack.c.l.b16 %v5267
        %v5456 = vunpack.c.h.b16 %v5267
        %v5457 = vunpack.c.l.b16 %v5268
        %v5458 = vunpack.c.h.b16 %v5268
        %v5459 = vunpack.c.l.b16 %v5269
        %v5460 = vunpack.c.h.b16 %v5269
        %v5461 = vunpack.c.l.b16 %v5270
        %v5462 = vunpack.c.h.b16 %v5270
        %v5463 = vunpack.c.l.b16 %v5271
        %v5464 = vunpack.c.h.b16 %v5271
        %v5465 = vunpack.c.l.b16 %v5272
        %v5466 = vunpack.c.h.b16 %v5272
        %v5467 = vunpack.c.l.b16 %v5273
        %v5468 = vunpack.c.h.b16 %v5273
        %v5469 = vunpack.c.l.b16 %v5274
        %v5470 = vunpack.c.h.b16 %v5274
        %v5471 = vunpack.c.l.b16 %v5275
        %v5472 = vunpack.c.h.b16 %v5275
        %v5473 = vunpack.c.l.b16 %v5276
        %v5474 = vunpack.c.h.b16 %v5276
        %v5475 = vunpack.c.l.b16 %v5277
        %v5476 = vunpack.c.h.b16 %v5277
        %v5477 = vunpack.c.l.b16 %v5278
        %v5478 = vunpack.c.h.b16 %v5278
        %v5479 = vunpack.c.l.b16 %v5279
        %v5480 = vunpack.c.h.b16 %v5279
        %v5481 = vunpack.c.l.b16 %v5280
        %v5482 = vunpack.c.h.b16 %v5280
        %v5483 = vunpack.c.l.b16 %v5281
        %v5484 = vunpack.c.h.b16 %v5281
        %v5485 = vunpack.c.l.b16 %v5282
        %v5486 = vunpack.c.h.b16 %v5282
        %v5487 = vpack.c.b16 %v5361, %v5359
        %v5488 = vpack.c.b16 %v5362, %v5360
        %v5489 = vpack.c.b16 %v5365, %v5363
        %v5490 = vpack.c.b16 %v5366, %v5364
        %v5491 = vpack.c.b16 %v5369, %v5367
        %v5492 = vpack.c.b16 %v5370, %v5368
        %v5493 = vpack.c.b16 %v5373, %v5371
        %v5494 = vpack.c.b16 %v5374, %v5372
        %v5495 = vpack.c.b16 %v5377, %v5375
        %v5496 = vpack.c.b16 %v5378, %v5376
        %v5497 = vpack.c.b16 %v5381, %v5379
        %v5498 = vpack.c.b16 %v5382, %v5380
        %v5499 = vpack.c.b16 %v5385, %v5383
        %v5500 = vpack.c.b16 %v5386, %v5384
        %v5501 = vpack.c.b16 %v5389, %v5387
        %v5502 = vpack.c.b16 %v5390, %v5388
        %v5503 = vpack.c.b16 %v5393, %v5391
        %v5504 = vpack.c.b16 %v5394, %v5392
        %v5505 = vpack.c.b16 %v5397, %v5395
        %v5506 = vpack.c.b16 %v5398, %v5396
        %v5507 = vpack.c.b16 %v5401, %v5399
        %v5508 = vpack.c.b16 %v5402, %v5400
        %v5509 = vpack.c.b16 %v5405, %v5403
        %v5510 = vpack.c.b16 %v5406, %v5404
        %v5511 = vpack.c.b16 %v5409, %v5407
        %v5512 = vpack.c.b16 %v5410, %v5408
        %v5513 = vpack.c.b16 %v5413, %v5411
        %v5514 = vpack.c.b16 %v5414, %v5412
        %v5515 = vpack.c.b16 %v5417, %v5415
        %v5516 = vpack.c.b16 %v5418, %v5416
        %v5517 = vpack.c.b16 %v5421, %v5419
        %v5518 = vpack.c.b16 %v5422, %v5420
        %v5519 = vpack.c.b16 %v5425, %v5423
        %v5520 = vpack.c.b16 %v5426, %v5424
        %v5521 = vpack.c.b16 %v5429, %v5427
        %v5522 = vpack.c.b16 %v5430, %v5428
        %v5523 = vpack.c.b16 %v5433, %v5431
        %v5524 = vpack.c.b16 %v5434, %v5432
        %v5525 = vpack.c.b16 %v5437, %v5435
        %v5526 = vpack.c.b16 %v5438, %v5436
        %v5527 = vpack.c.b16 %v5441, %v5439
        %v5528 = vpack.c.b16 %v5442, %v5440
        %v5529 = vpack.c.b16 %v5445, %v5443
        %v5530 = vpack.c.b16 %v5446, %v5444
        %v5531 = vpack.c.b16 %v5449, %v5447
        %v5532 = vpack.c.b16 %v5450, %v5448
        %v5533 = vpack.c.b16 %v5453, %v5451
        %v5534 = vpack.c.b16 %v5454, %v5452
        %v5535 = vpack.c.b16 %v5457, %v5455
        %v5536 = vpack.c.b16 %v5458, %v5456
        %v5537 = vpack.c.b16 %v5461, %v5459
        %v5538 = vpack.c.b16 %v5462, %v5460
        %v5539 = vpack.c.b16 %v5465, %v5463
        %v5540 = vpack.c.b16 %v5466, %v5464
        %v5541 = vpack.c.b16 %v5469, %v5467
        %v5542 = vpack.c.b16 %v5470, %v5468
        %v5543 = vpack.c.b16 %v5473, %v5471
        %v5544 = vpack.c.b16 %v5474, %v5472
        %v5545 = vpack.c.b16 %v5477, %v5475
        %v5546 = vpack.c.b16 %v5478, %v5476
        %v5547 = vpack.c.b16 %v5481, %v5479
        %v5548 = vpack.c.b16 %v5482, %v5480
        %v5549 = vpack.c.b16 %v5485, %v5483
        %v5550 = vpack.c.b16 %v5486, %v5484
        %5615 = vmatprep.subr.bf16.mxu0 %v5488
        %5616 = vmatpush1.bf16.msra.mxu0 %v5487
        %5617 = vmatprep.subr.bf16.mxu0 %v5490
        %5618 = vmatpush1.bf16.msra.mxu0 %v5489
        %5619 = vmatprep.subr.bf16.mxu0 %v5492
        %5620 = vmatpush1.bf16.msra.mxu0 %v5491
        %5621 = vmatprep.subr.bf16.mxu0 %v5494
        %5622 = vmatpush1.bf16.msra.mxu0 %v5493
        %5623 = vmatprep.subr.bf16.mxu0 %v5496
        %5624 = vmatpush1.bf16.msra.mxu0 %v5495
        %5625 = vmatprep.subr.bf16.mxu0 %v5498
        %5626 = vmatpush1.bf16.msra.mxu0 %v5497
        %5627 = vmatprep.subr.bf16.mxu0 %v5500
        %5628 = vmatpush1.bf16.msra.mxu0 %v5499
        %5629 = vmatprep.subr.bf16.mxu0 %v5502
        %5630 = vmatpush1.bf16.msra.mxu0 %v5501
        %5631 = vmatprep.subr.bf16.mxu0 %v5504
        %5632 = vmatpush1.bf16.msra.mxu0 %v5503
        %5633 = vmatprep.subr.bf16.mxu0 %v5506
        %5634 = vmatpush1.bf16.msra.mxu0 %v5505
        %5635 = vmatprep.subr.bf16.mxu0 %v5508
        %5636 = vmatpush1.bf16.msra.mxu0 %v5507
        %5637 = vmatprep.subr.bf16.mxu0 %v5510
        %5638 = vmatpush1.bf16.msra.mxu0 %v5509
        %5639 = vmatprep.subr.bf16.mxu0 %v5512
        %5640 = vmatpush1.bf16.msra.mxu0 %v5511
        %5641 = vmatprep.subr.bf16.mxu0 %v5514
        %5642 = vmatpush1.bf16.msra.mxu0 %v5513
        %5643 = vmatprep.subr.bf16.mxu0 %v5516
        %5644 = vmatpush1.bf16.msra.mxu0 %v5515
        %5645 = vmatprep.subr.bf16.mxu0 %v5518
        %5646 = vmatpush1.bf16.msra.mxu0 %v5517
        %5647 = vmatprep.mubr.bf16.mxu0 %v5188
        %5648 = vmatmul.mubr.bf16.gmra.mrb[0].mxu0 %v5187
        %v5649 = vpop.f32.mrb[0].mxu0
        %v5650 = vadd.f32 %v5288, %v5649
        %v5651 = vpop.f32.mrb[0].mxu0
        %v5652 = vadd.f32 %v5292, %v5651
        %v5653 = vpop.f32.mrb[0].mxu0
        %v5654 = vadd.f32 %v5288, %v5653
        %v5655 = vpop.f32.mrb[0].mxu0
        %v5656 = vadd.f32 %v5292, %v5655
        %5657 = vmatprep.mubr.bf16.mxu0 %v5192
        %5658 = vmatmul.mubr.bf16.gmra.mrb[0].mxu0 %v5191
        %v5659 = vpop.f32.mrb[0].mxu0
        %v5660 = vadd.f32 %v5288, %v5659
        %v5661 = vpop.f32.mrb[0].mxu0
        %v5662 = vadd.f32 %v5292, %v5661
        %v5663 = vpop.f32.mrb[0].mxu0
        %v5664 = vadd.f32 %v5288, %v5663
        %v5665 = vpop.f32.mrb[0].mxu0
        %v5666 = vadd.f32 %v5292, %v5665
        %5667 = vmatprep.mubr.bf16.mxu0 %v5196
        %5668 = vmatmul.mubr.bf16.gmra.mrb[0].mxu0 %v5195
        %v5669 = vpop.f32.mrb[0].mxu0
        %v5670 = vadd.f32 %v5288, %v5669
        %v5671 = vpop.f32.mrb[0].mxu0
        %v5672 = vadd.f32 %v5292, %v5671
        %v5673 = vpop.f32.mrb[0].mxu0
        %v5674 = vadd.f32 %v5288, %v5673
        %v5675 = vpop.f32.mrb[0].mxu0
        %v5676 = vadd.f32 %v5292, %v5675
        %5677 = vmatprep.mubr.bf16.mxu0 %v5200
        %5678 = vmatmul.mubr.bf16.gmra.mrb[0].mxu0 %v5199
        %v5679 = vpop.f32.mrb[0].mxu0
        %v5680 = vadd.f32 %v5288, %v5679
        %v5681 = vpop.f32.mrb[0].mxu0
        %v5682 = vadd.f32 %v5292, %v5681
        %v5683 = vpop.f32.mrb[0].mxu0
        %v5684 = vadd.f32 %v5288, %v5683
        %v5685 = vpop.f32.mrb[0].mxu0
        %v5686 = vadd.f32 %v5292, %v5685
        %5687 = vmatprep.mubr.bf16.mxu0 %v5204
        %5688 = vmatmul.mubr.bf16.gmra.mrb[0].mxu0 %v5203
        %v5689 = vpop.f32.mrb[0].mxu0
        %v5690 = vadd.f32 %v5288, %v5689
        %v5691 = vpop.f32.mrb[0].mxu0
        %v5692 = vadd.f32 %v5292, %v5691
        %v5693 = vpop.f32.mrb[0].mxu0
        %v5694 = vadd.f32 %v5288, %v5693
        %v5695 = vpop.f32.mrb[0].mxu0
        %v5696 = vadd.f32 %v5292, %v5695
        %5697 = vmatprep.mubr.bf16.mxu0 %v5208
        %5698 = vmatmul.mubr.bf16.gmra.mrb[0].mxu0 %v5207
        %v5699 = vpop.f32.mrb[0].mxu0
        %v5700 = vadd.f32 %v5288, %v5699
        %v5701 = vpop.f32.mrb[0].mxu0
        %v5702 = vadd.f32 %v5292, %v5701
        %v5703 = vpop.f32.mrb[0].mxu0
        %v5704 = vadd.f32 %v5288, %v5703
        %v5705 = vpop.f32.mrb[0].mxu0
        %v5706 = vadd.f32 %v5292, %v5705
        %5707 = vmatprep.mubr.bf16.mxu0 %v5212
        %5708 = vmatmul.mubr.bf16.gmra.mrb[0].mxu0 %v5211
        %v5709 = vpop.f32.mrb[0].mxu0
        %v5710 = vadd.f32 %v5288, %v5709
        %v5711 = vpop.f32.mrb[0].mxu0
        %v5712 = vadd.f32 %v5292, %v5711
        %v5713 = vpop.f32.mrb[0].mxu0
        %v5714 = vadd.f32 %v5288, %v5713
        %v5715 = vpop.f32.mrb[0].mxu0
        %v5716 = vadd.f32 %v5292, %v5715
        %5717 = vmatprep.mubr.bf16.mxu0 %v5216
        %5718 = vmatmul.mubr.bf16.gmra.mrb[0].mxu0 %v5215
        %v5719 = vpop.f32.mrb[0].mxu0
        %v5720 = vadd.f32 %v5288, %v5719
        %v5721 = vpop.f32.mrb[0].mxu0
        %v5722 = vadd.f32 %v5292, %v5721
        %v5723 = vpop.f32.mrb[0].mxu0
        %v5724 = vadd.f32 %v5288, %v5723
        %v5725 = vpop.f32.mrb[0].mxu0
        %v5726 = vadd.f32 %v5292, %v5725
        %5727 = vdwg.mxu0
        %5728 = vmatprep.subr.bf16.mxu0 %v5520
        %5729 = vmatpush1.bf16.msra.mxu0 %v5519
        %5730 = vmatprep.subr.bf16.mxu0 %v5522
        %5731 = vmatpush1.bf16.msra.mxu0 %v5521
        %5732 = vmatprep.subr.bf16.mxu0 %v5524
        %5733 = vmatpush1.bf16.msra.mxu0 %v5523
        %5734 = vmatprep.subr.bf16.mxu0 %v5526
        %5735 = vmatpush1.bf16.msra.mxu0 %v5525
        %5736 = vmatprep.subr.bf16.mxu0 %v5528
        %5737 = vmatpush1.bf16.msra.mxu0 %v5527
        %5738 = vmatprep.subr.bf16.mxu0 %v5530
        %5739 = vmatpush1.bf16.msra.mxu0 %v5529
        %5740 = vmatprep.subr.bf16.mxu0 %v5532
        %5741 = vmatpush1.bf16.msra.mxu0 %v5531
        %5742 = vmatprep.subr.bf16.mxu0 %v5534
        %5743 = vmatpush1.bf16.msra.mxu0 %v5533
        %5744 = vmatprep.subr.bf16.mxu0 %v5536
        %5745 = vmatpush1.bf16.msra.mxu0 %v5535
        %5746 = vmatprep.subr.bf16.mxu0 %v5538
        %5747 = vmatpush1.bf16.msra.mxu0 %v5537
        %5748 = vmatprep.subr.bf16.mxu0 %v5540
        %5749 = vmatpush1.bf16.msra.mxu0 %v5539
        %5750 = vmatprep.subr.bf16.mxu0 %v5542
        %5751 = vmatpush1.bf16.msra.mxu0 %v5541
        %5752 = vmatprep.subr.bf16.mxu0 %v5544
        %5753 = vmatpush1.bf16.msra.mxu0 %v5543
        %5754 = vmatprep.subr.bf16.mxu0 %v5546
        %5755 = vmatpush1.bf16.msra.mxu0 %v5545
        %5756 = vmatprep.subr.bf16.mxu0 %v5548
        %5757 = vmatpush1.bf16.msra.mxu0 %v5547
        %5758 = vmatprep.subr.bf16.mxu0 %v5550
        %5759 = vmatpush1.bf16.msra.mxu0 %v5549
        %5760 = vmatprep.mubr.bf16.mxu0 %v5190
        %5761 = vmatmul.mubr.bf16.gmra.mrb[0].mxu0 %v5189
        %v5762 = vpop.f32.mrb[0].mxu0
        %v5763 = vadd.f32 %v5650, %v5762
        %v5764 = vpop.f32.mrb[0].mxu0
        %v5765 = vadd.f32 %v5652, %v5764
        %v5766 = vpop.f32.mrb[0].mxu0
        %v5767 = vadd.f32 %v5654, %v5766
        %v5768 = vpop.f32.mrb[0].mxu0
        %v5769 = vadd.f32 %v5656, %v5768
        %5770 = vmatprep.mubr.bf16.mxu0 %v5194
        %5771 = vmatmul.mubr.bf16.gmra.mrb[0].mxu0 %v5193
        %v5772 = vpop.f32.mrb[0].mxu0
        %v5773 = vadd.f32 %v5660, %v5772
        %v5774 = vpop.f32.mrb[0].mxu0
        %v5775 = vadd.f32 %v5662, %v5774
        %v5776 = vpop.f32.mrb[0].mxu0
        %v5777 = vadd.f32 %v5664, %v5776
        %v5778 = vpop.f32.mrb[0].mxu0
        %v5779 = vadd.f32 %v5666, %v5778
        %5780 = vmatprep.mubr.bf16.mxu0 %v5198
        %5781 = vmatmul.mubr.bf16.gmra.mrb[0].mxu0 %v5197
        %v5782 = vpop.f32.mrb[0].mxu0
        %v5783 = vadd.f32 %v5670, %v5782
        %v5784 = vpop.f32.mrb[0].mxu0
        %v5785 = vadd.f32 %v5672, %v5784
        %v5786 = vpop.f32.mrb[0].mxu0
        %v5787 = vadd.f32 %v5674, %v5786
        %v5788 = vpop.f32.mrb[0].mxu0
        %v5789 = vadd.f32 %v5676, %v5788
        %5790 = vmatprep.mubr.bf16.mxu0 %v5202
        %5791 = vmatmul.mubr.bf16.gmra.mrb[0].mxu0 %v5201
        %v5792 = vpop.f32.mrb[0].mxu0
        %v5793 = vadd.f32 %v5680, %v5792
        %v5794 = vpop.f32.mrb[0].mxu0
        %v5795 = vadd.f32 %v5682, %v5794
        %v5796 = vpop.f32.mrb[0].mxu0
        %v5797 = vadd.f32 %v5684, %v5796
        %v5798 = vpop.f32.mrb[0].mxu0
        %v5799 = vadd.f32 %v5686, %v5798
        %5800 = vmatprep.mubr.bf16.mxu0 %v5206
        %5801 = vmatmul.mubr.bf16.gmra.mrb[0].mxu0 %v5205
        %v5802 = vpop.f32.mrb[0].mxu0
        %v5803 = vadd.f32 %v5690, %v5802
        %v5804 = vpop.f32.mrb[0].mxu0
        %v5805 = vadd.f32 %v5692, %v5804
        %v5806 = vpop.f32.mrb[0].mxu0
        %v5807 = vadd.f32 %v5694, %v5806
        %v5808 = vpop.f32.mrb[0].mxu0
        %v5809 = vadd.f32 %v5696, %v5808
        %5810 = vmatprep.mubr.bf16.mxu0 %v5210
        %5811 = vmatmul.mubr.bf16.gmra.mrb[0].mxu0 %v5209
        %v5812 = vpop.f32.mrb[0].mxu0
        %v5813 = vadd.f32 %v5700, %v5812
        %v5814 = vpop.f32.mrb[0].mxu0
        %v5815 = vadd.f32 %v5702, %v5814
        %v5816 = vpop.f32.mrb[0].mxu0
        %v5817 = vadd.f32 %v5704, %v5816
        %v5818 = vpop.f32.mrb[0].mxu0
        %v5819 = vadd.f32 %v5706, %v5818
        %5820 = vmatprep.mubr.bf16.mxu0 %v5214
        %5821 = vmatmul.mubr.bf16.gmra.mrb[0].mxu0 %v5213
        %v5822 = vpop.f32.mrb[0].mxu0
        %v5823 = vadd.f32 %v5710, %v5822
        %v5824 = vpop.f32.mrb[0].mxu0
        %v5825 = vadd.f32 %v5712, %v5824
        %v5826 = vpop.f32.mrb[0].mxu0
        %v5827 = vadd.f32 %v5714, %v5826
        %v5828 = vpop.f32.mrb[0].mxu0
        %v5829 = vadd.f32 %v5716, %v5828
        %5830 = vmatprep.mubr.bf16.mxu0 %v5218
        %5831 = vmatmul.mubr.bf16.gmra.mrb[0].mxu0 %v5217
        %v5832 = vpop.f32.mrb[0].mxu0
        %v5833 = vadd.f32 %v5720, %v5832
        %v5834 = vpop.f32.mrb[0].mxu0
        %v5835 = vadd.f32 %v5722, %v5834
        %v5836 = vpop.f32.mrb[0].mxu0
        %v5837 = vadd.f32 %v5724, %v5836
        %v5838 = vpop.f32.mrb[0].mxu0
        %v5839 = vadd.f32 %v5726, %v5838
        %5840 = vdwg.mxu0
        %v5841 = vadd.f32 %v3931, %v5763
        %v5842 = vadd.f32 %v3932, %v5765
        %v5843 = vadd.f32 %v3933, %v5767
        %v5844 = vadd.f32 %v3934, %v5769
        %v5845 = vadd.f32 %v3935, %v5773
        %v5846 = vadd.f32 %v3936, %v5775
        %v5847 = vadd.f32 %v3937, %v5777
        %v5848 = vadd.f32 %v3938, %v5779
        %v5849 = vadd.f32 %v3939, %v5783
        %v5850 = vadd.f32 %v3940, %v5785
        %v5851 = vadd.f32 %v3941, %v5787
        %v5852 = vadd.f32 %v3942, %v5789
        %v5853 = vadd.f32 %v3943, %v5793
        %v5854 = vadd.f32 %v3944, %v5795
        %v5855 = vadd.f32 %v3945, %v5797
        %v5856 = vadd.f32 %v3946, %v5799
        %v5857 = vadd.f32 %v3947, %v5803
        %v5858 = vadd.f32 %v3948, %v5805
        %v5859 = vadd.f32 %v3949, %v5807
        %v5860 = vadd.f32 %v3950, %v5809
        %v5861 = vadd.f32 %v3951, %v5813
        %v5862 = vadd.f32 %v3952, %v5815
        %v5863 = vadd.f32 %v3953, %v5817
        %v5864 = vadd.f32 %v3954, %v5819
        %v5865 = vadd.f32 %v3955, %v5823
        %v5866 = vadd.f32 %v3956, %v5825
        %v5867 = vadd.f32 %v3957, %v5827
        %v5868 = vadd.f32 %v3958, %v5829
        %v5869 = vadd.f32 %v3959, %v5833
        %v5870 = vadd.f32 %v3960, %v5835
        %v5871 = vadd.f32 %v3961, %v5837
        %v5872 = vadd.f32 %v3962, %v5839
        %v5873 = vld [vmem:[%s12] sm:$0x3]
        %v5874 = vld [vmem:[%s13] sm:$0x3]
        %v5875 = vadd.f32 %v5841, %v5842
        %5876 = vadd.xlane.f32.xlu0 %v5875
        %v5877 = vpop.xlane.xlu0 %5876
        %v5878 = vadd.f32 %v5843, %v5844
        %5879 = vadd.xlane.f32.xlu0 %v5878
        %v5880 = vpop.xlane.xlu0 %5879
        %v5881 = vadd.f32 %v5845, %v5846
        %5882 = vadd.xlane.f32.xlu0 %v5881
        %v5883 = vpop.xlane.xlu0 %5882
        %v5884 = vadd.f32 %v5847, %v5848
        %5885 = vadd.xlane.f32.xlu0 %v5884
        %v5886 = vpop.xlane.xlu0 %5885
        %v5887 = vadd.f32 %v5849, %v5850
        %5888 = vadd.xlane.f32.xlu0 %v5887
        %v5889 = vpop.xlane.xlu0 %5888
        %v5890 = vadd.f32 %v5851, %v5852
        %5891 = vadd.xlane.f32.xlu0 %v5890
        %v5892 = vpop.xlane.xlu0 %5891
        %v5893 = vadd.f32 %v5853, %v5854
        %5894 = vadd.xlane.f32.xlu0 %v5893
        %v5895 = vpop.xlane.xlu0 %5894
        %v5896 = vadd.f32 %v5855, %v5856
        %5897 = vadd.xlane.f32.xlu0 %v5896
        %v5898 = vpop.xlane.xlu0 %5897
        %v5899 = vadd.f32 %v5857, %v5858
        %5900 = vadd.xlane.f32.xlu0 %v5899
        %v5901 = vpop.xlane.xlu0 %5900
        %v5902 = vadd.f32 %v5859, %v5860
        %5903 = vadd.xlane.f32.xlu0 %v5902
        %v5904 = vpop.xlane.xlu0 %5903
        %v5905 = vadd.f32 %v5861, %v5862
        %5906 = vadd.xlane.f32.xlu0 %v5905
        %v5907 = vpop.xlane.xlu0 %5906
        %v5908 = vadd.f32 %v5863, %v5864
        %5909 = vadd.xlane.f32.xlu0 %v5908
        %v5910 = vpop.xlane.xlu0 %5909
        %v5911 = vadd.f32 %v5865, %v5866
        %5912 = vadd.xlane.f32.xlu0 %v5911
        %v5913 = vpop.xlane.xlu0 %5912
        %v5914 = vadd.f32 %v5867, %v5868
        %5915 = vadd.xlane.f32.xlu0 %v5914
        %v5916 = vpop.xlane.xlu0 %5915
        %v5917 = vadd.f32 %v5869, %v5870
        %5918 = vadd.xlane.f32.xlu0 %v5917
        %v5919 = vpop.xlane.xlu0 %5918
        %v5920 = vadd.f32 %v5871, %v5872
        %5921 = vadd.xlane.f32.xlu0 %v5920
        %v5922 = vpop.xlane.xlu0 %5921
        %v5923 = vmul.f32 %v5877, %v3668
        %v5924 = vmul.f32 %v5880, %v3668
        %v5925 = vmul.f32 %v5883, %v3668
        %v5926 = vmul.f32 %v5886, %v3668
        %v5927 = vmul.f32 %v5889, %v3668
        %v5928 = vmul.f32 %v5892, %v3668
        %v5929 = vmul.f32 %v5895, %v3668
        %v5930 = vmul.f32 %v5898, %v3668
        %v5931 = vmul.f32 %v5901, %v3668
        %v5932 = vmul.f32 %v5904, %v3668
        %v5933 = vmul.f32 %v5907, %v3668
        %v5934 = vmul.f32 %v5910, %v3668
        %v5935 = vmul.f32 %v5913, %v3668
        %v5936 = vmul.f32 %v5916, %v3668
        %v5937 = vmul.f32 %v5919, %v3668
        %v5938 = vmul.f32 %v5922, %v3668
        %v5939 = vsub.f32 %v5841, %v5923
        %v5940 = vsub.f32 %v5842, %v5923
        %v5941 = vsub.f32 %v5843, %v5924
        %v5942 = vsub.f32 %v5844, %v5924
        %v5943 = vsub.f32 %v5845, %v5925
        %v5944 = vsub.f32 %v5846, %v5925
        %v5945 = vsub.f32 %v5847, %v5926
        %v5946 = vsub.f32 %v5848, %v5926
        %v5947 = vsub.f32 %v5849, %v5927
        %v5948 = vsub.f32 %v5850, %v5927
        %v5949 = vsub.f32 %v5851, %v5928
        %v5950 = vsub.f32 %v5852, %v5928
        %v5951 = vsub.f32 %v5853, %v5929
        %v5952 = vsub.f32 %v5854, %v5929
        %v5953 = vsub.f32 %v5855, %v5930
        %v5954 = vsub.f32 %v5856, %v5930
        %v5955 = vsub.f32 %v5857, %v5931
        %v5956 = vsub.f32 %v5858, %v5931
        %v5957 = vsub.f32 %v5859, %v5932
        %v5958 = vsub.f32 %v5860, %v5932
        %v5959 = vsub.f32 %v5861, %v5933
        %v5960 = vsub.f32 %v5862, %v5933
        %v5961 = vsub.f32 %v5863, %v5934
        %v5962 = vsub.f32 %v5864, %v5934
        %v5963 = vsub.f32 %v5865, %v5935
        %v5964 = vsub.f32 %v5866, %v5935
        %v5965 = vsub.f32 %v5867, %v5936
        %v5966 = vsub.f32 %v5868, %v5936
        %v5967 = vsub.f32 %v5869, %v5937
        %v5968 = vsub.f32 %v5870, %v5937
        %v5969 = vsub.f32 %v5871, %v5938
        %v5970 = vsub.f32 %v5872, %v5938
        %v5971 = vmul.f32 %v5939, %v5939
        %v5972 = vmul.f32 %v5940, %v5940
        %v5973 = vmul.f32 %v5941, %v5941
        %v5974 = vmul.f32 %v5942, %v5942
        %v5975 = vmul.f32 %v5943, %v5943
        %v5976 = vmul.f32 %v5944, %v5944
        %v5977 = vmul.f32 %v5945, %v5945
        %v5978 = vmul.f32 %v5946, %v5946
        %v5979 = vmul.f32 %v5947, %v5947
        %v5980 = vmul.f32 %v5948, %v5948
        %v5981 = vmul.f32 %v5949, %v5949
        %v5982 = vmul.f32 %v5950, %v5950
        %v5983 = vmul.f32 %v5951, %v5951
        %v5984 = vmul.f32 %v5952, %v5952
        %v5985 = vmul.f32 %v5953, %v5953
        %v5986 = vmul.f32 %v5954, %v5954
        %v5987 = vmul.f32 %v5955, %v5955
        %v5988 = vmul.f32 %v5956, %v5956
        %v5989 = vmul.f32 %v5957, %v5957
        %v5990 = vmul.f32 %v5958, %v5958
        %v5991 = vmul.f32 %v5959, %v5959
        %v5992 = vmul.f32 %v5960, %v5960
        %v5993 = vmul.f32 %v5961, %v5961
        %v5994 = vmul.f32 %v5962, %v5962
        %v5995 = vmul.f32 %v5963, %v5963
        %v5996 = vmul.f32 %v5964, %v5964
        %v5997 = vmul.f32 %v5965, %v5965
        %v5998 = vmul.f32 %v5966, %v5966
        %v5999 = vmul.f32 %v5967, %v5967
        %v6000 = vmul.f32 %v5968, %v5968
        %v6001 = vmul.f32 %v5969, %v5969
        %v6002 = vmul.f32 %v5970, %v5970
        %v6003 = vadd.f32 %v5971, %v5972
        %6004 = vadd.xlane.f32.xlu0 %v6003
        %v6005 = vpop.xlane.xlu0 %6004
        %v6006 = vadd.f32 %v5973, %v5974
        %6007 = vadd.xlane.f32.xlu0 %v6006
        %v6008 = vpop.xlane.xlu0 %6007
        %v6009 = vadd.f32 %v5975, %v5976
        %6010 = vadd.xlane.f32.xlu0 %v6009
        %v6011 = vpop.xlane.xlu0 %6010
        %v6012 = vadd.f32 %v5977, %v5978
        %6013 = vadd.xlane.f32.xlu0 %v6012
        %v6014 = vpop.xlane.xlu0 %6013
        %v6015 = vadd.f32 %v5979, %v5980
        %6016 = vadd.xlane.f32.xlu0 %v6015
        %v6017 = vpop.xlane.xlu0 %6016
        %v6018 = vadd.f32 %v5981, %v5982
        %6019 = vadd.xlane.f32.xlu0 %v6018
        %v6020 = vpop.xlane.xlu0 %6019
        %v6021 = vadd.f32 %v5983, %v5984
        %6022 = vadd.xlane.f32.xlu0 %v6021
        %v6023 = vpop.xlane.xlu0 %6022
        %v6024 = vadd.f32 %v5985, %v5986
        %6025 = vadd.xlane.f32.xlu0 %v6024
        %v6026 = vpop.xlane.xlu0 %6025
        %v6027 = vadd.f32 %v5987, %v5988
        %6028 = vadd.xlane.f32.xlu0 %v6027
        %v6029 = vpop.xlane.xlu0 %6028
        %v6030 = vadd.f32 %v5989, %v5990
        %6031 = vadd.xlane.f32.xlu0 %v6030
        %v6032 = vpop.xlane.xlu0 %6031
        %v6033 = vadd.f32 %v5991, %v5992
        %6034 = vadd.xlane.f32.xlu0 %v6033
        %v6035 = vpop.xlane.xlu0 %6034
        %v6036 = vadd.f32 %v5993, %v5994
        %6037 = vadd.xlane.f32.xlu0 %v6036
        %v6038 = vpop.xlane.xlu0 %6037
        %v6039 = vadd.f32 %v5995, %v5996
        %6040 = vadd.xlane.f32.xlu0 %v6039
        %v6041 = vpop.xlane.xlu0 %6040
        %v6042 = vadd.f32 %v5997, %v5998
        %6043 = vadd.xlane.f32.xlu0 %v6042
        %v6044 = vpop.xlane.xlu0 %6043
        %v6045 = vadd.f32 %v5999, %v6000
        %6046 = vadd.xlane.f32.xlu0 %v6045
        %v6047 = vpop.xlane.xlu0 %6046
        %v6048 = vadd.f32 %v6001, %v6002
        %6049 = vadd.xlane.f32.xlu0 %v6048
        %v6050 = vpop.xlane.xlu0 %6049
        %v6051 = vmul.f32 %v6005, %v3668
        %v6052 = vmul.f32 %v6008, %v3668
        %v6053 = vmul.f32 %v6011, %v3668
        %v6054 = vmul.f32 %v6014, %v3668
        %v6055 = vmul.f32 %v6017, %v3668
        %v6056 = vmul.f32 %v6020, %v3668
        %v6057 = vmul.f32 %v6023, %v3668
        %v6058 = vmul.f32 %v6026, %v3668
        %v6059 = vmul.f32 %v6029, %v3668
        %v6060 = vmul.f32 %v6032, %v3668
        %v6061 = vmul.f32 %v6035, %v3668
        %v6062 = vmul.f32 %v6038, %v3668
        %v6063 = vmul.f32 %v6041, %v3668
        %v6064 = vmul.f32 %v6044, %v3668
        %v6065 = vmul.f32 %v6047, %v3668
        %v6066 = vmul.f32 %v6050, %v3668
        %v6067 = vadd.f32 %v6051, 1e-12
        %v6068 = vadd.f32 %v6052, 1e-12
        %v6069 = vadd.f32 %v6053, 1e-12
        %v6070 = vadd.f32 %v6054, 1e-12
        %v6071 = vadd.f32 %v6055, 1e-12
        %v6072 = vadd.f32 %v6056, 1e-12
        %v6073 = vadd.f32 %v6057, 1e-12
        %v6074 = vadd.f32 %v6058, 1e-12
        %v6075 = vadd.f32 %v6059, 1e-12
        %v6076 = vadd.f32 %v6060, 1e-12
        %v6077 = vadd.f32 %v6061, 1e-12
        %v6078 = vadd.f32 %v6062, 1e-12
        %v6079 = vadd.f32 %v6063, 1e-12
        %v6080 = vadd.f32 %v6064, 1e-12
        %v6081 = vadd.f32 %v6065, 1e-12
        %v6082 = vadd.f32 %v6066, 1e-12
        %v6083 = vrsqrt.pop %v6067
        %v6084 = vrsqrt.pop %v6068
        %v6085 = vrsqrt.pop %v6069
        %v6086 = vrsqrt.pop %v6070
        %v6087 = vrsqrt.pop %v6071
        %v6088 = vrsqrt.pop %v6072
        %v6089 = vrsqrt.pop %v6073
        %v6090 = vrsqrt.pop %v6074
        %v6091 = vrsqrt.pop %v6075
        %v6092 = vrsqrt.pop %v6076
        %v6093 = vrsqrt.pop %v6077
        %v6094 = vrsqrt.pop %v6078
        %v6095 = vrsqrt.pop %v6079
        %v6096 = vrsqrt.pop %v6080
        %v6097 = vrsqrt.pop %v6081
        %v6098 = vrsqrt.pop %v6082
        %v6099 = vmul.f32 %v5939, %v6083
        %v6100 = vmul.f32 %v5940, %v6083
        %v6101 = vmul.f32 %v5941, %v6084
        %v6102 = vmul.f32 %v5942, %v6084
        %v6103 = vmul.f32 %v5943, %v6085
        %v6104 = vmul.f32 %v5944, %v6085
        %v6105 = vmul.f32 %v5945, %v6086
        %v6106 = vmul.f32 %v5946, %v6086
        %v6107 = vmul.f32 %v5947, %v6087
        %v6108 = vmul.f32 %v5948, %v6087
        %v6109 = vmul.f32 %v5949, %v6088
        %v6110 = vmul.f32 %v5950, %v6088
        %v6111 = vmul.f32 %v5951, %v6089
        %v6112 = vmul.f32 %v5952, %v6089
        %v6113 = vmul.f32 %v5953, %v6090
        %v6114 = vmul.f32 %v5954, %v6090
        %v6115 = vmul.f32 %v5955, %v6091
        %v6116 = vmul.f32 %v5956, %v6091
        %v6117 = vmul.f32 %v5957, %v6092
        %v6118 = vmul.f32 %v5958, %v6092
        %v6119 = vmul.f32 %v5959, %v6093
        %v6120 = vmul.f32 %v5960, %v6093
        %v6121 = vmul.f32 %v5961, %v6094
        %v6122 = vmul.f32 %v5962, %v6094
        %v6123 = vmul.f32 %v5963, %v6095
        %v6124 = vmul.f32 %v5964, %v6095
        %v6125 = vmul.f32 %v5965, %v6096
        %v6126 = vmul.f32 %v5966, %v6096
        %v6127 = vmul.f32 %v5967, %v6097
        %v6128 = vmul.f32 %v5968, %v6097
        %v6129 = vmul.f32 %v5969, %v6098
        %v6130 = vmul.f32 %v5970, %v6098
        %v6132 = vlaneseq
        %v6133 = vshrl.u32 %v6132, 7
        %v6134 = vsub.s32 0, %v6133
        %v6135 = vrot.slane %v5873, %v6134
        %v6136 = vlaneseq
        %v6137 = vshrl.u32 %v6136, 7
        %v6138 = vsub.s32 1, %v6137
        %v6139 = vrot.slane %v5873, %v6138
        %v6142 = vmul.f32 %v6099, %v6135
        %v6143 = vmul.f32 %v6100, %v6139
        %v6144 = vmul.f32 %v6101, %v6135
        %v6145 = vmul.f32 %v6102, %v6139
        %v6146 = vmul.f32 %v6103, %v6135
        %v6147 = vmul.f32 %v6104, %v6139
        %v6148 = vmul.f32 %v6105, %v6135
        %v6149 = vmul.f32 %v6106, %v6139
        %v6150 = vmul.f32 %v6107, %v6135
        %v6151 = vmul.f32 %v6108, %v6139
        %v6152 = vmul.f32 %v6109, %v6135
        %v6153 = vmul.f32 %v6110, %v6139
        %v6154 = vmul.f32 %v6111, %v6135
        %v6155 = vmul.f32 %v6112, %v6139
        %v6156 = vmul.f32 %v6113, %v6135
        %v6157 = vmul.f32 %v6114, %v6139
        %v6158 = vmul.f32 %v6115, %v6135
        %v6159 = vmul.f32 %v6116, %v6139
        %v6160 = vmul.f32 %v6117, %v6135
        %v6161 = vmul.f32 %v6118, %v6139
        %v6162 = vmul.f32 %v6119, %v6135
        %v6163 = vmul.f32 %v6120, %v6139
        %v6164 = vmul.f32 %v6121, %v6135
        %v6165 = vmul.f32 %v6122, %v6139
        %v6166 = vmul.f32 %v6123, %v6135
        %v6167 = vmul.f32 %v6124, %v6139
        %v6168 = vmul.f32 %v6125, %v6135
        %v6169 = vmul.f32 %v6126, %v6139
        %v6170 = vmul.f32 %v6127, %v6135
        %v6171 = vmul.f32 %v6128, %v6139
        %v6172 = vmul.f32 %v6129, %v6135
        %v6173 = vmul.f32 %v6130, %v6139
        %v6175 = vlaneseq
        %v6176 = vshrl.u32 %v6175, 7
        %v6177 = vsub.s32 0, %v6176
        %v6178 = vrot.slane %v5874, %v6177
        %v6179 = vlaneseq
        %v6180 = vshrl.u32 %v6179, 7
        %v6181 = vsub.s32 1, %v6180
        %v6182 = vrot.slane %v5874, %v6181
        %v6185 = vadd.f32 %v6142, %v6178
        %v6186 = vadd.f32 %v6143, %v6182
        %v6187 = vadd.f32 %v6144, %v6178
        %v6188 = vadd.f32 %v6145, %v6182
        %v6189 = vadd.f32 %v6146, %v6178
        %v6190 = vadd.f32 %v6147, %v6182
        %v6191 = vadd.f32 %v6148, %v6178
        %v6192 = vadd.f32 %v6149, %v6182
        %v6193 = vadd.f32 %v6150, %v6178
        %v6194 = vadd.f32 %v6151, %v6182
        %v6195 = vadd.f32 %v6152, %v6178
        %v6196 = vadd.f32 %v6153, %v6182
        %v6197 = vadd.f32 %v6154, %v6178
        %v6198 = vadd.f32 %v6155, %v6182
        %v6199 = vadd.f32 %v6156, %v6178
        %v6200 = vadd.f32 %v6157, %v6182
        %v6201 = vadd.f32 %v6158, %v6178
        %v6202 = vadd.f32 %v6159, %v6182
        %v6203 = vadd.f32 %v6160, %v6178
        %v6204 = vadd.f32 %v6161, %v6182
        %v6205 = vadd.f32 %v6162, %v6178
        %v6206 = vadd.f32 %v6163, %v6182
        %v6207 = vadd.f32 %v6164, %v6178
        %v6208 = vadd.f32 %v6165, %v6182
        %v6209 = vadd.f32 %v6166, %v6178
        %v6210 = vadd.f32 %v6167, %v6182
        %v6211 = vadd.f32 %v6168, %v6178
        %v6212 = vadd.f32 %v6169, %v6182
        %v6213 = vadd.f32 %v6170, %v6178
        %v6214 = vadd.f32 %v6171, %v6182
        %v6215 = vadd.f32 %v6172, %v6178
        %v6216 = vadd.f32 %v6173, %v6182
        %6217 = vst [vmem:[%s595] sm:$0xff] %v6185
        %6218 = vst [vmem:[%s595 + $0x8] sm:$0xff] %v6186
        %6219 = vst [vmem:[%s595 + $0x10] sm:$0xff] %v6187
        %6220 = vst [vmem:[%s595 + $0x18] sm:$0xff] %v6188
        %6221 = vst [vmem:[%s595 + $0x20] sm:$0xff] %v6189
        %6222 = vst [vmem:[%s595 + $0x28] sm:$0xff] %v6190
        %6223 = vst [vmem:[%s595 + $0x30] sm:$0xff] %v6191
        %6224 = vst [vmem:[%s595 + $0x38] sm:$0xff] %v6192
        %6225 = vst [vmem:[%s595 + $0x40] sm:$0xff] %v6193
        %6226 = vst [vmem:[%s595 + $0x48] sm:$0xff] %v6194
        %6227 = vst [vmem:[%s595 + $0x50] sm:$0xff] %v6195
        %6228 = vst [vmem:[%s595 + $0x58] sm:$0xff] %v6196
        %6229 = vst [vmem:[%s595 + $0x60] sm:$0xff] %v6197
        %6230 = vst [vmem:[%s595 + $0x68] sm:$0xff] %v6198
        %6231 = vst [vmem:[%s595 + $0x70] sm:$0xff] %v6199
        %6232 = vst [vmem:[%s595 + $0x78] sm:$0xff] %v6200
        %6233 = vst [vmem:[%s595 + $0x80] sm:$0xff] %v6201
        %6234 = vst [vmem:[%s595 + $0x88] sm:$0xff] %v6202
        %6235 = vst [vmem:[%s595 + $0x90] sm:$0xff] %v6203
        %6236 = vst [vmem:[%s595 + $0x98] sm:$0xff] %v6204
        %6237 = vst [vmem:[%s595 + $0xa0] sm:$0xff] %v6205
        %6238 = vst [vmem:[%s595 + $0xa8] sm:$0xff] %v6206
        %6239 = vst [vmem:[%s595 + $0xb0] sm:$0xff] %v6207
        %6240 = vst [vmem:[%s595 + $0xb8] sm:$0xff] %v6208
        %6241 = vst [vmem:[%s595 + $0xc0] sm:$0xff] %v6209
        %6242 = vst [vmem:[%s595 + $0xc8] sm:$0xff] %v6210
        %6243 = vst [vmem:[%s595 + $0xd0] sm:$0xff] %v6211
        %6244 = vst [vmem:[%s595 + $0xd8] sm:$0xff] %v6212
        %6245 = vst [vmem:[%s595 + $0xe0] sm:$0xff] %v6213
        %6246 = vst [vmem:[%s595 + $0xe8] sm:$0xff] %v6214
        %6247 = vst [vmem:[%s595 + $0xf0] sm:$0xff] %v6215
        %6248 = vst [vmem:[%s595 + $0xf8] sm:$0xff] %v6216
        %s6249 = sand.u32 %s362, 1
        %s6250 = scalar_lea.sflag [#allocation7], %s6249
        %s6251 = sand.u32 %s362, 1
        %s6252 = smul.addr %s6251, 256
        %s6253 = scalar_lea.vmem [#allocation16], %s6252
        // Predicated region
        $region105: #{tpu_custom_call.1} parent=75 // pred_check
          %p6254 = pneg %p372
        $region106: #{tpu_custom_call.1} parent=75 // pred_check_branch
          %6256 = sbr.rel (%p6254) target = $region108
        $region107: #{tpu_custom_call.1} parent=75 // pred_region
          %s6257 = smul.u32 16, %s41
          %s6259 = ssub.s32 4096, 4096
          %6260 = vsyncadd %s6250, %s6259
          %s6261 = smul.addr %s6257, 2
          %s6262 = smul.addr %s40, 64
          %s6263 = sadd.s32 %s6261, %s6262
          %s6264 = smul.addr %s6263, 128
          %s6265 = scalar_lea.hbm %s14, %s6264
          %s6266 = sshll.u32 %s6253, 4
          %s6267 = int_to_ptr.vmem [resolvable:$true] %s6266
          %6272 = dma.vmem_to_hbm [thread:$0]  %s6267, 4096, %s6265, %s6250, 256, 256, 16
        $region108: #{tpu_custom_call.1} parent=75 // pred_fallthru
          _
      $region76: #{tpu_custom_call.1} parent=5 // pred_fallthru
        _
      %p6273 = scmp.le.s32.totalorder 2, %s31
      // Predicated region
      $region109: #{tpu_custom_call.1} parent=5 // pred_check
        %p6274 = pneg %p6273
      $region110: #{tpu_custom_call.1} parent=5 // pred_check_branch
        %6276 = sbr.rel (%p6274) target = $region112
      $region111: #{tpu_custom_call.1} parent=5 // pred_region
        %s6277 = ssub.s32 %s31, 2
        // Predicated region
        $region113: #{tpu_custom_call.1} parent=111 // pred_check
          %p6278 = pneg %p378
        $region114: #{tpu_custom_call.1} parent=111 // pred_check_branch
          %6280 = sbr.rel (%p6278) target = $region116
        $region115: #{tpu_custom_call.1} parent=111 // pred_region
          %s6281 = sand.u32 %s363, 1
          %s6282 = scalar_lea.sflag [#allocation7], %s6281
          %s6283 = sand.u32 %s363, 1
          %s6284 = smul.addr %s6283, 256
          %s6285 = scalar_lea.vmem [#allocation16], %s6284
          %6286 = dma.done %s6282, 4096
        $region116: #{tpu_custom_call.1} parent=111 // pred_fallthru
          _
      $region112: #{tpu_custom_call.1} parent=5 // pred_fallthru
        _
    $region6: #{tpu_custom_call.1} parent=1 // loop_footer
      %s35 = sadd.s32 1, %s31
    $region7: #{tpu_custom_call.1} parent=1 // loop_footer_branch
      %30 = sbr.rel target = $region3
    $region8: #{tpu_custom_call.1} parent=1 // loop_exit
      _
    %6287 = vsyncpa [#allocation6], 1
    %s6288 = scalar_lea.sflag [#allocation6], 1
    %6289 = vsyncpa %s6288, 1
    %6290 = vsyncpa [#allocation9], 1
    %s6291 = scalar_lea.sflag [#allocation9], 1
    %6292 = vsyncpa %s6291, 1
    %6293 = vsyncpa [#allocation12], 1
    %6294 = vsyncpa [#allocation15], 1
    %6295 = vsyncpa [#allocation7], 1
    %s6296 = scalar_lea.sflag [#allocation7], 1
    %6297 = vsyncpa %s6296, 1

</llo_original>
